<compile_context>
chip_gen: v5e
topology: v5e:2x2
jax: 0.10.0
libtpu: 0.0.40
codegen_flags: <defaults>
</compile_context>

<pallas_src>
import jax
import jax.numpy as jnp
from jax.experimental import pallas as pl
from jax.experimental.pallas import tpu as pltpu

B, S, H = 2, 8, 32          # batch, seq, hidden
NH, HD = 4, 8               # heads, head dim (NH*HD == H)
G = B * NH                  # attention groups, group index g = h*B + b
FFN = 64                    # feed-forward dim
VOCAB = 50
MAX_POS = 16
N_LAYERS = 2
LN_EPS = 1e-12              # DistilBERT LayerNorm eps
MASK_BIAS = -1e9            # additive mask bias (exp underflows to exactly 0)
MXU_DTYPE = jnp.bfloat16    # MXU operand dtype; accumulation stays f32


# ----------------------------- kernel helpers ------------------------------

def _layernorm(x, g, b):
    mu = jnp.mean(x, axis=-1, keepdims=True)
    var = jnp.mean(jnp.square(x - mu), axis=-1, keepdims=True)
    return (x - mu) * jax.lax.rsqrt(var + LN_EPS) * g + b


def _gelu(x):
    # TODO(synk): HF DistilBERT uses exact (erf) GELU; tanh approximation kept
    # for guaranteed Mosaic lowering (~1e-3 deviation).
    return jax.nn.gelu(x, approximate=True)


# ------------------------------ fused kernel --------------------------------

def fused_encoder_kernel(ids_ref, mask_ref,
                         wemb_ref, pemb_ref, embg_ref, embb_ref,
                         wq_ref, bq_ref, wk_ref, bk_ref, wv_ref, bv_ref,
                         wo_ref, bo_ref, ln1g_ref, ln1b_ref,
                         w1_ref, b1_ref, w2_ref, b2_ref, ln2g_ref, ln2b_ref,
                         o_ref):
    f32 = jnp.float32

    # ---- embeddings: in-kernel gather as a one-hot matmul on the MXU ----
    ids = ids_ref[...]                                            # (B*S, 1) int32
    iota = jax.lax.broadcasted_iota(jnp.int32, (B * S, VOCAB), 1)
    onehot = jnp.where(iota == ids, 1.0, 0.0).astype(MXU_DTYPE)   # (B*S, VOCAB)
    x = jnp.dot(onehot, wemb_ref[...], preferred_element_type=f32)  # (B*S, H)

    # position embeddings: broadcast over batch (tile-aligned reshape, no concat)
    pos = pemb_ref[0:S, :]                                        # (S, H) f32
    x = x + jnp.broadcast_to(pos[None], (B, S, H)).reshape(B * S, H)
    x = _layernorm(x, embg_ref[...], embb_ref[...])               # (B*S, H) f32

    # ---- additive attention-mask bias: one broadcast, hoisted out of layers ----
    bias = jnp.where(mask_ref[...] == 0, MASK_BIAS, 0.0)          # (B, 1, S) f32
    bias_g = jnp.broadcast_to(bias[None], (NH, B, 1, S)).reshape(G, 1, S)

    for l in range(N_LAYERS):
        # activation slab broadcast over heads: xg[g] = x[batch(g)], g = h*B + b
        xg = jnp.broadcast_to(x.reshape(1, B, S, H),
                              (NH, B, S, H)).reshape(G, S, H).astype(MXU_DTYPE)

        # per-(head, batch) Q/K/V projections: the head split is baked into the
        # weight layout, so outputs are lane-aligned (G, S, HD) with no slicing.
        # (1/sqrt(HD) is pre-folded into wq/bq at init time.)
        qg = jnp.einsum('gsd,gdo->gso', xg, wq_ref[l],
                        preferred_element_type=f32) + bq_ref[l]
        kg = jnp.einsum('gsd,gdo->gso', xg, wk_ref[l],
                        preferred_element_type=f32) + bk_ref[l]
        vg = jnp.einsum('gsd,gdo->gso', xg, wv_ref[l],
                        preferred_element_type=f32) + bv_ref[l]

        # batched attention over all (head, batch) groups at once
        scores = jnp.einsum('gsd,gtd->gst',
                            qg.astype(MXU_DTYPE), kg.astype(MXU_DTYPE),
                            preferred_element_type=f32) + bias_g   # (G, S, S)
        # NOTE: no max-subtraction — logits are O(1) here and masked entries
        # underflow to exactly 0; re-add if inputs can produce large logits.
        p = jnp.exp(scores)
        p = p * pl.reciprocal(jnp.sum(p, axis=-1, keepdims=True), approx=True)
        ctx = jnp.einsum('gst,gtd->gsd',
                         p.astype(MXU_DTYPE), vg.astype(MXU_DTYPE),
                         preferred_element_type=f32)               # (G, S, HD)

        # head merge folded into the output projection: per-group partial
        # projections with grouped W_o, then an unrolled sum over heads.
        ctx_proj = jnp.einsum('gsd,gdo->gso',
                              ctx.astype(MXU_DTYPE), wo_ref[l],
                              preferred_element_type=f32)          # (G, S, H)
        attn_out = ctx_proj[0:B]                                   # head 0, all batches
        for h in range(1, NH):
            attn_out = attn_out + ctx_proj[h * B:(h + 1) * B]      # (B, S, H)
        attn_out = attn_out.reshape(B * S, H) + bo_ref[l]

        h1 = _layernorm(x + attn_out, ln1g_ref[l], ln1b_ref[l])

        # FFN: plain 2-D matmuls over the flattened slab (bf16 operands, f32 acc)
        f = _gelu(jnp.dot(h1.astype(MXU_DTYPE), w1_ref[l],
                          preferred_element_type=f32) + b1_ref[l])
        f = jnp.dot(f.astype(MXU_DTYPE), w2_ref[l],
                    preferred_element_type=f32) + b2_ref[l]
        x = _layernorm(h1 + f, ln2g_ref[l], ln2b_ref[l])

    # ---- only the CLS token (target_token_idx = 0) leaves the kernel ----
    o_ref[...] = x.reshape(B, S, H)[:, 0, :]


# ------------------------------ pallas_call glue ----------------------------

def _full_spec(shape):
    nd = len(shape)
    return pl.BlockSpec(shape, lambda i, _nd=nd: (0,) * _nd)


@jax.jit
def text_encoder_forward(params, input_ids, attention_mask):
    ids = input_ids.reshape(B * S, 1).astype(jnp.int32)
    mask = attention_mask.reshape(B, 1, S).astype(jnp.int32)       # (B, 1, S)

    inputs = [ids, mask,
              params["word_emb"], params["pos_emb"],
              params["emb_ln_g"], params["emb_ln_b"],
              params["wq"], params["bq"], params["wk"], params["bk"],
              params["wv"], params["bv"], params["wo"], params["bo"],
              params["ln1g"], params["ln1b"],
              params["w1"], params["b1"], params["w2"], params["b2"],
              params["ln2g"], params["ln2b"]]

    return pl.pallas_call(
        fused_encoder_kernel,
        out_shape=jax.ShapeDtypeStruct((B, H), jnp.float32),
        grid_spec=pltpu.PrefetchScalarGridSpec(
            num_scalar_prefetch=0,
            grid=(1,),
            in_specs=[_full_spec(a.shape) for a in inputs],
            out_specs=pl.BlockSpec((B, H), lambda i: (0, 0))),
        compiler_params=pltpu.CompilerParams(
            dimension_semantics=("arbitrary",)),
    )(*inputs)


# ------------------------------ parameters ---------------------------------

def init_params(key):
    """Random DistilBERT-style params, pre-arranged for the fused kernel.

    Attention weights are stored in per-(head, batch) group layout
    (G = NH*B, g = h*B + b, duplicated over b — a few KB) so the kernel never
    slices/stacks heads; Q scale 1/sqrt(HD) is folded in; matmul weights are
    stored in bf16 (MXU operands), biases / LayerNorm params in f32.
    """
    def nrm(k, shape, scale=0.02):
        return scale * jax.random.normal(k, shape, jnp.float32)

    q_scale = 1.0 / (HD ** 0.5)

    def qkv_group(w, bias, pre_scale=1.0):
        # w: (H, NH*HD), bias: (NH*HD,)  ->  (G, H, HD), (G, 1, HD)
        wh = jnp.transpose(w.reshape(H, NH, HD), (1, 0, 2)) * pre_scale   # (NH, H, HD)
        wg = jnp.broadcast_to(wh[:, None], (NH, B, H, HD)).reshape(G, H, HD)
        bh = bias.reshape(NH, 1, HD) * pre_scale
        bg = jnp.broadcast_to(bh[:, None], (NH, B, 1, HD)).reshape(G, 1, HD)
        return wg.astype(MXU_DTYPE), bg.astype(jnp.float32)

    def out_group(w):
        # w: (NH*HD, H)  ->  (G, HD, H)
        wh = w.reshape(NH, HD, H)
        wg = jnp.broadcast_to(wh[:, None], (NH, B, HD, H)).reshape(G, HD, H)
        return wg.astype(MXU_DTYPE)

    keys = jax.random.split(key, 2 + 6 * N_LAYERS)
    params = {
        "word_emb": nrm(keys[0], (VOCAB, H)).astype(MXU_DTYPE),
        "pos_emb": nrm(keys[1], (MAX_POS, H)),
        "emb_ln_g": jnp.ones((1, H), jnp.float32),
        "emb_ln_b": jnp.zeros((1, H), jnp.float32),
    }
    acc = {k: [] for k in ("wq", "bq", "wk", "bk", "wv", "bv", "wo", "bo",
                           "ln1g", "ln1b", "w1", "b1", "w2", "b2",
                           "ln2g", "ln2b")}
    for l in range(N_LAYERS):
        kq, kk, kv, ko, k1, k2 = keys[2 + 6 * l: 8 + 6 * l]
        zeros_h = jnp.zeros((H,), jnp.float32)
        wq, bq = qkv_group(nrm(kq, (H, H)), zeros_h, pre_scale=q_scale)
        wk, bk = qkv_group(nrm(kk, (H, H)), zeros_h)
        wv, bv = qkv_group(nrm(kv, (H, H)), zeros_h)
        acc["wq"].append(wq); acc["bq"].append(bq)
        acc["wk"].append(wk); acc["bk"].append(bk)
        acc["wv"].append(wv); acc["bv"].append(bv)
        acc["wo"].append(out_group(nrm(ko, (H, H))))
        acc["bo"].append(jnp.zeros((1, H), jnp.float32))
        acc["ln1g"].append(jnp.ones((1, H), jnp.float32))
        acc["ln1b"].append(jnp.zeros((1, H), jnp.float32))
        acc["w1"].append(nrm(k1, (H, FFN)).astype(MXU_DTYPE))
        acc["b1"].append(jnp.zeros((1, FFN), jnp.float32))
        acc["w2"].append(nrm(k2, (FFN, H)).astype(MXU_DTYPE))
        acc["b2"].append(jnp.zeros((1, H), jnp.float32))
        acc["ln2g"].append(jnp.ones((1, H), jnp.float32))
        acc["ln2b"].append(jnp.zeros((1, H), jnp.float32))
    params.update({k: jnp.stack(v, axis=0) for k, v in acc.items()})
    return params


# ---------------------------------- main ------------------------------------

if __name__ == "__main__":
    key = jax.random.PRNGKey(0)
    kp, kid = jax.random.split(key)
    params = init_params(kp)

    input_ids = jax.random.randint(kid, (B, S), 0, VOCAB, dtype=jnp.int32)
    attention_mask = jnp.array(
        [[1, 1, 1, 1, 1, 1, 1, 1],
         [1, 1, 1, 1, 1, 0, 0, 0]], dtype=jnp.int32)

    out = text_encoder_forward(params, input_ids, attention_mask)
    out = jax.block_until_ready(out)
    assert out.shape == (B, H), out.shape
    print("KERNEL_OK")
</pallas_src>

<mosaic_0001>
module attributes {stable_mosaic.version = 11 : i64} {
  func.func @fused_encoder_kernel(%arg0: i32, %arg1: memref<16x1xi32, #tpu.memory_space<vmem>>, %arg2: memref<2x1x8xi32, #tpu.memory_space<vmem>>, %arg3: memref<50x32xbf16, #tpu.memory_space<vmem>>, %arg4: memref<16x32xf32, #tpu.memory_space<vmem>>, %arg5: memref<1x32xf32, #tpu.memory_space<vmem>>, %arg6: memref<1x32xf32, #tpu.memory_space<vmem>>, %arg7: memref<2x8x32x8xbf16, #tpu.memory_space<vmem>>, %arg8: memref<2x8x1x8xf32, #tpu.memory_space<vmem>>, %arg9: memref<2x8x32x8xbf16, #tpu.memory_space<vmem>>, %arg10: memref<2x8x1x8xf32, #tpu.memory_space<vmem>>, %arg11: memref<2x8x32x8xbf16, #tpu.memory_space<vmem>>, %arg12: memref<2x8x1x8xf32, #tpu.memory_space<vmem>>, %arg13: memref<2x8x8x32xbf16, #tpu.memory_space<vmem>>, %arg14: memref<2x1x32xf32, #tpu.memory_space<vmem>>, %arg15: memref<2x1x32xf32, #tpu.memory_space<vmem>>, %arg16: memref<2x1x32xf32, #tpu.memory_space<vmem>>, %arg17: memref<2x32x64xbf16, #tpu.memory_space<vmem>>, %arg18: memref<2x1x64xf32, #tpu.memory_space<vmem>>, %arg19: memref<2x64x32xbf16, #tpu.memory_space<vmem>>, %arg20: memref<2x1x32xf32, #tpu.memory_space<vmem>>, %arg21: memref<2x1x32xf32, #tpu.memory_space<vmem>>, %arg22: memref<2x1x32xf32, #tpu.memory_space<vmem>>, %arg23: memref<2x32xf32, #tpu.memory_space<vmem>>) attributes {dimension_semantics = [#tpu.dimension_semantics<arbitrary>], iteration_bounds = array<i64: 1>, scalar_prefetch = 0 : i64, scratch_operands = 0 : i64, tpu.core_type = #tpu.core_type<tc>, window_params = [{pipeline_mode = #tpu.pipeline_mode<synchronous>, transform_indices = @transform_0, window_bounds = array<i64: 16, 1>}, {pipeline_mode = #tpu.pipeline_mode<synchronous>, transform_indices = @transform_1, window_bounds = array<i64: 2, 1, 8>}, {pipeline_mode = #tpu.pipeline_mode<synchronous>, transform_indices = @transform_2, window_bounds = array<i64: 50, 32>}, {pipeline_mode = #tpu.pipeline_mode<synchronous>, transform_indices = @transform_3, window_bounds = array<i64: 16, 32>}, {pipeline_mode = #tpu.pipeline_mode<synchronous>, transform_indices = @transform_4, window_bounds = array<i64: 1, 32>}, {pipeline_mode = #tpu.pipeline_mode<synchronous>, transform_indices = @transform_5, window_bounds = array<i64: 1, 32>}, {pipeline_mode = #tpu.pipeline_mode<synchronous>, transform_indices = @transform_6, window_bounds = array<i64: 2, 8, 32, 8>}, {pipeline_mode = #tpu.pipeline_mode<synchronous>, transform_indices = @transform_7, window_bounds = array<i64: 2, 8, 1, 8>}, {pipeline_mode = #tpu.pipeline_mode<synchronous>, transform_indices = @transform_8, window_bounds = array<i64: 2, 8, 32, 8>}, {pipeline_mode = #tpu.pipeline_mode<synchronous>, transform_indices = @transform_9, window_bounds = array<i64: 2, 8, 1, 8>}, {pipeline_mode = #tpu.pipeline_mode<synchronous>, transform_indices = @transform_10, window_bounds = array<i64: 2, 8, 32, 8>}, {pipeline_mode = #tpu.pipeline_mode<synchronous>, transform_indices = @transform_11, window_bounds = array<i64: 2, 8, 1, 8>}, {pipeline_mode = #tpu.pipeline_mode<synchronous>, transform_indices = @transform_12, window_bounds = array<i64: 2, 8, 8, 32>}, {pipeline_mode = #tpu.pipeline_mode<synchronous>, transform_indices = @transform_13, window_bounds = array<i64: 2, 1, 32>}, {pipeline_mode = #tpu.pipeline_mode<synchronous>, transform_indices = @transform_14, window_bounds = array<i64: 2, 1, 32>}, {pipeline_mode = #tpu.pipeline_mode<synchronous>, transform_indices = @transform_15, window_bounds = array<i64: 2, 1, 32>}, {pipeline_mode = #tpu.pipeline_mode<synchronous>, transform_indices = @transform_16, window_bounds = array<i64: 2, 32, 64>}, {pipeline_mode = #tpu.pipeline_mode<synchronous>, transform_indices = @transform_17, window_bounds = array<i64: 2, 1, 64>}, {pipeline_mode = #tpu.pipeline_mode<synchronous>, transform_indices = @transform_18, window_bounds = array<i64: 2, 64, 32>}, {pipeline_mode = #tpu.pipeline_mode<synchronous>, transform_indices = @transform_19, window_bounds = array<i64: 2, 1, 32>}, {pipeline_mode = #tpu.pipeline_mode<synchronous>, transform_indices = @transform_20, window_bounds = array<i64: 2, 1, 32>}, {pipeline_mode = #tpu.pipeline_mode<synchronous>, transform_indices = @transform_21, window_bounds = array<i64: 2, 1, 32>}, {pipeline_mode = #tpu.pipeline_mode<synchronous>, transform_indices = @transform_22, window_bounds = array<i64: 2, 32>}]} {
    %c0 = arith.constant 0 : index
    %c0_0 = arith.constant 0 : index
    %0 = vector.load %arg1[%c0, %c0_0] : memref<16x1xi32, #tpu.memory_space<vmem>>, vector<16x1xi32>
    %1 = tpu.iota {dimensions = array<i32: 1>} : vector<16x50xi32>
    %2 = vector.broadcast %0 : vector<16x1xi32> to vector<16x50xi32>
    %3 = arith.cmpi eq, %1, %2 : vector<16x50xi32>
    %cst = arith.constant 1.000000e+00 : f32
    %cst_1 = arith.constant 0.000000e+00 : f32
    %4 = vector.broadcast %cst : f32 to vector<16x50xf32>
    %5 = vector.broadcast %cst_1 : f32 to vector<16x50xf32>
    %6 = arith.select %3, %4, %5 : vector<16x50xi1>, vector<16x50xf32>
    %7 = arith.truncf %6 : vector<16x50xf32> to vector<16x50xbf16>
    %c0_2 = arith.constant 0 : index
    %c0_3 = arith.constant 0 : index
    %8 = vector.load %arg3[%c0_2, %c0_3] : memref<50x32xbf16, #tpu.memory_space<vmem>>, vector<50x32xbf16>
    %cst_4 = arith.constant dense<0.000000e+00> : vector<16x32xf32>
    %9 = tpu.matmul %7, %8, %cst_4 {dimension_numbers = #tpu.dot_dimension_numbers<[1], [0], [0], [1], [0, 0, 1, 1], [], []>} : vector<16x50xbf16>, vector<50x32xbf16>, vector<16x32xf32> -> vector<16x32xf32>
    %c0_5 = arith.constant 0 : index
    %c0_6 = arith.constant 0 : index
    %10 = vector.load %arg4[%c0_5, %c0_6] : memref<16x32xf32, #tpu.memory_space<vmem>>, vector<8x32xf32>
    %11 = vector.shape_cast %10 : vector<8x32xf32> to vector<1x8x32xf32>
    %12 = vector.shape_cast %11 : vector<1x8x32xf32> to vector<1x8x32xf32>
    %13 = vector.broadcast %12 : vector<1x8x32xf32> to vector<2x8x32xf32>
    %14 = vector.shape_cast %13 : vector<2x8x32xf32> to vector<16x32xf32>
    %15 = arith.addf %9, %14 : vector<16x32xf32>
    %c0_7 = arith.constant 0 : index
    %c0_8 = arith.constant 0 : index
    %16 = vector.load %arg5[%c0_7, %c0_8] : memref<1x32xf32, #tpu.memory_space<vmem>>, vector<1x32xf32>
    %c0_9 = arith.constant 0 : index
    %c0_10 = arith.constant 0 : index
    %17 = vector.load %arg6[%c0_9, %c0_10] : memref<1x32xf32, #tpu.memory_space<vmem>>, vector<1x32xf32>
    %cst_11 = arith.constant dense<0.000000e+00> : vector<16xf32>
    %18 = vector.multi_reduction <add>, %15, %cst_11 [1] : vector<16x32xf32> to vector<16xf32>
    %19 = vector.shape_cast %18 : vector<16xf32> to vector<16x1xf32>
    %cst_12 = arith.constant 3.200000e+01 : f32
    %20 = vector.broadcast %cst_12 : f32 to vector<16x1xf32>
    %21 = arith.divf %19, %20 : vector<16x1xf32>
    %22 = vector.broadcast %21 : vector<16x1xf32> to vector<16x32xf32>
    %23 = arith.subf %15, %22 : vector<16x32xf32>
    %24 = arith.mulf %23, %23 : vector<16x32xf32>
    %cst_13 = arith.constant dense<0.000000e+00> : vector<16xf32>
    %25 = vector.multi_reduction <add>, %24, %cst_13 [1] : vector<16x32xf32> to vector<16xf32>
    %26 = vector.shape_cast %25 : vector<16xf32> to vector<16x1xf32>
    %cst_14 = arith.constant 3.200000e+01 : f32
    %27 = vector.broadcast %cst_14 : f32 to vector<16x1xf32>
    %28 = arith.divf %26, %27 : vector<16x1xf32>
    %29 = vector.broadcast %21 : vector<16x1xf32> to vector<16x32xf32>
    %30 = arith.subf %15, %29 : vector<16x32xf32>
    %cst_15 = arith.constant 9.99999996E-13 : f32
    %31 = vector.broadcast %cst_15 : f32 to vector<16x1xf32>
    %32 = arith.addf %28, %31 : vector<16x1xf32>
    %33 = math.rsqrt %32 : vector<16x1xf32>
    %34 = vector.broadcast %33 : vector<16x1xf32> to vector<16x32xf32>
    %35 = arith.mulf %30, %34 : vector<16x32xf32>
    %36 = vector.broadcast %16 : vector<1x32xf32> to vector<16x32xf32>
    %37 = arith.mulf %35, %36 : vector<16x32xf32>
    %38 = vector.broadcast %17 : vector<1x32xf32> to vector<16x32xf32>
    %39 = arith.addf %37, %38 : vector<16x32xf32>
    %c0_16 = arith.constant 0 : index
    %c0_17 = arith.constant 0 : index
    %c0_18 = arith.constant 0 : index
    %40 = vector.load %arg2[%c0_16, %c0_17, %c0_18] : memref<2x1x8xi32, #tpu.memory_space<vmem>>, vector<2x1x8xi32>
    %c0_i32 = arith.constant 0 : i32
    %41 = vector.broadcast %c0_i32 : i32 to vector<2x1x8xi32>
    %42 = arith.cmpi eq, %40, %41 : vector<2x1x8xi32>
    %cst_19 = arith.constant -1.000000e+09 : f32
    %cst_20 = arith.constant 0.000000e+00 : f32
    %43 = vector.broadcast %cst_19 : f32 to vector<2x1x8xf32>
    %44 = vector.broadcast %cst_20 : f32 to vector<2x1x8xf32>
    %45 = arith.select %42, %43, %44 : vector<2x1x8xi1>, vector<2x1x8xf32>
    %46 = vector.shape_cast %45 : vector<2x1x8xf32> to vector<1x2x1x8xf32>
    %47 = vector.shape_cast %46 : vector<1x2x1x8xf32> to vector<1x2x1x8xf32>
    %48 = vector.broadcast %47 : vector<1x2x1x8xf32> to vector<4x2x1x8xf32>
    %49 = vector.shape_cast %48 : vector<4x2x1x8xf32> to vector<8x1x8xf32>
    %50 = vector.shape_cast %39 : vector<16x32xf32> to vector<1x2x8x32xf32>
    %51 = vector.shape_cast %50 : vector<1x2x8x32xf32> to vector<1x2x8x32xf32>
    %52 = vector.broadcast %51 : vector<1x2x8x32xf32> to vector<4x2x8x32xf32>
    %53 = vector.shape_cast %52 : vector<4x2x8x32xf32> to vector<8x8x32xf32>
    %54 = arith.truncf %53 : vector<8x8x32xf32> to vector<8x8x32xbf16>
    %c0_21 = arith.constant 0 : index
    %c0_22 = arith.constant 0 : index
    %c0_23 = arith.constant 0 : index
    %c0_24 = arith.constant 0 : index
    %55 = vector.load %arg7[%c0_21, %c0_22, %c0_23, %c0_24] : memref<2x8x32x8xbf16, #tpu.memory_space<vmem>>, vector<1x8x32x8xbf16>
    %56 = vector.shape_cast %55 : vector<1x8x32x8xbf16> to vector<8x32x8xbf16>
    "tpu.trace_start"() <{level = 10 : i32, message = "gsd,gdo->gso"}> : () -> ()
    %cst_25 = arith.constant dense<0.000000e+00> : vector<8x8x8xf32>
    %57 = tpu.matmul %54, %56, %cst_25 {dimension_numbers = #tpu.dot_dimension_numbers<[2], [1], [1], [2], [0, 0, 0, 1, 1, 2], [0], [0]>} : vector<8x8x32xbf16>, vector<8x32x8xbf16>, vector<8x8x8xf32> -> vector<8x8x8xf32>
    "tpu.trace_stop"() : () -> ()
    %c0_26 = arith.constant 0 : index
    %c0_27 = arith.constant 0 : index
    %c0_28 = arith.constant 0 : index
    %c0_29 = arith.constant 0 : index
    %58 = vector.load %arg8[%c0_26, %c0_27, %c0_28, %c0_29] : memref<2x8x1x8xf32, #tpu.memory_space<vmem>>, vector<1x8x1x8xf32>
    %59 = vector.shape_cast %58 : vector<1x8x1x8xf32> to vector<8x1x8xf32>
    %60 = vector.broadcast %59 : vector<8x1x8xf32> to vector<8x8x8xf32>
    %61 = arith.addf %57, %60 : vector<8x8x8xf32>
    %c0_30 = arith.constant 0 : index
    %c0_31 = arith.constant 0 : index
    %c0_32 = arith.constant 0 : index
    %c0_33 = arith.constant 0 : index
    %62 = vector.load %arg9[%c0_30, %c0_31, %c0_32, %c0_33] : memref<2x8x32x8xbf16, #tpu.memory_space<vmem>>, vector<1x8x32x8xbf16>
    %63 = vector.shape_cast %62 : vector<1x8x32x8xbf16> to vector<8x32x8xbf16>
    "tpu.trace_start"() <{level = 10 : i32, message = "gsd,gdo->gso"}> : () -> ()
    %cst_34 = arith.constant dense<0.000000e+00> : vector<8x8x8xf32>
    %64 = tpu.matmul %54, %63, %cst_34 {dimension_numbers = #tpu.dot_dimension_numbers<[2], [1], [1], [2], [0, 0, 0, 1, 1, 2], [0], [0]>} : vector<8x8x32xbf16>, vector<8x32x8xbf16>, vector<8x8x8xf32> -> vector<8x8x8xf32>
    "tpu.trace_stop"() : () -> ()
    %c0_35 = arith.constant 0 : index
    %c0_36 = arith.constant 0 : index
    %c0_37 = arith.constant 0 : index
    %c0_38 = arith.constant 0 : index
    %65 = vector.load %arg10[%c0_35, %c0_36, %c0_37, %c0_38] : memref<2x8x1x8xf32, #tpu.memory_space<vmem>>, vector<1x8x1x8xf32>
    %66 = vector.shape_cast %65 : vector<1x8x1x8xf32> to vector<8x1x8xf32>
    %67 = vector.broadcast %66 : vector<8x1x8xf32> to vector<8x8x8xf32>
    %68 = arith.addf %64, %67 : vector<8x8x8xf32>
    %c0_39 = arith.constant 0 : index
    %c0_40 = arith.constant 0 : index
    %c0_41 = arith.constant 0 : index
    %c0_42 = arith.constant 0 : index
    %69 = vector.load %arg11[%c0_39, %c0_40, %c0_41, %c0_42] : memref<2x8x32x8xbf16, #tpu.memory_space<vmem>>, vector<1x8x32x8xbf16>
    %70 = vector.shape_cast %69 : vector<1x8x32x8xbf16> to vector<8x32x8xbf16>
    "tpu.trace_start"() <{level = 10 : i32, message = "gsd,gdo->gso"}> : () -> ()
    %cst_43 = arith.constant dense<0.000000e+00> : vector<8x8x8xf32>
    %71 = tpu.matmul %54, %70, %cst_43 {dimension_numbers = #tpu.dot_dimension_numbers<[2], [1], [1], [2], [0, 0, 0, 1, 1, 2], [0], [0]>} : vector<8x8x32xbf16>, vector<8x32x8xbf16>, vector<8x8x8xf32> -> vector<8x8x8xf32>
    "tpu.trace_stop"() : () -> ()
    %c0_44 = arith.constant 0 : index
    %c0_45 = arith.constant 0 : index
    %c0_46 = arith.constant 0 : index
    %c0_47 = arith.constant 0 : index
    %72 = vector.load %arg12[%c0_44, %c0_45, %c0_46, %c0_47] : memref<2x8x1x8xf32, #tpu.memory_space<vmem>>, vector<1x8x1x8xf32>
    %73 = vector.shape_cast %72 : vector<1x8x1x8xf32> to vector<8x1x8xf32>
    %74 = vector.broadcast %73 : vector<8x1x8xf32> to vector<8x8x8xf32>
    %75 = arith.addf %71, %74 : vector<8x8x8xf32>
    %76 = arith.truncf %61 : vector<8x8x8xf32> to vector<8x8x8xbf16>
    %77 = arith.truncf %68 : vector<8x8x8xf32> to vector<8x8x8xbf16>
    "tpu.trace_start"() <{level = 10 : i32, message = "gsd,gtd->gst"}> : () -> ()
    %cst_48 = arith.constant dense<0.000000e+00> : vector<8x8x8xf32>
    %78 = tpu.matmul %76, %77, %cst_48 {dimension_numbers = #tpu.dot_dimension_numbers<[2], [2], [1], [1], [0, 0, 0, 1, 1, 1], [0], [0]>} : vector<8x8x8xbf16>, vector<8x8x8xbf16>, vector<8x8x8xf32> -> vector<8x8x8xf32>
    "tpu.trace_stop"() : () -> ()
    %79 = vector.broadcast %49 : vector<8x1x8xf32> to vector<8x8x8xf32>
    %80 = arith.addf %78, %79 : vector<8x8x8xf32>
    %81 = math.exp %80 : vector<8x8x8xf32>
    %cst_49 = arith.constant dense<0.000000e+00> : vector<8x8xf32>
    %82 = vector.multi_reduction <add>, %81, %cst_49 [2] : vector<8x8x8xf32> to vector<8x8xf32>
    %83 = vector.shape_cast %82 : vector<8x8xf32> to vector<8x8x1xf32>
    %84 = tpu.reciprocal %83 {approx = true} : vector<8x8x1xf32> -> vector<8x8x1xf32>
    %85 = vector.broadcast %84 : vector<8x8x1xf32> to vector<8x8x8xf32>
    %86 = arith.mulf %81, %85 : vector<8x8x8xf32>
    %87 = arith.truncf %86 : vector<8x8x8xf32> to vector<8x8x8xbf16>
    %88 = arith.truncf %75 : vector<8x8x8xf32> to vector<8x8x8xbf16>
    "tpu.trace_start"() <{level = 10 : i32, message = "gst,gtd->gsd"}> : () -> ()
    %cst_50 = arith.constant dense<0.000000e+00> : vector<8x8x8xf32>
    %89 = tpu.matmul %87, %88, %cst_50 {dimension_numbers = #tpu.dot_dimension_numbers<[2], [1], [1], [2], [0, 0, 0, 1, 1, 2], [0], [0]>} : vector<8x8x8xbf16>, vector<8x8x8xbf16>, vector<8x8x8xf32> -> vector<8x8x8xf32>
    "tpu.trace_stop"() : () -> ()
    %90 = arith.truncf %89 : vector<8x8x8xf32> to vector<8x8x8xbf16>
    %c0_51 = arith.constant 0 : index
    %c0_52 = arith.constant 0 : index
    %c0_53 = arith.constant 0 : index
    %c0_54 = arith.constant 0 : index
    %91 = vector.load %arg13[%c0_51, %c0_52, %c0_53, %c0_54] : memref<2x8x8x32xbf16, #tpu.memory_space<vmem>>, vector<1x8x8x32xbf16>
    %92 = vector.shape_cast %91 : vector<1x8x8x32xbf16> to vector<8x8x32xbf16>
    "tpu.trace_start"() <{level = 10 : i32, message = "gsd,gdo->gso"}> : () -> ()
    %cst_55 = arith.constant dense<0.000000e+00> : vector<8x8x32xf32>
    %93 = tpu.matmul %90, %92, %cst_55 {dimension_numbers = #tpu.dot_dimension_numbers<[2], [1], [1], [2], [0, 0, 0, 1, 1, 2], [0], [0]>} : vector<8x8x8xbf16>, vector<8x8x32xbf16>, vector<8x8x32xf32> -> vector<8x8x32xf32>
    "tpu.trace_stop"() : () -> ()
    %94 = vector.extract_strided_slice %93 {offsets = [0, 0, 0], sizes = [2, 8, 32], strides = [1, 1, 1]} : vector<8x8x32xf32> to vector<2x8x32xf32>
    %95 = vector.extract_strided_slice %93 {offsets = [2, 0, 0], sizes = [2, 8, 32], strides = [1, 1, 1]} : vector<8x8x32xf32> to vector<2x8x32xf32>
    %96 = arith.addf %94, %95 : vector<2x8x32xf32>
    %97 = vector.extract_strided_slice %93 {offsets = [4, 0, 0], sizes = [2, 8, 32], strides = [1, 1, 1]} : vector<8x8x32xf32> to vector<2x8x32xf32>
    %98 = arith.addf %96, %97 : vector<2x8x32xf32>
    %99 = vector.extract_strided_slice %93 {offsets = [6, 0, 0], sizes = [2, 8, 32], strides = [1, 1, 1]} : vector<8x8x32xf32> to vector<2x8x32xf32>
    %100 = arith.addf %98, %99 : vector<2x8x32xf32>
    %101 = vector.shape_cast %100 : vector<2x8x32xf32> to vector<16x32xf32>
    %c0_56 = arith.constant 0 : index
    %c0_57 = arith.constant 0 : index
    %c0_58 = arith.constant 0 : index
    %102 = vector.load %arg14[%c0_56, %c0_57, %c0_58] : memref<2x1x32xf32, #tpu.memory_space<vmem>>, vector<1x1x32xf32>
    %103 = vector.shape_cast %102 : vector<1x1x32xf32> to vector<1x32xf32>
    %104 = vector.broadcast %103 : vector<1x32xf32> to vector<16x32xf32>
    %105 = arith.addf %101, %104 : vector<16x32xf32>
    %106 = arith.addf %39, %105 : vector<16x32xf32>
    %c0_59 = arith.constant 0 : index
    %c0_60 = arith.constant 0 : index
    %c0_61 = arith.constant 0 : index
    %107 = vector.load %arg15[%c0_59, %c0_60, %c0_61] : memref<2x1x32xf32, #tpu.memory_space<vmem>>, vector<1x1x32xf32>
    %108 = vector.shape_cast %107 : vector<1x1x32xf32> to vector<1x32xf32>
    %c0_62 = arith.constant 0 : index
    %c0_63 = arith.constant 0 : index
    %c0_64 = arith.constant 0 : index
    %109 = vector.load %arg16[%c0_62, %c0_63, %c0_64] : memref<2x1x32xf32, #tpu.memory_space<vmem>>, vector<1x1x32xf32>
    %110 = vector.shape_cast %109 : vector<1x1x32xf32> to vector<1x32xf32>
    %cst_65 = arith.constant dense<0.000000e+00> : vector<16xf32>
    %111 = vector.multi_reduction <add>, %106, %cst_65 [1] : vector<16x32xf32> to vector<16xf32>
    %112 = vector.shape_cast %111 : vector<16xf32> to vector<16x1xf32>
    %cst_66 = arith.constant 3.200000e+01 : f32
    %113 = vector.broadcast %cst_66 : f32 to vector<16x1xf32>
    %114 = arith.divf %112, %113 : vector<16x1xf32>
    %115 = vector.broadcast %114 : vector<16x1xf32> to vector<16x32xf32>
    %116 = arith.subf %106, %115 : vector<16x32xf32>
    %117 = arith.mulf %116, %116 : vector<16x32xf32>
    %cst_67 = arith.constant dense<0.000000e+00> : vector<16xf32>
    %118 = vector.multi_reduction <add>, %117, %cst_67 [1] : vector<16x32xf32> to vector<16xf32>
    %119 = vector.shape_cast %118 : vector<16xf32> to vector<16x1xf32>
    %cst_68 = arith.constant 3.200000e+01 : f32
    %120 = vector.broadcast %cst_68 : f32 to vector<16x1xf32>
    %121 = arith.divf %119, %120 : vector<16x1xf32>
    %122 = vector.broadcast %114 : vector<16x1xf32> to vector<16x32xf32>
    %123 = arith.subf %106, %122 : vector<16x32xf32>
    %cst_69 = arith.constant 9.99999996E-13 : f32
    %124 = vector.broadcast %cst_69 : f32 to vector<16x1xf32>
    %125 = arith.addf %121, %124 : vector<16x1xf32>
    %126 = math.rsqrt %125 : vector<16x1xf32>
    %127 = vector.broadcast %126 : vector<16x1xf32> to vector<16x32xf32>
    %128 = arith.mulf %123, %127 : vector<16x32xf32>
    %129 = vector.broadcast %108 : vector<1x32xf32> to vector<16x32xf32>
    %130 = arith.mulf %128, %129 : vector<16x32xf32>
    %131 = vector.broadcast %110 : vector<1x32xf32> to vector<16x32xf32>
    %132 = arith.addf %130, %131 : vector<16x32xf32>
    %133 = arith.truncf %132 : vector<16x32xf32> to vector<16x32xbf16>
    %c0_70 = arith.constant 0 : index
    %c0_71 = arith.constant 0 : index
    %c0_72 = arith.constant 0 : index
    %134 = vector.load %arg17[%c0_70, %c0_71, %c0_72] : memref<2x32x64xbf16, #tpu.memory_space<vmem>>, vector<1x32x64xbf16>
    %135 = vector.shape_cast %134 : vector<1x32x64xbf16> to vector<32x64xbf16>
    %cst_73 = arith.constant dense<0.000000e+00> : vector<16x64xf32>
    %136 = tpu.matmul %133, %135, %cst_73 {dimension_numbers = #tpu.dot_dimension_numbers<[1], [0], [0], [1], [0, 0, 1, 1], [], []>} : vector<16x32xbf16>, vector<32x64xbf16>, vector<16x64xf32> -> vector<16x64xf32>
    %c0_74 = arith.constant 0 : index
    %c0_75 = arith.constant 0 : index
    %c0_76 = arith.constant 0 : index
    %137 = vector.load %arg18[%c0_74, %c0_75, %c0_76] : memref<2x1x64xf32, #tpu.memory_space<vmem>>, vector<1x1x64xf32>
    %138 = vector.shape_cast %137 : vector<1x1x64xf32> to vector<1x64xf32>
    %139 = vector.broadcast %138 : vector<1x64xf32> to vector<16x64xf32>
    %140 = arith.addf %136, %139 : vector<16x64xf32>
    %141 = arith.mulf %140, %140 : vector<16x64xf32>
    %142 = arith.mulf %140, %141 : vector<16x64xf32>
    %cst_77 = arith.constant 4.471500e-02 : f32
    %143 = vector.broadcast %cst_77 : f32 to vector<16x64xf32>
    %144 = arith.mulf %143, %142 : vector<16x64xf32>
    %145 = arith.addf %140, %144 : vector<16x64xf32>
    %cst_78 = arith.constant 0.797884583 : f32
    %146 = vector.broadcast %cst_78 : f32 to vector<16x64xf32>
    %147 = arith.mulf %146, %145 : vector<16x64xf32>
    %148 = math.tanh %147 : vector<16x64xf32>
    %cst_79 = arith.constant 1.000000e+00 : f32
    %149 = vector.broadcast %cst_79 : f32 to vector<16x64xf32>
    %150 = arith.addf %149, %148 : vector<16x64xf32>
    %cst_80 = arith.constant 5.000000e-01 : f32
    %151 = vector.broadcast %cst_80 : f32 to vector<16x64xf32>
    %152 = arith.mulf %151, %150 : vector<16x64xf32>
    %153 = arith.mulf %140, %152 : vector<16x64xf32>
    %154 = arith.truncf %153 : vector<16x64xf32> to vector<16x64xbf16>
    %c0_81 = arith.constant 0 : index
    %c0_82 = arith.constant 0 : index
    %c0_83 = arith.constant 0 : index
    %155 = vector.load %arg19[%c0_81, %c0_82, %c0_83] : memref<2x64x32xbf16, #tpu.memory_space<vmem>>, vector<1x64x32xbf16>
    %156 = vector.shape_cast %155 : vector<1x64x32xbf16> to vector<64x32xbf16>
    %cst_84 = arith.constant dense<0.000000e+00> : vector<16x32xf32>
    %157 = tpu.matmul %154, %156, %cst_84 {dimension_numbers = #tpu.dot_dimension_numbers<[1], [0], [0], [1], [0, 0, 1, 1], [], []>} : vector<16x64xbf16>, vector<64x32xbf16>, vector<16x32xf32> -> vector<16x32xf32>
    %c0_85 = arith.constant 0 : index
    %c0_86 = arith.constant 0 : index
    %c0_87 = arith.constant 0 : index
    %158 = vector.load %arg20[%c0_85, %c0_86, %c0_87] : memref<2x1x32xf32, #tpu.memory_space<vmem>>, vector<1x1x32xf32>
    %159 = vector.shape_cast %158 : vector<1x1x32xf32> to vector<1x32xf32>
    %160 = vector.broadcast %159 : vector<1x32xf32> to vector<16x32xf32>
    %161 = arith.addf %157, %160 : vector<16x32xf32>
    %162 = arith.addf %132, %161 : vector<16x32xf32>
    %c0_88 = arith.constant 0 : index
    %c0_89 = arith.constant 0 : index
    %c0_90 = arith.constant 0 : index
    %163 = vector.load %arg21[%c0_88, %c0_89, %c0_90] : memref<2x1x32xf32, #tpu.memory_space<vmem>>, vector<1x1x32xf32>
    %164 = vector.shape_cast %163 : vector<1x1x32xf32> to vector<1x32xf32>
    %c0_91 = arith.constant 0 : index
    %c0_92 = arith.constant 0 : index
    %c0_93 = arith.constant 0 : index
    %165 = vector.load %arg22[%c0_91, %c0_92, %c0_93] : memref<2x1x32xf32, #tpu.memory_space<vmem>>, vector<1x1x32xf32>
    %166 = vector.shape_cast %165 : vector<1x1x32xf32> to vector<1x32xf32>
    %cst_94 = arith.constant dense<0.000000e+00> : vector<16xf32>
    %167 = vector.multi_reduction <add>, %162, %cst_94 [1] : vector<16x32xf32> to vector<16xf32>
    %168 = vector.shape_cast %167 : vector<16xf32> to vector<16x1xf32>
    %cst_95 = arith.constant 3.200000e+01 : f32
    %169 = vector.broadcast %cst_95 : f32 to vector<16x1xf32>
    %170 = arith.divf %168, %169 : vector<16x1xf32>
    %171 = vector.broadcast %170 : vector<16x1xf32> to vector<16x32xf32>
    %172 = arith.subf %162, %171 : vector<16x32xf32>
    %173 = arith.mulf %172, %172 : vector<16x32xf32>
    %cst_96 = arith.constant dense<0.000000e+00> : vector<16xf32>
    %174 = vector.multi_reduction <add>, %173, %cst_96 [1] : vector<16x32xf32> to vector<16xf32>
    %175 = vector.shape_cast %174 : vector<16xf32> to vector<16x1xf32>
    %cst_97 = arith.constant 3.200000e+01 : f32
    %176 = vector.broadcast %cst_97 : f32 to vector<16x1xf32>
    %177 = arith.divf %175, %176 : vector<16x1xf32>
    %178 = vector.broadcast %170 : vector<16x1xf32> to vector<16x32xf32>
    %179 = arith.subf %162, %178 : vector<16x32xf32>
    %cst_98 = arith.constant 9.99999996E-13 : f32
    %180 = vector.broadcast %cst_98 : f32 to vector<16x1xf32>
    %181 = arith.addf %177, %180 : vector<16x1xf32>
    %182 = math.rsqrt %181 : vector<16x1xf32>
    %183 = vector.broadcast %182 : vector<16x1xf32> to vector<16x32xf32>
    %184 = arith.mulf %179, %183 : vector<16x32xf32>
    %185 = vector.broadcast %164 : vector<1x32xf32> to vector<16x32xf32>
    %186 = arith.mulf %184, %185 : vector<16x32xf32>
    %187 = vector.broadcast %166 : vector<1x32xf32> to vector<16x32xf32>
    %188 = arith.addf %186, %187 : vector<16x32xf32>
    %189 = vector.shape_cast %188 : vector<16x32xf32> to vector<1x2x8x32xf32>
    %190 = vector.shape_cast %189 : vector<1x2x8x32xf32> to vector<1x2x8x32xf32>
    %191 = vector.broadcast %190 : vector<1x2x8x32xf32> to vector<4x2x8x32xf32>
    %192 = vector.shape_cast %191 : vector<4x2x8x32xf32> to vector<8x8x32xf32>
    %193 = arith.truncf %192 : vector<8x8x32xf32> to vector<8x8x32xbf16>
    %c1 = arith.constant 1 : index
    %c0_99 = arith.constant 0 : index
    %c0_100 = arith.constant 0 : index
    %c0_101 = arith.constant 0 : index
    %194 = vector.load %arg7[%c1, %c0_99, %c0_100, %c0_101] : memref<2x8x32x8xbf16, #tpu.memory_space<vmem>>, vector<1x8x32x8xbf16>
    %195 = vector.shape_cast %194 : vector<1x8x32x8xbf16> to vector<8x32x8xbf16>
    "tpu.trace_start"() <{level = 10 : i32, message = "gsd,gdo->gso"}> : () -> ()
    %cst_102 = arith.constant dense<0.000000e+00> : vector<8x8x8xf32>
    %196 = tpu.matmul %193, %195, %cst_102 {dimension_numbers = #tpu.dot_dimension_numbers<[2], [1], [1], [2], [0, 0, 0, 1, 1, 2], [0], [0]>} : vector<8x8x32xbf16>, vector<8x32x8xbf16>, vector<8x8x8xf32> -> vector<8x8x8xf32>
    "tpu.trace_stop"() : () -> ()
    %c1_103 = arith.constant 1 : index
    %c0_104 = arith.constant 0 : index
    %c0_105 = arith.constant 0 : index
    %c0_106 = arith.constant 0 : index
    %197 = vector.load %arg8[%c1_103, %c0_104, %c0_105, %c0_106] : memref<2x8x1x8xf32, #tpu.memory_space<vmem>>, vector<1x8x1x8xf32>
    %198 = vector.shape_cast %197 : vector<1x8x1x8xf32> to vector<8x1x8xf32>
    %199 = vector.broadcast %198 : vector<8x1x8xf32> to vector<8x8x8xf32>
    %200 = arith.addf %196, %199 : vector<8x8x8xf32>
    %c1_107 = arith.constant 1 : index
    %c0_108 = arith.constant 0 : index
    %c0_109 = arith.constant 0 : index
    %c0_110 = arith.constant 0 : index
    %201 = vector.load %arg9[%c1_107, %c0_108, %c0_109, %c0_110] : memref<2x8x32x8xbf16, #tpu.memory_space<vmem>>, vector<1x8x32x8xbf16>
    %202 = vector.shape_cast %201 : vector<1x8x32x8xbf16> to vector<8x32x8xbf16>
    "tpu.trace_start"() <{level = 10 : i32, message = "gsd,gdo->gso"}> : () -> ()
    %cst_111 = arith.constant dense<0.000000e+00> : vector<8x8x8xf32>
    %203 = tpu.matmul %193, %202, %cst_111 {dimension_numbers = #tpu.dot_dimension_numbers<[2], [1], [1], [2], [0, 0, 0, 1, 1, 2], [0], [0]>} : vector<8x8x32xbf16>, vector<8x32x8xbf16>, vector<8x8x8xf32> -> vector<8x8x8xf32>
    "tpu.trace_stop"() : () -> ()
    %c1_112 = arith.constant 1 : index
    %c0_113 = arith.constant 0 : index
    %c0_114 = arith.constant 0 : index
    %c0_115 = arith.constant 0 : index
    %204 = vector.load %arg10[%c1_112, %c0_113, %c0_114, %c0_115] : memref<2x8x1x8xf32, #tpu.memory_space<vmem>>, vector<1x8x1x8xf32>
    %205 = vector.shape_cast %204 : vector<1x8x1x8xf32> to vector<8x1x8xf32>
    %206 = vector.broadcast %205 : vector<8x1x8xf32> to vector<8x8x8xf32>
    %207 = arith.addf %203, %206 : vector<8x8x8xf32>
    %c1_116 = arith.constant 1 : index
    %c0_117 = arith.constant 0 : index
    %c0_118 = arith.constant 0 : index
    %c0_119 = arith.constant 0 : index
    %208 = vector.load %arg11[%c1_116, %c0_117, %c0_118, %c0_119] : memref<2x8x32x8xbf16, #tpu.memory_space<vmem>>, vector<1x8x32x8xbf16>
    %209 = vector.shape_cast %208 : vector<1x8x32x8xbf16> to vector<8x32x8xbf16>
    "tpu.trace_start"() <{level = 10 : i32, message = "gsd,gdo->gso"}> : () -> ()
    %cst_120 = arith.constant dense<0.000000e+00> : vector<8x8x8xf32>
    %210 = tpu.matmul %193, %209, %cst_120 {dimension_numbers = #tpu.dot_dimension_numbers<[2], [1], [1], [2], [0, 0, 0, 1, 1, 2], [0], [0]>} : vector<8x8x32xbf16>, vector<8x32x8xbf16>, vector<8x8x8xf32> -> vector<8x8x8xf32>
    "tpu.trace_stop"() : () -> ()
    %c1_121 = arith.constant 1 : index
    %c0_122 = arith.constant 0 : index
    %c0_123 = arith.constant 0 : index
    %c0_124 = arith.constant 0 : index
    %211 = vector.load %arg12[%c1_121, %c0_122, %c0_123, %c0_124] : memref<2x8x1x8xf32, #tpu.memory_space<vmem>>, vector<1x8x1x8xf32>
    %212 = vector.shape_cast %211 : vector<1x8x1x8xf32> to vector<8x1x8xf32>
    %213 = vector.broadcast %212 : vector<8x1x8xf32> to vector<8x8x8xf32>
    %214 = arith.addf %210, %213 : vector<8x8x8xf32>
    %215 = arith.truncf %200 : vector<8x8x8xf32> to vector<8x8x8xbf16>
    %216 = arith.truncf %207 : vector<8x8x8xf32> to vector<8x8x8xbf16>
    "tpu.trace_start"() <{level = 10 : i32, message = "gsd,gtd->gst"}> : () -> ()
    %cst_125 = arith.constant dense<0.000000e+00> : vector<8x8x8xf32>
    %217 = tpu.matmul %215, %216, %cst_125 {dimension_numbers = #tpu.dot_dimension_numbers<[2], [2], [1], [1], [0, 0, 0, 1, 1, 1], [0], [0]>} : vector<8x8x8xbf16>, vector<8x8x8xbf16>, vector<8x8x8xf32> -> vector<8x8x8xf32>
    "tpu.trace_stop"() : () -> ()
    %218 = vector.broadcast %49 : vector<8x1x8xf32> to vector<8x8x8xf32>
    %219 = arith.addf %217, %218 : vector<8x8x8xf32>
    %220 = math.exp %219 : vector<8x8x8xf32>
    %cst_126 = arith.constant dense<0.000000e+00> : vector<8x8xf32>
    %221 = vector.multi_reduction <add>, %220, %cst_126 [2] : vector<8x8x8xf32> to vector<8x8xf32>
    %222 = vector.shape_cast %221 : vector<8x8xf32> to vector<8x8x1xf32>
    %223 = tpu.reciprocal %222 {approx = true} : vector<8x8x1xf32> -> vector<8x8x1xf32>
    %224 = vector.broadcast %223 : vector<8x8x1xf32> to vector<8x8x8xf32>
    %225 = arith.mulf %220, %224 : vector<8x8x8xf32>
    %226 = arith.truncf %225 : vector<8x8x8xf32> to vector<8x8x8xbf16>
    %227 = arith.truncf %214 : vector<8x8x8xf32> to vector<8x8x8xbf16>
    "tpu.trace_start"() <{level = 10 : i32, message = "gst,gtd->gsd"}> : () -> ()
    %cst_127 = arith.constant dense<0.000000e+00> : vector<8x8x8xf32>
    %228 = tpu.matmul %226, %227, %cst_127 {dimension_numbers = #tpu.dot_dimension_numbers<[2], [1], [1], [2], [0, 0, 0, 1, 1, 2], [0], [0]>} : vector<8x8x8xbf16>, vector<8x8x8xbf16>, vector<8x8x8xf32> -> vector<8x8x8xf32>
    "tpu.trace_stop"() : () -> ()
    %229 = arith.truncf %228 : vector<8x8x8xf32> to vector<8x8x8xbf16>
    %c1_128 = arith.constant 1 : index
    %c0_129 = arith.constant 0 : index
    %c0_130 = arith.constant 0 : index
    %c0_131 = arith.constant 0 : index
    %230 = vector.load %arg13[%c1_128, %c0_129, %c0_130, %c0_131] : memref<2x8x8x32xbf16, #tpu.memory_space<vmem>>, vector<1x8x8x32xbf16>
    %231 = vector.shape_cast %230 : vector<1x8x8x32xbf16> to vector<8x8x32xbf16>
    "tpu.trace_start"() <{level = 10 : i32, message = "gsd,gdo->gso"}> : () -> ()
    %cst_132 = arith.constant dense<0.000000e+00> : vector<8x8x32xf32>
    %232 = tpu.matmul %229, %231, %cst_132 {dimension_numbers = #tpu.dot_dimension_numbers<[2], [1], [1], [2], [0, 0, 0, 1, 1, 2], [0], [0]>} : vector<8x8x8xbf16>, vector<8x8x32xbf16>, vector<8x8x32xf32> -> vector<8x8x32xf32>
    "tpu.trace_stop"() : () -> ()
    %233 = vector.extract_strided_slice %232 {offsets = [0, 0, 0], sizes = [2, 8, 32], strides = [1, 1, 1]} : vector<8x8x32xf32> to vector<2x8x32xf32>
    %234 = vector.extract_strided_slice %232 {offsets = [2, 0, 0], sizes = [2, 8, 32], strides = [1, 1, 1]} : vector<8x8x32xf32> to vector<2x8x32xf32>
    %235 = arith.addf %233, %234 : vector<2x8x32xf32>
    %236 = vector.extract_strided_slice %232 {offsets = [4, 0, 0], sizes = [2, 8, 32], strides = [1, 1, 1]} : vector<8x8x32xf32> to vector<2x8x32xf32>
    %237 = arith.addf %235, %236 : vector<2x8x32xf32>
    %238 = vector.extract_strided_slice %232 {offsets = [6, 0, 0], sizes = [2, 8, 32], strides = [1, 1, 1]} : vector<8x8x32xf32> to vector<2x8x32xf32>
    %239 = arith.addf %237, %238 : vector<2x8x32xf32>
    %240 = vector.shape_cast %239 : vector<2x8x32xf32> to vector<16x32xf32>
    %c1_133 = arith.constant 1 : index
    %c0_134 = arith.constant 0 : index
    %c0_135 = arith.constant 0 : index
    %241 = vector.load %arg14[%c1_133, %c0_134, %c0_135] : memref<2x1x32xf32, #tpu.memory_space<vmem>>, vector<1x1x32xf32>
    %242 = vector.shape_cast %241 : vector<1x1x32xf32> to vector<1x32xf32>
    %243 = vector.broadcast %242 : vector<1x32xf32> to vector<16x32xf32>
    %244 = arith.addf %240, %243 : vector<16x32xf32>
    %245 = arith.addf %188, %244 : vector<16x32xf32>
    %c1_136 = arith.constant 1 : index
    %c0_137 = arith.constant 0 : index
    %c0_138 = arith.constant 0 : index
    %246 = vector.load %arg15[%c1_136, %c0_137, %c0_138] : memref<2x1x32xf32, #tpu.memory_space<vmem>>, vector<1x1x32xf32>
    %247 = vector.shape_cast %246 : vector<1x1x32xf32> to vector<1x32xf32>
    %c1_139 = arith.constant 1 : index
    %c0_140 = arith.constant 0 : index
    %c0_141 = arith.constant 0 : index
    %248 = vector.load %arg16[%c1_139, %c0_140, %c0_141] : memref<2x1x32xf32, #tpu.memory_space<vmem>>, vector<1x1x32xf32>
    %249 = vector.shape_cast %248 : vector<1x1x32xf32> to vector<1x32xf32>
    %cst_142 = arith.constant dense<0.000000e+00> : vector<16xf32>
    %250 = vector.multi_reduction <add>, %245, %cst_142 [1] : vector<16x32xf32> to vector<16xf32>
    %251 = vector.shape_cast %250 : vector<16xf32> to vector<16x1xf32>
    %cst_143 = arith.constant 3.200000e+01 : f32
    %252 = vector.broadcast %cst_143 : f32 to vector<16x1xf32>
    %253 = arith.divf %251, %252 : vector<16x1xf32>
    %254 = vector.broadcast %253 : vector<16x1xf32> to vector<16x32xf32>
    %255 = arith.subf %245, %254 : vector<16x32xf32>
    %256 = arith.mulf %255, %255 : vector<16x32xf32>
    %cst_144 = arith.constant dense<0.000000e+00> : vector<16xf32>
    %257 = vector.multi_reduction <add>, %256, %cst_144 [1] : vector<16x32xf32> to vector<16xf32>
    %258 = vector.shape_cast %257 : vector<16xf32> to vector<16x1xf32>
    %cst_145 = arith.constant 3.200000e+01 : f32
    %259 = vector.broadcast %cst_145 : f32 to vector<16x1xf32>
    %260 = arith.divf %258, %259 : vector<16x1xf32>
    %261 = vector.broadcast %253 : vector<16x1xf32> to vector<16x32xf32>
    %262 = arith.subf %245, %261 : vector<16x32xf32>
    %cst_146 = arith.constant 9.99999996E-13 : f32
    %263 = vector.broadcast %cst_146 : f32 to vector<16x1xf32>
    %264 = arith.addf %260, %263 : vector<16x1xf32>
    %265 = math.rsqrt %264 : vector<16x1xf32>
    %266 = vector.broadcast %265 : vector<16x1xf32> to vector<16x32xf32>
    %267 = arith.mulf %262, %266 : vector<16x32xf32>
    %268 = vector.broadcast %247 : vector<1x32xf32> to vector<16x32xf32>
    %269 = arith.mulf %267, %268 : vector<16x32xf32>
    %270 = vector.broadcast %249 : vector<1x32xf32> to vector<16x32xf32>
    %271 = arith.addf %269, %270 : vector<16x32xf32>
    %272 = arith.truncf %271 : vector<16x32xf32> to vector<16x32xbf16>
    %c1_147 = arith.constant 1 : index
    %c0_148 = arith.constant 0 : index
    %c0_149 = arith.constant 0 : index
    %273 = vector.load %arg17[%c1_147, %c0_148, %c0_149] : memref<2x32x64xbf16, #tpu.memory_space<vmem>>, vector<1x32x64xbf16>
    %274 = vector.shape_cast %273 : vector<1x32x64xbf16> to vector<32x64xbf16>
    %cst_150 = arith.constant dense<0.000000e+00> : vector<16x64xf32>
    %275 = tpu.matmul %272, %274, %cst_150 {dimension_numbers = #tpu.dot_dimension_numbers<[1], [0], [0], [1], [0, 0, 1, 1], [], []>} : vector<16x32xbf16>, vector<32x64xbf16>, vector<16x64xf32> -> vector<16x64xf32>
    %c1_151 = arith.constant 1 : index
    %c0_152 = arith.constant 0 : index
    %c0_153 = arith.constant 0 : index
    %276 = vector.load %arg18[%c1_151, %c0_152, %c0_153] : memref<2x1x64xf32, #tpu.memory_space<vmem>>, vector<1x1x64xf32>
    %277 = vector.shape_cast %276 : vector<1x1x64xf32> to vector<1x64xf32>
    %278 = vector.broadcast %277 : vector<1x64xf32> to vector<16x64xf32>
    %279 = arith.addf %275, %278 : vector<16x64xf32>
    %280 = arith.mulf %279, %279 : vector<16x64xf32>
    %281 = arith.mulf %279, %280 : vector<16x64xf32>
    %cst_154 = arith.constant 4.471500e-02 : f32
    %282 = vector.broadcast %cst_154 : f32 to vector<16x64xf32>
    %283 = arith.mulf %282, %281 : vector<16x64xf32>
    %284 = arith.addf %279, %283 : vector<16x64xf32>
    %cst_155 = arith.constant 0.797884583 : f32
    %285 = vector.broadcast %cst_155 : f32 to vector<16x64xf32>
    %286 = arith.mulf %285, %284 : vector<16x64xf32>
    %287 = math.tanh %286 : vector<16x64xf32>
    %cst_156 = arith.constant 1.000000e+00 : f32
    %288 = vector.broadcast %cst_156 : f32 to vector<16x64xf32>
    %289 = arith.addf %288, %287 : vector<16x64xf32>
    %cst_157 = arith.constant 5.000000e-01 : f32
    %290 = vector.broadcast %cst_157 : f32 to vector<16x64xf32>
    %291 = arith.mulf %290, %289 : vector<16x64xf32>
    %292 = arith.mulf %279, %291 : vector<16x64xf32>
    %293 = arith.truncf %292 : vector<16x64xf32> to vector<16x64xbf16>
    %c1_158 = arith.constant 1 : index
    %c0_159 = arith.constant 0 : index
    %c0_160 = arith.constant 0 : index
    %294 = vector.load %arg19[%c1_158, %c0_159, %c0_160] : memref<2x64x32xbf16, #tpu.memory_space<vmem>>, vector<1x64x32xbf16>
    %295 = vector.shape_cast %294 : vector<1x64x32xbf16> to vector<64x32xbf16>
    %cst_161 = arith.constant dense<0.000000e+00> : vector<16x32xf32>
    %296 = tpu.matmul %293, %295, %cst_161 {dimension_numbers = #tpu.dot_dimension_numbers<[1], [0], [0], [1], [0, 0, 1, 1], [], []>} : vector<16x64xbf16>, vector<64x32xbf16>, vector<16x32xf32> -> vector<16x32xf32>
    %c1_162 = arith.constant 1 : index
    %c0_163 = arith.constant 0 : index
    %c0_164 = arith.constant 0 : index
    %297 = vector.load %arg20[%c1_162, %c0_163, %c0_164] : memref<2x1x32xf32, #tpu.memory_space<vmem>>, vector<1x1x32xf32>
    %298 = vector.shape_cast %297 : vector<1x1x32xf32> to vector<1x32xf32>
    %299 = vector.broadcast %298 : vector<1x32xf32> to vector<16x32xf32>
    %300 = arith.addf %296, %299 : vector<16x32xf32>
    %301 = arith.addf %271, %300 : vector<16x32xf32>
    %c1_165 = arith.constant 1 : index
    %c0_166 = arith.constant 0 : index
    %c0_167 = arith.constant 0 : index
    %302 = vector.load %arg21[%c1_165, %c0_166, %c0_167] : memref<2x1x32xf32, #tpu.memory_space<vmem>>, vector<1x1x32xf32>
    %303 = vector.shape_cast %302 : vector<1x1x32xf32> to vector<1x32xf32>
    %c1_168 = arith.constant 1 : index
    %c0_169 = arith.constant 0 : index
    %c0_170 = arith.constant 0 : index
    %304 = vector.load %arg22[%c1_168, %c0_169, %c0_170] : memref<2x1x32xf32, #tpu.memory_space<vmem>>, vector<1x1x32xf32>
    %305 = vector.shape_cast %304 : vector<1x1x32xf32> to vector<1x32xf32>
    %cst_171 = arith.constant dense<0.000000e+00> : vector<16xf32>
    %306 = vector.multi_reduction <add>, %301, %cst_171 [1] : vector<16x32xf32> to vector<16xf32>
    %307 = vector.shape_cast %306 : vector<16xf32> to vector<16x1xf32>
    %cst_172 = arith.constant 3.200000e+01 : f32
    %308 = vector.broadcast %cst_172 : f32 to vector<16x1xf32>
    %309 = arith.divf %307, %308 : vector<16x1xf32>
    %310 = vector.broadcast %309 : vector<16x1xf32> to vector<16x32xf32>
    %311 = arith.subf %301, %310 : vector<16x32xf32>
    %312 = arith.mulf %311, %311 : vector<16x32xf32>
    %cst_173 = arith.constant dense<0.000000e+00> : vector<16xf32>
    %313 = vector.multi_reduction <add>, %312, %cst_173 [1] : vector<16x32xf32> to vector<16xf32>
    %314 = vector.shape_cast %313 : vector<16xf32> to vector<16x1xf32>
    %cst_174 = arith.constant 3.200000e+01 : f32
    %315 = vector.broadcast %cst_174 : f32 to vector<16x1xf32>
    %316 = arith.divf %314, %315 : vector<16x1xf32>
    %317 = vector.broadcast %309 : vector<16x1xf32> to vector<16x32xf32>
    %318 = arith.subf %301, %317 : vector<16x32xf32>
    %cst_175 = arith.constant 9.99999996E-13 : f32
    %319 = vector.broadcast %cst_175 : f32 to vector<16x1xf32>
    %320 = arith.addf %316, %319 : vector<16x1xf32>
    %321 = math.rsqrt %320 : vector<16x1xf32>
    %322 = vector.broadcast %321 : vector<16x1xf32> to vector<16x32xf32>
    %323 = arith.mulf %318, %322 : vector<16x32xf32>
    %324 = vector.broadcast %303 : vector<1x32xf32> to vector<16x32xf32>
    %325 = arith.mulf %323, %324 : vector<16x32xf32>
    %326 = vector.broadcast %305 : vector<1x32xf32> to vector<16x32xf32>
    %327 = arith.addf %325, %326 : vector<16x32xf32>
    %328 = vector.shape_cast %327 : vector<16x32xf32> to vector<2x8x32xf32>
    %329 = vector.extract_strided_slice %328 {offsets = [0, 0, 0], sizes = [2, 1, 32], strides = [1, 1, 1]} : vector<2x8x32xf32> to vector<2x1x32xf32>
    %330 = vector.shape_cast %329 : vector<2x1x32xf32> to vector<2x32xf32>
    %c0_176 = arith.constant 0 : index
    %c0_177 = arith.constant 0 : index
    %331 = vector.load %arg23[%c0_176, %c0_177] : memref<2x32xf32, #tpu.memory_space<vmem>>, vector<2x32xf32>
    tpu.vector_store %arg23[%c0_176, %c0_177], %330 {strides = array<i32>} : memref<2x32xf32, #tpu.memory_space<vmem>>, vector<2x32xf32>,
    return
  }
  func.func @transform_0(%arg0: i32) -> (i32, i32) {
    %c0_i32 = arith.constant 0 : i32
    %c0_i32_0 = arith.constant 0 : i32
    %c0_i32_1 = arith.constant 0 : i32
    return %c0_i32, %c0_i32_0 : i32, i32
  }
  func.func @transform_1(%arg0: i32) -> (i32, i32, i32) {
    %c0_i32 = arith.constant 0 : i32
    %c0_i32_0 = arith.constant 0 : i32
    %c0_i32_1 = arith.constant 0 : i32
    %c0_i32_2 = arith.constant 0 : i32
    return %c0_i32, %c0_i32_0, %c0_i32_1 : i32, i32, i32
  }
  func.func @transform_2(%arg0: i32) -> (i32, i32) {
    %c0_i32 = arith.constant 0 : i32
    %c0_i32_0 = arith.constant 0 : i32
    %c0_i32_1 = arith.constant 0 : i32
    return %c0_i32, %c0_i32_0 : i32, i32
  }
  func.func @transform_3(%arg0: i32) -> (i32, i32) {
    %c0_i32 = arith.constant 0 : i32
    %c0_i32_0 = arith.constant 0 : i32
    %c0_i32_1 = arith.constant 0 : i32
    return %c0_i32, %c0_i32_0 : i32, i32
  }
  func.func @transform_4(%arg0: i32) -> (i32, i32) {
    %c0_i32 = arith.constant 0 : i32
    %c0_i32_0 = arith.constant 0 : i32
    %c0_i32_1 = arith.constant 0 : i32
    return %c0_i32, %c0_i32_0 : i32, i32
  }
  func.func @transform_5(%arg0: i32) -> (i32, i32) {
    %c0_i32 = arith.constant 0 : i32
    %c0_i32_0 = arith.constant 0 : i32
    %c0_i32_1 = arith.constant 0 : i32
    return %c0_i32, %c0_i32_0 : i32, i32
  }
  func.func @transform_6(%arg0: i32) -> (i32, i32, i32, i32) {
    %c0_i32 = arith.constant 0 : i32
    %c0_i32_0 = arith.constant 0 : i32
    %c0_i32_1 = arith.constant 0 : i32
    %c0_i32_2 = arith.constant 0 : i32
    %c0_i32_3 = arith.constant 0 : i32
    return %c0_i32, %c0_i32_0, %c0_i32_1, %c0_i32_2 : i32, i32, i32, i32
  }
  func.func @transform_7(%arg0: i32) -> (i32, i32, i32, i32) {
    %c0_i32 = arith.constant 0 : i32
    %c0_i32_0 = arith.constant 0 : i32
    %c0_i32_1 = arith.constant 0 : i32
    %c0_i32_2 = arith.constant 0 : i32
    %c0_i32_3 = arith.constant 0 : i32
    return %c0_i32, %c0_i32_0, %c0_i32_1, %c0_i32_2 : i32, i32, i32, i32
  }
  func.func @transform_8(%arg0: i32) -> (i32, i32, i32, i32) {
    %c0_i32 = arith.constant 0 : i32
    %c0_i32_0 = arith.constant 0 : i32
    %c0_i32_1 = arith.constant 0 : i32
    %c0_i32_2 = arith.constant 0 : i32
    %c0_i32_3 = arith.constant 0 : i32
    return %c0_i32, %c0_i32_0, %c0_i32_1, %c0_i32_2 : i32, i32, i32, i32
  }
  func.func @transform_9(%arg0: i32) -> (i32, i32, i32, i32) {
    %c0_i32 = arith.constant 0 : i32
    %c0_i32_0 = arith.constant 0 : i32
    %c0_i32_1 = arith.constant 0 : i32
    %c0_i32_2 = arith.constant 0 : i32
    %c0_i32_3 = arith.constant 0 : i32
    return %c0_i32, %c0_i32_0, %c0_i32_1, %c0_i32_2 : i32, i32, i32, i32
  }
  func.func @transform_10(%arg0: i32) -> (i32, i32, i32, i32) {
    %c0_i32 = arith.constant 0 : i32
    %c0_i32_0 = arith.constant 0 : i32
    %c0_i32_1 = arith.constant 0 : i32
    %c0_i32_2 = arith.constant 0 : i32
    %c0_i32_3 = arith.constant 0 : i32
    return %c0_i32, %c0_i32_0, %c0_i32_1, %c0_i32_2 : i32, i32, i32, i32
  }
  func.func @transform_11(%arg0: i32) -> (i32, i32, i32, i32) {
    %c0_i32 = arith.constant 0 : i32
    %c0_i32_0 = arith.constant 0 : i32
    %c0_i32_1 = arith.constant 0 : i32
    %c0_i32_2 = arith.constant 0 : i32
    %c0_i32_3 = arith.constant 0 : i32
    return %c0_i32, %c0_i32_0, %c0_i32_1, %c0_i32_2 : i32, i32, i32, i32
  }
  func.func @transform_12(%arg0: i32) -> (i32, i32, i32, i32) {
    %c0_i32 = arith.constant 0 : i32
    %c0_i32_0 = arith.constant 0 : i32
    %c0_i32_1 = arith.constant 0 : i32
    %c0_i32_2 = arith.constant 0 : i32
    %c0_i32_3 = arith.constant 0 : i32
    return %c0_i32, %c0_i32_0, %c0_i32_1, %c0_i32_2 : i32, i32, i32, i32
  }
  func.func @transform_13(%arg0: i32) -> (i32, i32, i32) {
    %c0_i32 = arith.constant 0 : i32
    %c0_i32_0 = arith.constant 0 : i32
    %c0_i32_1 = arith.constant 0 : i32
    %c0_i32_2 = arith.constant 0 : i32
    return %c0_i32, %c0_i32_0, %c0_i32_1 : i32, i32, i32
  }
  func.func @transform_14(%arg0: i32) -> (i32, i32, i32) {
    %c0_i32 = arith.constant 0 : i32
    %c0_i32_0 = arith.constant 0 : i32
    %c0_i32_1 = arith.constant 0 : i32
    %c0_i32_2 = arith.constant 0 : i32
    return %c0_i32, %c0_i32_0, %c0_i32_1 : i32, i32, i32
  }
  func.func @transform_15(%arg0: i32) -> (i32, i32, i32) {
    %c0_i32 = arith.constant 0 : i32
    %c0_i32_0 = arith.constant 0 : i32
    %c0_i32_1 = arith.constant 0 : i32
    %c0_i32_2 = arith.constant 0 : i32
    return %c0_i32, %c0_i32_0, %c0_i32_1 : i32, i32, i32
  }
  func.func @transform_16(%arg0: i32) -> (i32, i32, i32) {
    %c0_i32 = arith.constant 0 : i32
    %c0_i32_0 = arith.constant 0 : i32
    %c0_i32_1 = arith.constant 0 : i32
    %c0_i32_2 = arith.constant 0 : i32
    return %c0_i32, %c0_i32_0, %c0_i32_1 : i32, i32, i32
  }
  func.func @transform_17(%arg0: i32) -> (i32, i32, i32) {
    %c0_i32 = arith.constant 0 : i32
    %c0_i32_0 = arith.constant 0 : i32
    %c0_i32_1 = arith.constant 0 : i32
    %c0_i32_2 = arith.constant 0 : i32
    return %c0_i32, %c0_i32_0, %c0_i32_1 : i32, i32, i32
  }
  func.func @transform_18(%arg0: i32) -> (i32, i32, i32) {
    %c0_i32 = arith.constant 0 : i32
    %c0_i32_0 = arith.constant 0 : i32
    %c0_i32_1 = arith.constant 0 : i32
    %c0_i32_2 = arith.constant 0 : i32
    return %c0_i32, %c0_i32_0, %c0_i32_1 : i32, i32, i32
  }
  func.func @transform_19(%arg0: i32) -> (i32, i32, i32) {
    %c0_i32 = arith.constant 0 : i32
    %c0_i32_0 = arith.constant 0 : i32
    %c0_i32_1 = arith.constant 0 : i32
    %c0_i32_2 = arith.constant 0 : i32
    return %c0_i32, %c0_i32_0, %c0_i32_1 : i32, i32, i32
  }
  func.func @transform_20(%arg0: i32) -> (i32, i32, i32) {
    %c0_i32 = arith.constant 0 : i32
    %c0_i32_0 = arith.constant 0 : i32
    %c0_i32_1 = arith.constant 0 : i32
    %c0_i32_2 = arith.constant 0 : i32
    return %c0_i32, %c0_i32_0, %c0_i32_1 : i32, i32, i32
  }
  func.func @transform_21(%arg0: i32) -> (i32, i32, i32) {
    %c0_i32 = arith.constant 0 : i32
    %c0_i32_0 = arith.constant 0 : i32
    %c0_i32_1 = arith.constant 0 : i32
    %c0_i32_2 = arith.constant 0 : i32
    return %c0_i32, %c0_i32_0, %c0_i32_1 : i32, i32, i32
  }
  func.func @transform_22(%arg0: i32) -> (i32, i32) {
    %c0_i32 = arith.constant 0 : i32
    %c0_i32_0 = arith.constant 0 : i32
    %c0_i32_1 = arith.constant 0 : i32
    return %c0_i32, %c0_i32_0 : i32, i32
  }
}

</mosaic_0001>

<llo_original>
// kernel: text_encoder_forward.1
$region0: #{text_encoder_forward.1}
  #allocation0 [shape = 'u32[]', space=smem, size = 0x4, offset = 0x4, fixed_abs, tag = 'smem constant byte address 0x4 - core index']
  #allocation1 [shape = 'u32[72,128]{1,0:T(1,128)}', space=vmem, size = 0x9000, scoped, tag = 'internal scratch']
  %s0 = inlined_call_operand.vmem [shape: s32[16,1], index: 0, kind: input, shape index: {}]
  %s1 = inlined_call_operand.vmem [shape: s32[2,1,8], index: 1, kind: input, shape index: {}]
  %s2 = inlined_call_operand.vmem [shape: bf16[50,32], index: 2, kind: input, shape index: {}]
  %s3 = inlined_call_operand.vmem [shape: f32[16,32], index: 3, kind: input, shape index: {}]
  %s4 = inlined_call_operand.vmem [shape: f32[1,32], index: 4, kind: input, shape index: {}]
  %s5 = inlined_call_operand.vmem [shape: f32[1,32], index: 5, kind: input, shape index: {}]
  %s6 = inlined_call_operand.vmem [shape: bf16[2,8,32,8], index: 6, kind: input, shape index: {}]
  %s7 = inlined_call_operand.vmem [shape: f32[2,8,1,8], index: 7, kind: input, shape index: {}]
  %s8 = inlined_call_operand.vmem [shape: bf16[2,8,32,8], index: 8, kind: input, shape index: {}]
  %s9 = inlined_call_operand.vmem [shape: f32[2,8,1,8], index: 9, kind: input, shape index: {}]
  %s10 = inlined_call_operand.vmem [shape: bf16[2,8,32,8], index: 10, kind: input, shape index: {}]
  %s11 = inlined_call_operand.vmem [shape: f32[2,8,1,8], index: 11, kind: input, shape index: {}]
  %s12 = inlined_call_operand.vmem [shape: bf16[2,8,8,32], index: 12, kind: input, shape index: {}]
  %s13 = inlined_call_operand.vmem [shape: f32[2,1,32], index: 13, kind: input, shape index: {}]
  %s14 = inlined_call_operand.vmem [shape: f32[2,1,32], index: 14, kind: input, shape index: {}]
  %s15 = inlined_call_operand.vmem [shape: f32[2,1,32], index: 15, kind: input, shape index: {}]
  %s16 = inlined_call_operand.vmem [shape: bf16[2,32,64], index: 16, kind: input, shape index: {}]
  %s17 = inlined_call_operand.vmem [shape: f32[2,1,64], index: 17, kind: input, shape index: {}]
  %s18 = inlined_call_operand.vmem [shape: bf16[2,64,32], index: 18, kind: input, shape index: {}]
  %s19 = inlined_call_operand.vmem [shape: f32[2,1,32], index: 19, kind: input, shape index: {}]
  %s20 = inlined_call_operand.vmem [shape: f32[2,1,32], index: 20, kind: input, shape index: {}]
  %s21 = inlined_call_operand.vmem [shape: f32[2,1,32], index: 21, kind: input, shape index: {}]
  %s22 = inlined_call_operand.hbm [shape: f32[2,32], index: 22, kind: output, shape index: {}]
  %s23 = sld [smem:[#allocation0]]
  $region98: #{text_encoder_forward.1} parent=0
    _
  %s25 = ssub.s32 1, %s23
  %s26 = scalar_select 0, %s25, %s23
  $region1: #{text_encoder_forward.1} parent=0
    #allocation2 [shape = 'u8[1024]{0}', space=vmem, size = 0x400, scoped, tag = 'output window, operand 0, single buffered']
    #allocation3 [shape = 's32[1]{0}', space=sflag, size = 0x4, scoped, tag = 'scoped memory for text_encoder_forward.1']
    %27 = vsyncpa [#allocation3], 0
    // Predicated region
    $region2: #{text_encoder_forward.1} parent=1 // pred_check
      _
    $region3: #{text_encoder_forward.1} parent=1 // pred_check_branch
      %29 = sbr.rel (0) target = $region5
    $region4: #{text_encoder_forward.1} parent=1 // pred_region
      _
    $region5: #{text_encoder_forward.1} parent=1 // pred_fallthru
      _
    // Predicated region
    $region6: #{text_encoder_forward.1} parent=1 // pred_check
      _
    $region7: #{text_encoder_forward.1} parent=1 // pred_check_branch
      %31 = sbr.rel (0) target = $region9
    $region8: #{text_encoder_forward.1} parent=1 // pred_region
      _
    $region9: #{text_encoder_forward.1} parent=1 // pred_fallthru
      _
    // Predicated region
    $region10: #{text_encoder_forward.1} parent=1 // pred_check
      _
    $region11: #{text_encoder_forward.1} parent=1 // pred_check_branch
      %33 = sbr.rel (0) target = $region13
    $region12: #{text_encoder_forward.1} parent=1 // pred_region
      _
    $region13: #{text_encoder_forward.1} parent=1 // pred_fallthru
      _
    // Predicated region
    $region14: #{text_encoder_forward.1} parent=1 // pred_check
      _
    $region15: #{text_encoder_forward.1} parent=1 // pred_check_branch
      %35 = sbr.rel (0) target = $region17
    $region16: #{text_encoder_forward.1} parent=1 // pred_region
      _
    $region17: #{text_encoder_forward.1} parent=1 // pred_fallthru
      _
    // Predicated region
    $region18: #{text_encoder_forward.1} parent=1 // pred_check
      _
    $region19: #{text_encoder_forward.1} parent=1 // pred_check_branch
      %37 = sbr.rel (0) target = $region21
    $region20: #{text_encoder_forward.1} parent=1 // pred_region
      _
    $region21: #{text_encoder_forward.1} parent=1 // pred_fallthru
      _
    // Predicated region
    $region22: #{text_encoder_forward.1} parent=1 // pred_check
      _
    $region23: #{text_encoder_forward.1} parent=1 // pred_check_branch
      %39 = sbr.rel (0) target = $region25
    $region24: #{text_encoder_forward.1} parent=1 // pred_region
      _
    $region25: #{text_encoder_forward.1} parent=1 // pred_fallthru
      _
    // Predicated region
    $region26: #{text_encoder_forward.1} parent=1 // pred_check
      _
    $region27: #{text_encoder_forward.1} parent=1 // pred_check_branch
      %41 = sbr.rel (0) target = $region29
    $region28: #{text_encoder_forward.1} parent=1 // pred_region
      _
    $region29: #{text_encoder_forward.1} parent=1 // pred_fallthru
      _
    // Predicated region
    $region30: #{text_encoder_forward.1} parent=1 // pred_check
      _
    $region31: #{text_encoder_forward.1} parent=1 // pred_check_branch
      %43 = sbr.rel (0) target = $region33
    $region32: #{text_encoder_forward.1} parent=1 // pred_region
      _
    $region33: #{text_encoder_forward.1} parent=1 // pred_fallthru
      _
    // Predicated region
    $region34: #{text_encoder_forward.1} parent=1 // pred_check
      _
    $region35: #{text_encoder_forward.1} parent=1 // pred_check_branch
      %45 = sbr.rel (0) target = $region37
    $region36: #{text_encoder_forward.1} parent=1 // pred_region
      _
    $region37: #{text_encoder_forward.1} parent=1 // pred_fallthru
      _
    // Predicated region
    $region38: #{text_encoder_forward.1} parent=1 // pred_check
      _
    $region39: #{text_encoder_forward.1} parent=1 // pred_check_branch
      %47 = sbr.rel (0) target = $region41
    $region40: #{text_encoder_forward.1} parent=1 // pred_region
      _
    $region41: #{text_encoder_forward.1} parent=1 // pred_fallthru
      _
    // Predicated region
    $region42: #{text_encoder_forward.1} parent=1 // pred_check
      _
    $region43: #{text_encoder_forward.1} parent=1 // pred_check_branch
      %49 = sbr.rel (0) target = $region45
    $region44: #{text_encoder_forward.1} parent=1 // pred_region
      _
    $region45: #{text_encoder_forward.1} parent=1 // pred_fallthru
      _
    // Predicated region
    $region46: #{text_encoder_forward.1} parent=1 // pred_check
      _
    $region47: #{text_encoder_forward.1} parent=1 // pred_check_branch
      %51 = sbr.rel (0) target = $region49
    $region48: #{text_encoder_forward.1} parent=1 // pred_region
      _
    $region49: #{text_encoder_forward.1} parent=1 // pred_fallthru
      _
    // Predicated region
    $region50: #{text_encoder_forward.1} parent=1 // pred_check
      _
    $region51: #{text_encoder_forward.1} parent=1 // pred_check_branch
      %53 = sbr.rel (0) target = $region53
    $region52: #{text_encoder_forward.1} parent=1 // pred_region
      _
    $region53: #{text_encoder_forward.1} parent=1 // pred_fallthru
      _
    // Predicated region
    $region54: #{text_encoder_forward.1} parent=1 // pred_check
      _
    $region55: #{text_encoder_forward.1} parent=1 // pred_check_branch
      %55 = sbr.rel (0) target = $region57
    $region56: #{text_encoder_forward.1} parent=1 // pred_region
      _
    $region57: #{text_encoder_forward.1} parent=1 // pred_fallthru
      _
    // Predicated region
    $region58: #{text_encoder_forward.1} parent=1 // pred_check
      _
    $region59: #{text_encoder_forward.1} parent=1 // pred_check_branch
      %57 = sbr.rel (0) target = $region61
    $region60: #{text_encoder_forward.1} parent=1 // pred_region
      _
    $region61: #{text_encoder_forward.1} parent=1 // pred_fallthru
      _
    // Predicated region
    $region62: #{text_encoder_forward.1} parent=1 // pred_check
      _
    $region63: #{text_encoder_forward.1} parent=1 // pred_check_branch
      %59 = sbr.rel (0) target = $region65
    $region64: #{text_encoder_forward.1} parent=1 // pred_region
      _
    $region65: #{text_encoder_forward.1} parent=1 // pred_fallthru
      _
    // Predicated region
    $region66: #{text_encoder_forward.1} parent=1 // pred_check
      _
    $region67: #{text_encoder_forward.1} parent=1 // pred_check_branch
      %61 = sbr.rel (0) target = $region69
    $region68: #{text_encoder_forward.1} parent=1 // pred_region
      _
    $region69: #{text_encoder_forward.1} parent=1 // pred_fallthru
      _
    // Predicated region
    $region70: #{text_encoder_forward.1} parent=1 // pred_check
      _
    $region71: #{text_encoder_forward.1} parent=1 // pred_check_branch
      %63 = sbr.rel (0) target = $region73
    $region72: #{text_encoder_forward.1} parent=1 // pred_region
      _
    $region73: #{text_encoder_forward.1} parent=1 // pred_fallthru
      _
    // Predicated region
    $region74: #{text_encoder_forward.1} parent=1 // pred_check
      _
    $region75: #{text_encoder_forward.1} parent=1 // pred_check_branch
      %65 = sbr.rel (0) target = $region77
    $region76: #{text_encoder_forward.1} parent=1 // pred_region
      _
    $region77: #{text_encoder_forward.1} parent=1 // pred_fallthru
      _
    // Predicated region
    $region78: #{text_encoder_forward.1} parent=1 // pred_check
      _
    $region79: #{text_encoder_forward.1} parent=1 // pred_check_branch
      %67 = sbr.rel (0) target = $region81
    $region80: #{text_encoder_forward.1} parent=1 // pred_region
      _
    $region81: #{text_encoder_forward.1} parent=1 // pred_fallthru
      _
    // Predicated region
    $region82: #{text_encoder_forward.1} parent=1 // pred_check
      _
    $region83: #{text_encoder_forward.1} parent=1 // pred_check_branch
      %69 = sbr.rel (0) target = $region85
    $region84: #{text_encoder_forward.1} parent=1 // pred_region
      _
    $region85: #{text_encoder_forward.1} parent=1 // pred_fallthru
      _
    // Predicated region
    $region86: #{text_encoder_forward.1} parent=1 // pred_check
      _
    $region87: #{text_encoder_forward.1} parent=1 // pred_check_branch
      %71 = sbr.rel (0) target = $region89
    $region88: #{text_encoder_forward.1} parent=1 // pred_region
      _
    $region89: #{text_encoder_forward.1} parent=1 // pred_fallthru
      _
    %v73 = vld [vmem:[%s0] sm:$0xff]
    %v74 = vld [vmem:[%s0 + $0x8] sm:$0xff]
    %v75 = vlaneseq
    %v76 = vand.u32 %v75, 127
    %77 = vset.pattern.permute.xlu0 0
    %78 = vperm.xlu0 %77, %v73
    %v79 = vpop.permute.xlu0 %78
    %80 = vset.pattern.permute.xlu0 0
    %81 = vperm.xlu0 %80, %v74
    %v82 = vpop.permute.xlu0 %81
    %vm83 = vcmp.eq.s32.totalorder %v76, %v79
    %vm84 = vcmp.eq.s32.totalorder %v76, %v82
    %v85 = vsel %vm83, 1.0, 0.0
    %v86 = vsel %vm84, 1.0, 0.0
    %v87 = vpack.c.bf16 %v86, %v85
    %v88 = vld [vmem:[%s2] sm:$0xf]
    %v89 = vld [vmem:[%s2 + $0x4] sm:$0xf]
    %v90 = vld [vmem:[%s2 + $0x8] sm:$0xf]
    %v91 = vld [vmem:[%s2 + $0xc] sm:$0xf]
    %v92 = vld [vmem:[%s2 + $0x10] sm:$0xf]
    %v93 = vld [vmem:[%s2 + $0x14] sm:$0xf]
    %v94 = vld [vmem:[%s2 + $0x18] sm:$0x1]
    %v95 = vld [vmem:[%s3] sm:$0xff]
    %v103 = vunpack.c.l.b16 %v88
    %v104 = vunpack.c.l.b16 %v89
    %v105 = vunpack.c.l.b16 %v90
    %v106 = vunpack.c.l.b16 %v91
    %v107 = vunpack.c.l.b16 %v92
    %v108 = vunpack.c.l.b16 %v93
    %v109 = vunpack.c.l.b16 %v94
    %v110 = vpack.c.b16 %v104, %v103
    %v111 = vpack.c.b16 %v106, %v105
    %v112 = vpack.c.b16 %v108, %v107
    %v113 = vpack.c.b16 %v109, %v109
    %vm117 = vcmask 408576
    %v119 = vsel %vm117, %v87, 0
    %vm121 = vcmask 1040384
    %v123 = vsel %vm121, %v113, 0
    %125 = vmatpush.bf16.msra.mxu0 0
    %126 = vmatpush.bf16.msra.mxu0 0
    %127 = vmatpush.bf16.msra.mxu0 0
    %128 = vmatpush.bf16.msra.mxu0 0
    %129 = vmatpush.bf16.msra.mxu0 %v123
    %130 = vmatpush.bf16.msra.mxu0 %v112
    %131 = vmatpush.bf16.msra.mxu0 %v111
    %132 = vmatpush.bf16.msra.mxu0 %v110
    %133 = vmatmul.bf16.gmra.mxu0 %v119
    %v134 = vpop.f32.mrf.mxu0
    %v135 = vadd.f32 %v95, %v134
    %v136 = vpop.f32.mrf.mxu0
    %v137 = vadd.f32 %v95, %v136
    %138 = vdwg.mxu0
    %v139 = vld [vmem:[%s4] sm:$0x1]
    %v140 = vld [vmem:[%s5] sm:$0x1]
    %vm141 = vcmask 261120
    %v142 = vsel %vm141, %v135, 0.0
    %143 = vadd.xlane.f32.xlu0 %v142
    %v144 = vpop.xlane.xlu0 %143
    %v145 = vsel %vm141, %v137, 0.0
    %146 = vadd.xlane.f32.xlu0 %v145
    %v147 = vpop.xlane.xlu0 %146
    %v148 = vrcp.pop 32.0
    %v149 = vmul.f32 32.0, %v148
    %v150 = vsub.f32 1.0, %v149
    %v151 = vmul.f32 %v148, %v150
    %v152 = vadd.f32 %v148, %v151
    %vm153 = vweird.f32 %v148
    %v154 = vsel %vm153, %v148, %v152
    %v155 = vmul.f32 %v144, %v154
    %v156 = vmul.f32 %v147, %v154
    %v157 = vsub.f32 %v135, %v155
    %v158 = vsub.f32 %v137, %v156
    %v159 = vmul.f32 %v157, %v157
    %v160 = vmul.f32 %v158, %v158
    %v161 = vsel %vm141, %v159, 0.0
    %162 = vadd.xlane.f32.xlu0 %v161
    %v163 = vpop.xlane.xlu0 %162
    %v164 = vsel %vm141, %v160, 0.0
    %165 = vadd.xlane.f32.xlu0 %v164
    %v166 = vpop.xlane.xlu0 %165
    %v167 = vmul.f32 %v163, %v154
    %v168 = vmul.f32 %v166, %v154
    %v169 = vadd.f32 %v167, 1e-12
    %v170 = vadd.f32 %v168, 1e-12
    %v171 = vrsqrt.pop %v169
    %v172 = vmul.f32 %v171, %v169
    %v173 = vmul.f32 %v172, %v171
    %v174 = vmul.f32 0.5, %v173
    %v175 = vsub.f32 1.5, %v174
    %v176 = vmul.f32 %v171, %v175
    %vm177 = vweird.f32 %v169
    %vm178 = vweird.f32 %v171
    %vm179 = vmor %vm177, %vm178
    %v180 = vsel %vm179, %v171, %v176
    %v181 = vrsqrt.pop %v170
    %v182 = vmul.f32 %v181, %v170
    %v183 = vmul.f32 %v182, %v181
    %v184 = vmul.f32 0.5, %v183
    %v185 = vsub.f32 1.5, %v184
    %v186 = vmul.f32 %v181, %v185
    %vm187 = vweird.f32 %v170
    %vm188 = vweird.f32 %v181
    %vm189 = vmor %vm187, %vm188
    %v190 = vsel %vm189, %v181, %v186
    %v191 = vmul.f32 %v157, %v180
    %v192 = vmul.f32 %v158, %v190
    %v194 = vperm.slane %v139, 0
    %v196 = vmul.f32 %v191, %v194
    %v197 = vmul.f32 %v192, %v194
    %v199 = vperm.slane %v140, 0
    %v201 = vadd.f32 %v196, %v199
    %v202 = vadd.f32 %v197, %v199
    %v203 = vld [vmem:[%s1] sm:$0x1]
    %v204 = vld [vmem:[%s1 + $0x1] sm:$0x1]
    %vm205 = vcmp.eq.s32.totalorder %v203, 0
    %vm206 = vcmp.eq.s32.totalorder %v204, 0
    %v207 = vsel %vm205, -1e+09, 0.0
    %v208 = vsel %vm206, -1e+09, 0.0
    %v209 = vpack.c.bf16 %v201, %v201
    %v210 = vpack.c.bf16 %v202, %v202
    %v211 = vld [vmem:[%s6] sm:$0xf]
    %v212 = vld [vmem:[%s6 + $0x4] sm:$0xf]
    %v213 = vld [vmem:[%s6 + $0x8] sm:$0xf]
    %v214 = vld [vmem:[%s6 + $0xc] sm:$0xf]
    %v215 = vld [vmem:[%s6 + $0x10] sm:$0xf]
    %v216 = vld [vmem:[%s6 + $0x14] sm:$0xf]
    %v217 = vld [vmem:[%s6 + $0x18] sm:$0xf]
    %v218 = vld [vmem:[%s6 + $0x1c] sm:$0xf]
    %v219 = vld [vmem:[%s6 + $0x20] sm:$0xf]
    %v220 = vld [vmem:[%s6 + $0x24] sm:$0xf]
    %v221 = vld [vmem:[%s6 + $0x28] sm:$0xf]
    %v222 = vld [vmem:[%s6 + $0x2c] sm:$0xf]
    %v223 = vld [vmem:[%s6 + $0x30] sm:$0xf]
    %v224 = vld [vmem:[%s6 + $0x34] sm:$0xf]
    %v225 = vld [vmem:[%s6 + $0x38] sm:$0xf]
    %v226 = vld [vmem:[%s6 + $0x3c] sm:$0xf]
    %v227 = vld [vmem:[%s6 + $0x40] sm:$0xf]
    %v228 = vld [vmem:[%s6 + $0x44] sm:$0xf]
    %v229 = vld [vmem:[%s6 + $0x48] sm:$0xf]
    %v230 = vld [vmem:[%s6 + $0x4c] sm:$0xf]
    %v231 = vld [vmem:[%s6 + $0x50] sm:$0xf]
    %v232 = vld [vmem:[%s6 + $0x54] sm:$0xf]
    %v233 = vld [vmem:[%s6 + $0x58] sm:$0xf]
    %v234 = vld [vmem:[%s6 + $0x5c] sm:$0xf]
    %v235 = vld [vmem:[%s6 + $0x60] sm:$0xf]
    %v236 = vld [vmem:[%s6 + $0x64] sm:$0xf]
    %v237 = vld [vmem:[%s6 + $0x68] sm:$0xf]
    %v238 = vld [vmem:[%s6 + $0x6c] sm:$0xf]
    %v239 = vld [vmem:[%s6 + $0x70] sm:$0xf]
    %v240 = vld [vmem:[%s6 + $0x74] sm:$0xf]
    %v241 = vld [vmem:[%s6 + $0x78] sm:$0xf]
    %v242 = vld [vmem:[%s6 + $0x7c] sm:$0xf]
    %v243 = vld [vmem:[%s7] sm:$0x1]
    %v244 = vld [vmem:[%s7 + $0x1] sm:$0x1]
    %v245 = vld [vmem:[%s7 + $0x2] sm:$0x1]
    %v246 = vld [vmem:[%s7 + $0x3] sm:$0x1]
    %v247 = vld [vmem:[%s7 + $0x4] sm:$0x1]
    %v248 = vld [vmem:[%s7 + $0x5] sm:$0x1]
    %v249 = vld [vmem:[%s7 + $0x6] sm:$0x1]
    %v250 = vld [vmem:[%s7 + $0x7] sm:$0x1]
    %v259 = vperm.slane %v243, 0
    %v260 = vperm.slane %v244, 0
    %v261 = vperm.slane %v245, 0
    %v262 = vperm.slane %v246, 0
    %v263 = vperm.slane %v247, 0
    %v264 = vperm.slane %v248, 0
    %v265 = vperm.slane %v249, 0
    %v266 = vperm.slane %v250, 0
    %v279 = vunpack.c.l.b16 %v211
    %v280 = vunpack.c.l.b16 %v212
    %v281 = vunpack.c.l.b16 %v213
    %v282 = vunpack.c.l.b16 %v214
    %v283 = vpack.c.b16 %v280, %v279
    %v284 = vpack.c.b16 %v282, %v281
    %v288 = vsel %vm141, %v209, 0
    %290 = vmatpush.bf16.msra.mxu0 0
    %291 = vmatpush.bf16.msra.mxu0 0
    %292 = vmatpush.bf16.msra.mxu0 0
    %293 = vmatpush.bf16.msra.mxu0 0
    %294 = vmatpush.bf16.msra.mxu0 0
    %295 = vmatpush.bf16.msra.mxu0 0
    %296 = vmatpush.bf16.msra.mxu0 %v284
    %297 = vmatpush.bf16.msra.mxu0 %v283
    %298 = vmatmul.bf16.gmra.mxu0 %v288
    %v299 = vpop.f32.mrf.mxu0
    %v300 = vadd.f32 %v259, %v299
    %v301 = vpop.f32.mrf.mxu0
    %302 = vdwg.mxu0
    %v307 = vunpack.c.l.b16 %v215
    %v308 = vunpack.c.l.b16 %v216
    %v309 = vunpack.c.l.b16 %v217
    %v310 = vunpack.c.l.b16 %v218
    %v311 = vpack.c.b16 %v308, %v307
    %v312 = vpack.c.b16 %v310, %v309
    %v316 = vsel %vm141, %v210, 0
    %318 = vmatpush.bf16.msra.mxu0 0
    %319 = vmatpush.bf16.msra.mxu0 0
    %320 = vmatpush.bf16.msra.mxu0 0
    %321 = vmatpush.bf16.msra.mxu0 0
    %322 = vmatpush.bf16.msra.mxu0 0
    %323 = vmatpush.bf16.msra.mxu0 0
    %324 = vmatpush.bf16.msra.mxu0 %v312
    %325 = vmatpush.bf16.msra.mxu0 %v311
    %326 = vmatmul.bf16.gmra.mxu0 %v316
    %v327 = vpop.f32.mrf.mxu0
    %v328 = vadd.f32 %v260, %v327
    %v329 = vpop.f32.mrf.mxu0
    %330 = vdwg.mxu0
    %v335 = vunpack.c.l.b16 %v219
    %v336 = vunpack.c.l.b16 %v220
    %v337 = vunpack.c.l.b16 %v221
    %v338 = vunpack.c.l.b16 %v222
    %v339 = vpack.c.b16 %v336, %v335
    %v340 = vpack.c.b16 %v338, %v337
    %343 = vmatpush.bf16.msra.mxu0 0
    %344 = vmatpush.bf16.msra.mxu0 0
    %345 = vmatpush.bf16.msra.mxu0 0
    %346 = vmatpush.bf16.msra.mxu0 0
    %347 = vmatpush.bf16.msra.mxu0 0
    %348 = vmatpush.bf16.msra.mxu0 0
    %349 = vmatpush.bf16.msra.mxu0 %v340
    %350 = vmatpush.bf16.msra.mxu0 %v339
    %351 = vmatmul.bf16.gmra.mxu0 %v288
    %v352 = vpop.f32.mrf.mxu0
    %v353 = vadd.f32 %v261, %v352
    %v354 = vpop.f32.mrf.mxu0
    %355 = vdwg.mxu0
    %v360 = vunpack.c.l.b16 %v223
    %v361 = vunpack.c.l.b16 %v224
    %v362 = vunpack.c.l.b16 %v225
    %v363 = vunpack.c.l.b16 %v226
    %v364 = vpack.c.b16 %v361, %v360
    %v365 = vpack.c.b16 %v363, %v362
    %368 = vmatpush.bf16.msra.mxu0 0
    %369 = vmatpush.bf16.msra.mxu0 0
    %370 = vmatpush.bf16.msra.mxu0 0
    %371 = vmatpush.bf16.msra.mxu0 0
    %372 = vmatpush.bf16.msra.mxu0 0
    %373 = vmatpush.bf16.msra.mxu0 0
    %374 = vmatpush.bf16.msra.mxu0 %v365
    %375 = vmatpush.bf16.msra.mxu0 %v364
    %376 = vmatmul.bf16.gmra.mxu0 %v316
    %v377 = vpop.f32.mrf.mxu0
    %v378 = vadd.f32 %v262, %v377
    %v379 = vpop.f32.mrf.mxu0
    %380 = vdwg.mxu0
    %v385 = vunpack.c.l.b16 %v227
    %v386 = vunpack.c.l.b16 %v228
    %v387 = vunpack.c.l.b16 %v229
    %v388 = vunpack.c.l.b16 %v230
    %v389 = vpack.c.b16 %v386, %v385
    %v390 = vpack.c.b16 %v388, %v387
    %393 = vmatpush.bf16.msra.mxu0 0
    %394 = vmatpush.bf16.msra.mxu0 0
    %395 = vmatpush.bf16.msra.mxu0 0
    %396 = vmatpush.bf16.msra.mxu0 0
    %397 = vmatpush.bf16.msra.mxu0 0
    %398 = vmatpush.bf16.msra.mxu0 0
    %399 = vmatpush.bf16.msra.mxu0 %v390
    %400 = vmatpush.bf16.msra.mxu0 %v389
    %401 = vmatmul.bf16.gmra.mxu0 %v288
    %v402 = vpop.f32.mrf.mxu0
    %v403 = vadd.f32 %v263, %v402
    %v404 = vpop.f32.mrf.mxu0
    %405 = vdwg.mxu0
    %v410 = vunpack.c.l.b16 %v231
    %v411 = vunpack.c.l.b16 %v232
    %v412 = vunpack.c.l.b16 %v233
    %v413 = vunpack.c.l.b16 %v234
    %v414 = vpack.c.b16 %v411, %v410
    %v415 = vpack.c.b16 %v413, %v412
    %418 = vmatpush.bf16.msra.mxu0 0
    %419 = vmatpush.bf16.msra.mxu0 0
    %420 = vmatpush.bf16.msra.mxu0 0
    %421 = vmatpush.bf16.msra.mxu0 0
    %422 = vmatpush.bf16.msra.mxu0 0
    %423 = vmatpush.bf16.msra.mxu0 0
    %424 = vmatpush.bf16.msra.mxu0 %v415
    %425 = vmatpush.bf16.msra.mxu0 %v414
    %426 = vmatmul.bf16.gmra.mxu0 %v316
    %v427 = vpop.f32.mrf.mxu0
    %v428 = vadd.f32 %v264, %v427
    %v429 = vpop.f32.mrf.mxu0
    %430 = vdwg.mxu0
    %v435 = vunpack.c.l.b16 %v235
    %v436 = vunpack.c.l.b16 %v236
    %v437 = vunpack.c.l.b16 %v237
    %v438 = vunpack.c.l.b16 %v238
    %v439 = vpack.c.b16 %v436, %v435
    %v440 = vpack.c.b16 %v438, %v437
    %443 = vmatpush.bf16.msra.mxu0 0
    %444 = vmatpush.bf16.msra.mxu0 0
    %445 = vmatpush.bf16.msra.mxu0 0
    %446 = vmatpush.bf16.msra.mxu0 0
    %447 = vmatpush.bf16.msra.mxu0 0
    %448 = vmatpush.bf16.msra.mxu0 0
    %449 = vmatpush.bf16.msra.mxu0 %v440
    %450 = vmatpush.bf16.msra.mxu0 %v439
    %451 = vmatmul.bf16.gmra.mxu0 %v288
    %v452 = vpop.f32.mrf.mxu0
    %v453 = vadd.f32 %v265, %v452
    %v454 = vpop.f32.mrf.mxu0
    %455 = vdwg.mxu0
    %v460 = vunpack.c.l.b16 %v239
    %v461 = vunpack.c.l.b16 %v240
    %v462 = vunpack.c.l.b16 %v241
    %v463 = vunpack.c.l.b16 %v242
    %v464 = vpack.c.b16 %v461, %v460
    %v465 = vpack.c.b16 %v463, %v462
    %468 = vmatpush.bf16.msra.mxu0 0
    %469 = vmatpush.bf16.msra.mxu0 0
    %470 = vmatpush.bf16.msra.mxu0 0
    %471 = vmatpush.bf16.msra.mxu0 0
    %472 = vmatpush.bf16.msra.mxu0 0
    %473 = vmatpush.bf16.msra.mxu0 0
    %474 = vmatpush.bf16.msra.mxu0 %v465
    %475 = vmatpush.bf16.msra.mxu0 %v464
    %476 = vmatmul.bf16.gmra.mxu0 %v316
    %v477 = vpop.f32.mrf.mxu0
    %v478 = vadd.f32 %v266, %v477
    %v479 = vpop.f32.mrf.mxu0
    %480 = vdwg.mxu0
    %v481 = vld [vmem:[%s8] sm:$0xf]
    %v482 = vld [vmem:[%s8 + $0x4] sm:$0xf]
    %v483 = vld [vmem:[%s8 + $0x8] sm:$0xf]
    %v484 = vld [vmem:[%s8 + $0xc] sm:$0xf]
    %v485 = vld [vmem:[%s8 + $0x10] sm:$0xf]
    %v486 = vld [vmem:[%s8 + $0x14] sm:$0xf]
    %v487 = vld [vmem:[%s8 + $0x18] sm:$0xf]
    %v488 = vld [vmem:[%s8 + $0x1c] sm:$0xf]
    %v489 = vld [vmem:[%s8 + $0x20] sm:$0xf]
    %v490 = vld [vmem:[%s8 + $0x24] sm:$0xf]
    %v491 = vld [vmem:[%s8 + $0x28] sm:$0xf]
    %v492 = vld [vmem:[%s8 + $0x2c] sm:$0xf]
    %v493 = vld [vmem:[%s8 + $0x30] sm:$0xf]
    %v494 = vld [vmem:[%s8 + $0x34] sm:$0xf]
    %v495 = vld [vmem:[%s8 + $0x38] sm:$0xf]
    %v496 = vld [vmem:[%s8 + $0x3c] sm:$0xf]
    %v497 = vld [vmem:[%s8 + $0x40] sm:$0xf]
    %v498 = vld [vmem:[%s8 + $0x44] sm:$0xf]
    %v499 = vld [vmem:[%s8 + $0x48] sm:$0xf]
    %v500 = vld [vmem:[%s8 + $0x4c] sm:$0xf]
    %v501 = vld [vmem:[%s8 + $0x50] sm:$0xf]
    %v502 = vld [vmem:[%s8 + $0x54] sm:$0xf]
    %v503 = vld [vmem:[%s8 + $0x58] sm:$0xf]
    %v504 = vld [vmem:[%s8 + $0x5c] sm:$0xf]
    %v505 = vld [vmem:[%s8 + $0x60] sm:$0xf]
    %v506 = vld [vmem:[%s8 + $0x64] sm:$0xf]
    %v507 = vld [vmem:[%s8 + $0x68] sm:$0xf]
    %v508 = vld [vmem:[%s8 + $0x6c] sm:$0xf]
    %v509 = vld [vmem:[%s8 + $0x70] sm:$0xf]
    %v510 = vld [vmem:[%s8 + $0x74] sm:$0xf]
    %v511 = vld [vmem:[%s8 + $0x78] sm:$0xf]
    %v512 = vld [vmem:[%s8 + $0x7c] sm:$0xf]
    %v513 = vld [vmem:[%s9] sm:$0x1]
    %v514 = vld [vmem:[%s9 + $0x1] sm:$0x1]
    %v515 = vld [vmem:[%s9 + $0x2] sm:$0x1]
    %v516 = vld [vmem:[%s9 + $0x3] sm:$0x1]
    %v517 = vld [vmem:[%s9 + $0x4] sm:$0x1]
    %v518 = vld [vmem:[%s9 + $0x5] sm:$0x1]
    %v519 = vld [vmem:[%s9 + $0x6] sm:$0x1]
    %v520 = vld [vmem:[%s9 + $0x7] sm:$0x1]
    %v529 = vperm.slane %v513, 0
    %v530 = vperm.slane %v514, 0
    %v531 = vperm.slane %v515, 0
    %v532 = vperm.slane %v516, 0
    %v533 = vperm.slane %v517, 0
    %v534 = vperm.slane %v518, 0
    %v535 = vperm.slane %v519, 0
    %v536 = vperm.slane %v520, 0
    %v549 = vunpack.c.l.b16 %v481
    %v550 = vunpack.c.l.b16 %v482
    %v551 = vunpack.c.l.b16 %v483
    %v552 = vunpack.c.l.b16 %v484
    %v553 = vpack.c.b16 %v550, %v549
    %v554 = vpack.c.b16 %v552, %v551
    %557 = vmatpush.bf16.msra.mxu0 0
    %558 = vmatpush.bf16.msra.mxu0 0
    %559 = vmatpush.bf16.msra.mxu0 0
    %560 = vmatpush.bf16.msra.mxu0 0
    %561 = vmatpush.bf16.msra.mxu0 0
    %562 = vmatpush.bf16.msra.mxu0 0
    %563 = vmatpush.bf16.msra.mxu0 %v554
    %564 = vmatpush.bf16.msra.mxu0 %v553
    %565 = vmatmul.bf16.gmra.mxu0 %v288
    %v566 = vpop.f32.mrf.mxu0
    %v567 = vadd.f32 %v529, %v566
    %v568 = vpop.f32.mrf.mxu0
    %569 = vdwg.mxu0
    %v574 = vunpack.c.l.b16 %v485
    %v575 = vunpack.c.l.b16 %v486
    %v576 = vunpack.c.l.b16 %v487
    %v577 = vunpack.c.l.b16 %v488
    %v578 = vpack.c.b16 %v575, %v574
    %v579 = vpack.c.b16 %v577, %v576
    %582 = vmatpush.bf16.msra.mxu0 0
    %583 = vmatpush.bf16.msra.mxu0 0
    %584 = vmatpush.bf16.msra.mxu0 0
    %585 = vmatpush.bf16.msra.mxu0 0
    %586 = vmatpush.bf16.msra.mxu0 0
    %587 = vmatpush.bf16.msra.mxu0 0
    %588 = vmatpush.bf16.msra.mxu0 %v579
    %589 = vmatpush.bf16.msra.mxu0 %v578
    %590 = vmatmul.bf16.gmra.mxu0 %v316
    %v591 = vpop.f32.mrf.mxu0
    %v592 = vadd.f32 %v530, %v591
    %v593 = vpop.f32.mrf.mxu0
    %594 = vdwg.mxu0
    %v599 = vunpack.c.l.b16 %v489
    %v600 = vunpack.c.l.b16 %v490
    %v601 = vunpack.c.l.b16 %v491
    %v602 = vunpack.c.l.b16 %v492
    %v603 = vpack.c.b16 %v600, %v599
    %v604 = vpack.c.b16 %v602, %v601
    %607 = vmatpush.bf16.msra.mxu0 0
    %608 = vmatpush.bf16.msra.mxu0 0
    %609 = vmatpush.bf16.msra.mxu0 0
    %610 = vmatpush.bf16.msra.mxu0 0
    %611 = vmatpush.bf16.msra.mxu0 0
    %612 = vmatpush.bf16.msra.mxu0 0
    %613 = vmatpush.bf16.msra.mxu0 %v604
    %614 = vmatpush.bf16.msra.mxu0 %v603
    %615 = vmatmul.bf16.gmra.mxu0 %v288
    %v616 = vpop.f32.mrf.mxu0
    %v617 = vadd.f32 %v531, %v616
    %v618 = vpop.f32.mrf.mxu0
    %619 = vdwg.mxu0
    %v624 = vunpack.c.l.b16 %v493
    %v625 = vunpack.c.l.b16 %v494
    %v626 = vunpack.c.l.b16 %v495
    %v627 = vunpack.c.l.b16 %v496
    %v628 = vpack.c.b16 %v625, %v624
    %v629 = vpack.c.b16 %v627, %v626
    %632 = vmatpush.bf16.msra.mxu0 0
    %633 = vmatpush.bf16.msra.mxu0 0
    %634 = vmatpush.bf16.msra.mxu0 0
    %635 = vmatpush.bf16.msra.mxu0 0
    %636 = vmatpush.bf16.msra.mxu0 0
    %637 = vmatpush.bf16.msra.mxu0 0
    %638 = vmatpush.bf16.msra.mxu0 %v629
    %639 = vmatpush.bf16.msra.mxu0 %v628
    %640 = vmatmul.bf16.gmra.mxu0 %v316
    %v641 = vpop.f32.mrf.mxu0
    %v642 = vadd.f32 %v532, %v641
    %v643 = vpop.f32.mrf.mxu0
    %644 = vdwg.mxu0
    %v649 = vunpack.c.l.b16 %v497
    %v650 = vunpack.c.l.b16 %v498
    %v651 = vunpack.c.l.b16 %v499
    %v652 = vunpack.c.l.b16 %v500
    %v653 = vpack.c.b16 %v650, %v649
    %v654 = vpack.c.b16 %v652, %v651
    %657 = vmatpush.bf16.msra.mxu0 0
    %658 = vmatpush.bf16.msra.mxu0 0
    %659 = vmatpush.bf16.msra.mxu0 0
    %660 = vmatpush.bf16.msra.mxu0 0
    %661 = vmatpush.bf16.msra.mxu0 0
    %662 = vmatpush.bf16.msra.mxu0 0
    %663 = vmatpush.bf16.msra.mxu0 %v654
    %664 = vmatpush.bf16.msra.mxu0 %v653
    %665 = vmatmul.bf16.gmra.mxu0 %v288
    %v666 = vpop.f32.mrf.mxu0
    %v667 = vadd.f32 %v533, %v666
    %v668 = vpop.f32.mrf.mxu0
    %669 = vdwg.mxu0
    %v674 = vunpack.c.l.b16 %v501
    %v675 = vunpack.c.l.b16 %v502
    %v676 = vunpack.c.l.b16 %v503
    %v677 = vunpack.c.l.b16 %v504
    %v678 = vpack.c.b16 %v675, %v674
    %v679 = vpack.c.b16 %v677, %v676
    %682 = vmatpush.bf16.msra.mxu0 0
    %683 = vmatpush.bf16.msra.mxu0 0
    %684 = vmatpush.bf16.msra.mxu0 0
    %685 = vmatpush.bf16.msra.mxu0 0
    %686 = vmatpush.bf16.msra.mxu0 0
    %687 = vmatpush.bf16.msra.mxu0 0
    %688 = vmatpush.bf16.msra.mxu0 %v679
    %689 = vmatpush.bf16.msra.mxu0 %v678
    %690 = vmatmul.bf16.gmra.mxu0 %v316
    %v691 = vpop.f32.mrf.mxu0
    %v692 = vadd.f32 %v534, %v691
    %v693 = vpop.f32.mrf.mxu0
    %694 = vdwg.mxu0
    %v699 = vunpack.c.l.b16 %v505
    %v700 = vunpack.c.l.b16 %v506
    %v701 = vunpack.c.l.b16 %v507
    %v702 = vunpack.c.l.b16 %v508
    %v703 = vpack.c.b16 %v700, %v699
    %v704 = vpack.c.b16 %v702, %v701
    %707 = vmatpush.bf16.msra.mxu0 0
    %708 = vmatpush.bf16.msra.mxu0 0
    %709 = vmatpush.bf16.msra.mxu0 0
    %710 = vmatpush.bf16.msra.mxu0 0
    %711 = vmatpush.bf16.msra.mxu0 0
    %712 = vmatpush.bf16.msra.mxu0 0
    %713 = vmatpush.bf16.msra.mxu0 %v704
    %714 = vmatpush.bf16.msra.mxu0 %v703
    %715 = vmatmul.bf16.gmra.mxu0 %v288
    %v716 = vpop.f32.mrf.mxu0
    %v717 = vadd.f32 %v535, %v716
    %v718 = vpop.f32.mrf.mxu0
    %719 = vdwg.mxu0
    %v724 = vunpack.c.l.b16 %v509
    %v725 = vunpack.c.l.b16 %v510
    %v726 = vunpack.c.l.b16 %v511
    %v727 = vunpack.c.l.b16 %v512
    %v728 = vpack.c.b16 %v725, %v724
    %v729 = vpack.c.b16 %v727, %v726
    %732 = vmatpush.bf16.msra.mxu0 0
    %733 = vmatpush.bf16.msra.mxu0 0
    %734 = vmatpush.bf16.msra.mxu0 0
    %735 = vmatpush.bf16.msra.mxu0 0
    %736 = vmatpush.bf16.msra.mxu0 0
    %737 = vmatpush.bf16.msra.mxu0 0
    %738 = vmatpush.bf16.msra.mxu0 %v729
    %739 = vmatpush.bf16.msra.mxu0 %v728
    %740 = vmatmul.bf16.gmra.mxu0 %v316
    %v741 = vpop.f32.mrf.mxu0
    %v742 = vadd.f32 %v536, %v741
    %v743 = vpop.f32.mrf.mxu0
    %744 = vdwg.mxu0
    %v745 = vld [vmem:[%s10] sm:$0xf]
    %v746 = vld [vmem:[%s10 + $0x4] sm:$0xf]
    %v747 = vld [vmem:[%s10 + $0x8] sm:$0xf]
    %v748 = vld [vmem:[%s10 + $0xc] sm:$0xf]
    %v749 = vld [vmem:[%s10 + $0x10] sm:$0xf]
    %v750 = vld [vmem:[%s10 + $0x14] sm:$0xf]
    %v751 = vld [vmem:[%s10 + $0x18] sm:$0xf]
    %v752 = vld [vmem:[%s10 + $0x1c] sm:$0xf]
    %v753 = vld [vmem:[%s10 + $0x20] sm:$0xf]
    %v754 = vld [vmem:[%s10 + $0x24] sm:$0xf]
    %v755 = vld [vmem:[%s10 + $0x28] sm:$0xf]
    %v756 = vld [vmem:[%s10 + $0x2c] sm:$0xf]
    %v757 = vld [vmem:[%s10 + $0x30] sm:$0xf]
    %v758 = vld [vmem:[%s10 + $0x34] sm:$0xf]
    %v759 = vld [vmem:[%s10 + $0x38] sm:$0xf]
    %v760 = vld [vmem:[%s10 + $0x3c] sm:$0xf]
    %v761 = vld [vmem:[%s10 + $0x40] sm:$0xf]
    %v762 = vld [vmem:[%s10 + $0x44] sm:$0xf]
    %v763 = vld [vmem:[%s10 + $0x48] sm:$0xf]
    %v764 = vld [vmem:[%s10 + $0x4c] sm:$0xf]
    %v765 = vld [vmem:[%s10 + $0x50] sm:$0xf]
    %v766 = vld [vmem:[%s10 + $0x54] sm:$0xf]
    %v767 = vld [vmem:[%s10 + $0x58] sm:$0xf]
    %v768 = vld [vmem:[%s10 + $0x5c] sm:$0xf]
    %v769 = vld [vmem:[%s10 + $0x60] sm:$0xf]
    %v770 = vld [vmem:[%s10 + $0x64] sm:$0xf]
    %v771 = vld [vmem:[%s10 + $0x68] sm:$0xf]
    %v772 = vld [vmem:[%s10 + $0x6c] sm:$0xf]
    %v773 = vld [vmem:[%s10 + $0x70] sm:$0xf]
    %v774 = vld [vmem:[%s10 + $0x74] sm:$0xf]
    %v775 = vld [vmem:[%s10 + $0x78] sm:$0xf]
    %v776 = vld [vmem:[%s10 + $0x7c] sm:$0xf]
    %v777 = vld [vmem:[%s11] sm:$0x1]
    %v778 = vld [vmem:[%s11 + $0x1] sm:$0x1]
    %v779 = vld [vmem:[%s11 + $0x2] sm:$0x1]
    %v780 = vld [vmem:[%s11 + $0x3] sm:$0x1]
    %v781 = vld [vmem:[%s11 + $0x4] sm:$0x1]
    %v782 = vld [vmem:[%s11 + $0x5] sm:$0x1]
    %v783 = vld [vmem:[%s11 + $0x6] sm:$0x1]
    %v784 = vld [vmem:[%s11 + $0x7] sm:$0x1]
    %v793 = vperm.slane %v777, 0
    %v794 = vperm.slane %v778, 0
    %v795 = vperm.slane %v779, 0
    %v796 = vperm.slane %v780, 0
    %v797 = vperm.slane %v781, 0
    %v798 = vperm.slane %v782, 0
    %v799 = vperm.slane %v783, 0
    %v800 = vperm.slane %v784, 0
    %v813 = vunpack.c.l.b16 %v745
    %v814 = vunpack.c.l.b16 %v746
    %v815 = vunpack.c.l.b16 %v747
    %v816 = vunpack.c.l.b16 %v748
    %v817 = vpack.c.b16 %v814, %v813
    %v818 = vpack.c.b16 %v816, %v815
    %821 = vmatpush.bf16.msra.mxu0 0
    %822 = vmatpush.bf16.msra.mxu0 0
    %823 = vmatpush.bf16.msra.mxu0 0
    %824 = vmatpush.bf16.msra.mxu0 0
    %825 = vmatpush.bf16.msra.mxu0 0
    %826 = vmatpush.bf16.msra.mxu0 0
    %827 = vmatpush.bf16.msra.mxu0 %v818
    %828 = vmatpush.bf16.msra.mxu0 %v817
    %829 = vmatmul.bf16.gmra.mxu0 %v288
    %v830 = vpop.f32.mrf.mxu0
    %v831 = vadd.f32 %v793, %v830
    %v832 = vpop.f32.mrf.mxu0
    %833 = vdwg.mxu0
    %v838 = vunpack.c.l.b16 %v749
    %v839 = vunpack.c.l.b16 %v750
    %v840 = vunpack.c.l.b16 %v751
    %v841 = vunpack.c.l.b16 %v752
    %v842 = vpack.c.b16 %v839, %v838
    %v843 = vpack.c.b16 %v841, %v840
    %846 = vmatpush.bf16.msra.mxu0 0
    %847 = vmatpush.bf16.msra.mxu0 0
    %848 = vmatpush.bf16.msra.mxu0 0
    %849 = vmatpush.bf16.msra.mxu0 0
    %850 = vmatpush.bf16.msra.mxu0 0
    %851 = vmatpush.bf16.msra.mxu0 0
    %852 = vmatpush.bf16.msra.mxu0 %v843
    %853 = vmatpush.bf16.msra.mxu0 %v842
    %854 = vmatmul.bf16.gmra.mxu0 %v316
    %v855 = vpop.f32.mrf.mxu0
    %v856 = vadd.f32 %v794, %v855
    %v857 = vpop.f32.mrf.mxu0
    %858 = vdwg.mxu0
    %v863 = vunpack.c.l.b16 %v753
    %v864 = vunpack.c.l.b16 %v754
    %v865 = vunpack.c.l.b16 %v755
    %v866 = vunpack.c.l.b16 %v756
    %v867 = vpack.c.b16 %v864, %v863
    %v868 = vpack.c.b16 %v866, %v865
    %871 = vmatpush.bf16.msra.mxu0 0
    %872 = vmatpush.bf16.msra.mxu0 0
    %873 = vmatpush.bf16.msra.mxu0 0
    %874 = vmatpush.bf16.msra.mxu0 0
    %875 = vmatpush.bf16.msra.mxu0 0
    %876 = vmatpush.bf16.msra.mxu0 0
    %877 = vmatpush.bf16.msra.mxu0 %v868
    %878 = vmatpush.bf16.msra.mxu0 %v867
    %879 = vmatmul.bf16.gmra.mxu0 %v288
    %v880 = vpop.f32.mrf.mxu0
    %v881 = vadd.f32 %v795, %v880
    %v882 = vpop.f32.mrf.mxu0
    %883 = vdwg.mxu0
    %v888 = vunpack.c.l.b16 %v757
    %v889 = vunpack.c.l.b16 %v758
    %v890 = vunpack.c.l.b16 %v759
    %v891 = vunpack.c.l.b16 %v760
    %v892 = vpack.c.b16 %v889, %v888
    %v893 = vpack.c.b16 %v891, %v890
    %896 = vmatpush.bf16.msra.mxu0 0
    %897 = vmatpush.bf16.msra.mxu0 0
    %898 = vmatpush.bf16.msra.mxu0 0
    %899 = vmatpush.bf16.msra.mxu0 0
    %900 = vmatpush.bf16.msra.mxu0 0
    %901 = vmatpush.bf16.msra.mxu0 0
    %902 = vmatpush.bf16.msra.mxu0 %v893
    %903 = vmatpush.bf16.msra.mxu0 %v892
    %904 = vmatmul.bf16.gmra.mxu0 %v316
    %v905 = vpop.f32.mrf.mxu0
    %v906 = vadd.f32 %v796, %v905
    %v907 = vpop.f32.mrf.mxu0
    %908 = vdwg.mxu0
    %v913 = vunpack.c.l.b16 %v761
    %v914 = vunpack.c.l.b16 %v762
    %v915 = vunpack.c.l.b16 %v763
    %v916 = vunpack.c.l.b16 %v764
    %v917 = vpack.c.b16 %v914, %v913
    %v918 = vpack.c.b16 %v916, %v915
    %921 = vmatpush.bf16.msra.mxu0 0
    %922 = vmatpush.bf16.msra.mxu0 0
    %923 = vmatpush.bf16.msra.mxu0 0
    %924 = vmatpush.bf16.msra.mxu0 0
    %925 = vmatpush.bf16.msra.mxu0 0
    %926 = vmatpush.bf16.msra.mxu0 0
    %927 = vmatpush.bf16.msra.mxu0 %v918
    %928 = vmatpush.bf16.msra.mxu0 %v917
    %929 = vmatmul.bf16.gmra.mxu0 %v288
    %v930 = vpop.f32.mrf.mxu0
    %v931 = vadd.f32 %v797, %v930
    %v932 = vpop.f32.mrf.mxu0
    %933 = vdwg.mxu0
    %v938 = vunpack.c.l.b16 %v765
    %v939 = vunpack.c.l.b16 %v766
    %v940 = vunpack.c.l.b16 %v767
    %v941 = vunpack.c.l.b16 %v768
    %v942 = vpack.c.b16 %v939, %v938
    %v943 = vpack.c.b16 %v941, %v940
    %946 = vmatpush.bf16.msra.mxu0 0
    %947 = vmatpush.bf16.msra.mxu0 0
    %948 = vmatpush.bf16.msra.mxu0 0
    %949 = vmatpush.bf16.msra.mxu0 0
    %950 = vmatpush.bf16.msra.mxu0 0
    %951 = vmatpush.bf16.msra.mxu0 0
    %952 = vmatpush.bf16.msra.mxu0 %v943
    %953 = vmatpush.bf16.msra.mxu0 %v942
    %954 = vmatmul.bf16.gmra.mxu0 %v316
    %v955 = vpop.f32.mrf.mxu0
    %v956 = vadd.f32 %v798, %v955
    %v957 = vpop.f32.mrf.mxu0
    %958 = vdwg.mxu0
    %v963 = vunpack.c.l.b16 %v769
    %v964 = vunpack.c.l.b16 %v770
    %v965 = vunpack.c.l.b16 %v771
    %v966 = vunpack.c.l.b16 %v772
    %v967 = vpack.c.b16 %v964, %v963
    %v968 = vpack.c.b16 %v966, %v965
    %971 = vmatpush.bf16.msra.mxu0 0
    %972 = vmatpush.bf16.msra.mxu0 0
    %973 = vmatpush.bf16.msra.mxu0 0
    %974 = vmatpush.bf16.msra.mxu0 0
    %975 = vmatpush.bf16.msra.mxu0 0
    %976 = vmatpush.bf16.msra.mxu0 0
    %977 = vmatpush.bf16.msra.mxu0 %v968
    %978 = vmatpush.bf16.msra.mxu0 %v967
    %979 = vmatmul.bf16.gmra.mxu0 %v288
    %v980 = vpop.f32.mrf.mxu0
    %v981 = vadd.f32 %v799, %v980
    %v982 = vpop.f32.mrf.mxu0
    %983 = vdwg.mxu0
    %v988 = vunpack.c.l.b16 %v773
    %v989 = vunpack.c.l.b16 %v774
    %v990 = vunpack.c.l.b16 %v775
    %v991 = vunpack.c.l.b16 %v776
    %v992 = vpack.c.b16 %v989, %v988
    %v993 = vpack.c.b16 %v991, %v990
    %996 = vmatpush.bf16.msra.mxu0 0
    %997 = vmatpush.bf16.msra.mxu0 0
    %998 = vmatpush.bf16.msra.mxu0 0
    %999 = vmatpush.bf16.msra.mxu0 0
    %1000 = vmatpush.bf16.msra.mxu0 0
    %1001 = vmatpush.bf16.msra.mxu0 0
    %1002 = vmatpush.bf16.msra.mxu0 %v993
    %1003 = vmatpush.bf16.msra.mxu0 %v992
    %1004 = vmatmul.bf16.gmra.mxu0 %v316
    %v1005 = vpop.f32.mrf.mxu0
    %v1006 = vadd.f32 %v800, %v1005
    %v1007 = vpop.f32.mrf.mxu0
    %1008 = vdwg.mxu0
    %v1009 = vpack.c.bf16 %v300, %v300
    %v1010 = vpack.c.bf16 %v328, %v328
    %v1011 = vpack.c.bf16 %v353, %v353
    %v1012 = vpack.c.bf16 %v378, %v378
    %v1013 = vpack.c.bf16 %v403, %v403
    %v1014 = vpack.c.bf16 %v428, %v428
    %v1015 = vpack.c.bf16 %v453, %v453
    %v1016 = vpack.c.bf16 %v478, %v478
    %v1017 = vpack.c.bf16 %v567, %v567
    %v1018 = vpack.c.bf16 %v592, %v592
    %v1019 = vpack.c.bf16 %v617, %v617
    %v1020 = vpack.c.bf16 %v642, %v642
    %v1021 = vpack.c.bf16 %v667, %v667
    %v1022 = vpack.c.bf16 %v692, %v692
    %v1023 = vpack.c.bf16 %v717, %v717
    %v1024 = vpack.c.bf16 %v742, %v742
    %v1027 = vperm.slane %v207, 0
    %v1028 = vperm.slane %v208, 0
    %vm1031 = vcmask 64512
    %v1033 = vsel %vm1031, %v1009, 0
    %v1036 = vsel %vm1031, %v1017, 0
    %1038 = vmatpush.bf16.xpose.msra.mxu0 0
    %1039 = vmatpush.bf16.xpose.msra.mxu0 0
    %1040 = vmatpush.bf16.xpose.msra.mxu0 0
    %1041 = vmatpush.bf16.xpose.msra.mxu0 0
    %1042 = vmatpush.bf16.xpose.msra.mxu0 0
    %1043 = vmatpush.bf16.xpose.msra.mxu0 0
    %1044 = vmatpush.bf16.xpose.msra.mxu0 0
    %1045 = vmatpush.bf16.xpose.msra.mxu0 %v1036
    %1046 = vmatmul.bf16.gmra.mxu0 %v1033
    %v1047 = vpop.f32.mrf.mxu0
    %v1048 = vadd.f32 %v1027, %v1047
    %v1049 = vpop.f32.mrf.mxu0
    %1050 = vdwg.mxu0
    %v1052 = vsel %vm1031, %v1010, 0
    %v1055 = vsel %vm1031, %v1018, 0
    %1057 = vmatpush.bf16.xpose.msra.mxu0 0
    %1058 = vmatpush.bf16.xpose.msra.mxu0 0
    %1059 = vmatpush.bf16.xpose.msra.mxu0 0
    %1060 = vmatpush.bf16.xpose.msra.mxu0 0
    %1061 = vmatpush.bf16.xpose.msra.mxu0 0
    %1062 = vmatpush.bf16.xpose.msra.mxu0 0
    %1063 = vmatpush.bf16.xpose.msra.mxu0 0
    %1064 = vmatpush.bf16.xpose.msra.mxu0 %v1055
    %1065 = vmatmul.bf16.gmra.mxu0 %v1052
    %v1066 = vpop.f32.mrf.mxu0
    %v1067 = vadd.f32 %v1028, %v1066
    %v1068 = vpop.f32.mrf.mxu0
    %1069 = vdwg.mxu0
    %v1071 = vsel %vm1031, %v1011, 0
    %v1074 = vsel %vm1031, %v1019, 0
    %1076 = vmatpush.bf16.xpose.msra.mxu0 0
    %1077 = vmatpush.bf16.xpose.msra.mxu0 0
    %1078 = vmatpush.bf16.xpose.msra.mxu0 0
    %1079 = vmatpush.bf16.xpose.msra.mxu0 0
    %1080 = vmatpush.bf16.xpose.msra.mxu0 0
    %1081 = vmatpush.bf16.xpose.msra.mxu0 0
    %1082 = vmatpush.bf16.xpose.msra.mxu0 0
    %1083 = vmatpush.bf16.xpose.msra.mxu0 %v1074
    %1084 = vmatmul.bf16.gmra.mxu0 %v1071
    %v1085 = vpop.f32.mrf.mxu0
    %v1086 = vadd.f32 %v1027, %v1085
    %v1087 = vpop.f32.mrf.mxu0
    %1088 = vdwg.mxu0
    %v1090 = vsel %vm1031, %v1012, 0
    %v1093 = vsel %vm1031, %v1020, 0
    %1095 = vmatpush.bf16.xpose.msra.mxu0 0
    %1096 = vmatpush.bf16.xpose.msra.mxu0 0
    %1097 = vmatpush.bf16.xpose.msra.mxu0 0
    %1098 = vmatpush.bf16.xpose.msra.mxu0 0
    %1099 = vmatpush.bf16.xpose.msra.mxu0 0
    %1100 = vmatpush.bf16.xpose.msra.mxu0 0
    %1101 = vmatpush.bf16.xpose.msra.mxu0 0
    %1102 = vmatpush.bf16.xpose.msra.mxu0 %v1093
    %1103 = vmatmul.bf16.gmra.mxu0 %v1090
    %v1104 = vpop.f32.mrf.mxu0
    %v1105 = vadd.f32 %v1028, %v1104
    %v1106 = vpop.f32.mrf.mxu0
    %1107 = vdwg.mxu0
    %v1109 = vsel %vm1031, %v1013, 0
    %v1112 = vsel %vm1031, %v1021, 0
    %1114 = vmatpush.bf16.xpose.msra.mxu0 0
    %1115 = vmatpush.bf16.xpose.msra.mxu0 0
    %1116 = vmatpush.bf16.xpose.msra.mxu0 0
    %1117 = vmatpush.bf16.xpose.msra.mxu0 0
    %1118 = vmatpush.bf16.xpose.msra.mxu0 0
    %1119 = vmatpush.bf16.xpose.msra.mxu0 0
    %1120 = vmatpush.bf16.xpose.msra.mxu0 0
    %1121 = vmatpush.bf16.xpose.msra.mxu0 %v1112
    %1122 = vmatmul.bf16.gmra.mxu0 %v1109
    %v1123 = vpop.f32.mrf.mxu0
    %v1124 = vadd.f32 %v1027, %v1123
    %v1125 = vpop.f32.mrf.mxu0
    %1126 = vdwg.mxu0
    %v1128 = vsel %vm1031, %v1014, 0
    %v1131 = vsel %vm1031, %v1022, 0
    %1133 = vmatpush.bf16.xpose.msra.mxu0 0
    %1134 = vmatpush.bf16.xpose.msra.mxu0 0
    %1135 = vmatpush.bf16.xpose.msra.mxu0 0
    %1136 = vmatpush.bf16.xpose.msra.mxu0 0
    %1137 = vmatpush.bf16.xpose.msra.mxu0 0
    %1138 = vmatpush.bf16.xpose.msra.mxu0 0
    %1139 = vmatpush.bf16.xpose.msra.mxu0 0
    %1140 = vmatpush.bf16.xpose.msra.mxu0 %v1131
    %1141 = vmatmul.bf16.gmra.mxu0 %v1128
    %v1142 = vpop.f32.mrf.mxu0
    %v1143 = vadd.f32 %v1028, %v1142
    %v1144 = vpop.f32.mrf.mxu0
    %1145 = vdwg.mxu0
    %v1147 = vsel %vm1031, %v1015, 0
    %v1150 = vsel %vm1031, %v1023, 0
    %1152 = vmatpush.bf16.xpose.msra.mxu0 0
    %1153 = vmatpush.bf16.xpose.msra.mxu0 0
    %1154 = vmatpush.bf16.xpose.msra.mxu0 0
    %1155 = vmatpush.bf16.xpose.msra.mxu0 0
    %1156 = vmatpush.bf16.xpose.msra.mxu0 0
    %1157 = vmatpush.bf16.xpose.msra.mxu0 0
    %1158 = vmatpush.bf16.xpose.msra.mxu0 0
    %1159 = vmatpush.bf16.xpose.msra.mxu0 %v1150
    %1160 = vmatmul.bf16.gmra.mxu0 %v1147
    %v1161 = vpop.f32.mrf.mxu0
    %v1162 = vadd.f32 %v1027, %v1161
    %v1163 = vpop.f32.mrf.mxu0
    %1164 = vdwg.mxu0
    %v1166 = vsel %vm1031, %v1016, 0
    %v1169 = vsel %vm1031, %v1024, 0
    %1171 = vmatpush.bf16.xpose.msra.mxu0 0
    %1172 = vmatpush.bf16.xpose.msra.mxu0 0
    %1173 = vmatpush.bf16.xpose.msra.mxu0 0
    %1174 = vmatpush.bf16.xpose.msra.mxu0 0
    %1175 = vmatpush.bf16.xpose.msra.mxu0 0
    %1176 = vmatpush.bf16.xpose.msra.mxu0 0
    %1177 = vmatpush.bf16.xpose.msra.mxu0 0
    %1178 = vmatpush.bf16.xpose.msra.mxu0 %v1169
    %1179 = vmatmul.bf16.gmra.mxu0 %v1166
    %v1180 = vpop.f32.mrf.mxu0
    %v1181 = vadd.f32 %v1028, %v1180
    %v1182 = vpop.f32.mrf.mxu0
    %1183 = vdwg.mxu0
    %v1184 = vmul.f32 %v1048, 1.442695
    %v1185 = vpow.pop %v1184
    %v1186 = vmul.f32 %v1067, 1.442695
    %v1187 = vpow.pop %v1186
    %v1188 = vmul.f32 %v1086, 1.442695
    %v1189 = vpow.pop %v1188
    %v1190 = vmul.f32 %v1105, 1.442695
    %v1191 = vpow.pop %v1190
    %v1192 = vmul.f32 %v1124, 1.442695
    %v1193 = vpow.pop %v1192
    %v1194 = vmul.f32 %v1143, 1.442695
    %v1195 = vpow.pop %v1194
    %v1196 = vmul.f32 %v1162, 1.442695
    %v1197 = vpow.pop %v1196
    %v1198 = vmul.f32 %v1181, 1.442695
    %v1199 = vpow.pop %v1198
    %v1200 = vsel %vm1031, %v1185, 0.0
    %1201 = vadd.xlane.f32.xlu0 %v1200
    %v1202 = vpop.xlane.xlu0 %1201
    %v1203 = vsel %vm1031, %v1187, 0.0
    %1204 = vadd.xlane.f32.xlu0 %v1203
    %v1205 = vpop.xlane.xlu0 %1204
    %v1206 = vsel %vm1031, %v1189, 0.0
    %1207 = vadd.xlane.f32.xlu0 %v1206
    %v1208 = vpop.xlane.xlu0 %1207
    %v1209 = vsel %vm1031, %v1191, 0.0
    %1210 = vadd.xlane.f32.xlu0 %v1209
    %v1211 = vpop.xlane.xlu0 %1210
    %v1212 = vsel %vm1031, %v1193, 0.0
    %1213 = vadd.xlane.f32.xlu0 %v1212
    %v1214 = vpop.xlane.xlu0 %1213
    %v1215 = vsel %vm1031, %v1195, 0.0
    %1216 = vadd.xlane.f32.xlu0 %v1215
    %v1217 = vpop.xlane.xlu0 %1216
    %v1218 = vsel %vm1031, %v1197, 0.0
    %1219 = vadd.xlane.f32.xlu0 %v1218
    %v1220 = vpop.xlane.xlu0 %1219
    %v1221 = vsel %vm1031, %v1199, 0.0
    %1222 = vadd.xlane.f32.xlu0 %v1221
    %v1223 = vpop.xlane.xlu0 %1222
    %v1224 = vrcp.pop %v1202
    %v1225 = vrcp.pop %v1205
    %v1226 = vrcp.pop %v1208
    %v1227 = vrcp.pop %v1211
    %v1228 = vrcp.pop %v1214
    %v1229 = vrcp.pop %v1217
    %v1230 = vrcp.pop %v1220
    %v1231 = vrcp.pop %v1223
    %v1232 = vmul.f32 %v1185, %v1224
    %v1233 = vmul.f32 %v1187, %v1225
    %v1234 = vmul.f32 %v1189, %v1226
    %v1235 = vmul.f32 %v1191, %v1227
    %v1236 = vmul.f32 %v1193, %v1228
    %v1237 = vmul.f32 %v1195, %v1229
    %v1238 = vmul.f32 %v1197, %v1230
    %v1239 = vmul.f32 %v1199, %v1231
    %v1240 = vpack.c.bf16 %v1232, %v1232
    %v1241 = vpack.c.bf16 %v1233, %v1233
    %v1242 = vpack.c.bf16 %v1234, %v1234
    %v1243 = vpack.c.bf16 %v1235, %v1235
    %v1244 = vpack.c.bf16 %v1236, %v1236
    %v1245 = vpack.c.bf16 %v1237, %v1237
    %v1246 = vpack.c.bf16 %v1238, %v1238
    %v1247 = vpack.c.bf16 %v1239, %v1239
    %v1248 = vpack.c.bf16 %v831, %v831
    %v1249 = vpack.c.bf16 %v856, %v856
    %v1250 = vpack.c.bf16 %v881, %v881
    %v1251 = vpack.c.bf16 %v906, %v906
    %v1252 = vpack.c.bf16 %v931, %v931
    %v1253 = vpack.c.bf16 %v956, %v956
    %v1254 = vpack.c.bf16 %v981, %v981
    %v1255 = vpack.c.bf16 %v1006, %v1006
    %v1257 = vsel %vm1031, %v1240, 0
    %vm1259 = vcmask 1043456
    %v1261 = vsel %vm1259, %v1248, 0
    %1263 = vmatpush.bf16.msra.mxu0 0
    %1264 = vmatpush.bf16.msra.mxu0 0
    %1265 = vmatpush.bf16.msra.mxu0 0
    %1266 = vmatpush.bf16.msra.mxu0 0
    %1267 = vmatpush.bf16.msra.mxu0 0
    %1268 = vmatpush.bf16.msra.mxu0 0
    %1269 = vmatpush.bf16.msra.mxu0 0
    %1270 = vmatpush.bf16.msra.mxu0 %v1261
    %1271 = vmatmul.bf16.gmra.mxu0 %v1257
    %v1272 = vpop.f32.mrf.mxu0
    %v1273 = vadd.f32 0.0, %v1272
    %v1274 = vpop.f32.mrf.mxu0
    %1275 = vdwg.mxu0
    %v1277 = vsel %vm1031, %v1241, 0
    %v1280 = vsel %vm1259, %v1249, 0
    %1282 = vmatpush.bf16.msra.mxu0 0
    %1283 = vmatpush.bf16.msra.mxu0 0
    %1284 = vmatpush.bf16.msra.mxu0 0
    %1285 = vmatpush.bf16.msra.mxu0 0
    %1286 = vmatpush.bf16.msra.mxu0 0
    %1287 = vmatpush.bf16.msra.mxu0 0
    %1288 = vmatpush.bf16.msra.mxu0 0
    %1289 = vmatpush.bf16.msra.mxu0 %v1280
    %1290 = vmatmul.bf16.gmra.mxu0 %v1277
    %v1291 = vpop.f32.mrf.mxu0
    %v1292 = vadd.f32 0.0, %v1291
    %v1293 = vpop.f32.mrf.mxu0
    %1294 = vdwg.mxu0
    %v1296 = vsel %vm1031, %v1242, 0
    %v1299 = vsel %vm1259, %v1250, 0
    %1301 = vmatpush.bf16.msra.mxu0 0
    %1302 = vmatpush.bf16.msra.mxu0 0
    %1303 = vmatpush.bf16.msra.mxu0 0
    %1304 = vmatpush.bf16.msra.mxu0 0
    %1305 = vmatpush.bf16.msra.mxu0 0
    %1306 = vmatpush.bf16.msra.mxu0 0
    %1307 = vmatpush.bf16.msra.mxu0 0
    %1308 = vmatpush.bf16.msra.mxu0 %v1299
    %1309 = vmatmul.bf16.gmra.mxu0 %v1296
    %v1310 = vpop.f32.mrf.mxu0
    %v1311 = vadd.f32 0.0, %v1310
    %v1312 = vpop.f32.mrf.mxu0
    %1313 = vdwg.mxu0
    %v1315 = vsel %vm1031, %v1243, 0
    %v1318 = vsel %vm1259, %v1251, 0
    %1320 = vmatpush.bf16.msra.mxu0 0
    %1321 = vmatpush.bf16.msra.mxu0 0
    %1322 = vmatpush.bf16.msra.mxu0 0
    %1323 = vmatpush.bf16.msra.mxu0 0
    %1324 = vmatpush.bf16.msra.mxu0 0
    %1325 = vmatpush.bf16.msra.mxu0 0
    %1326 = vmatpush.bf16.msra.mxu0 0
    %1327 = vmatpush.bf16.msra.mxu0 %v1318
    %1328 = vmatmul.bf16.gmra.mxu0 %v1315
    %v1329 = vpop.f32.mrf.mxu0
    %v1330 = vadd.f32 0.0, %v1329
    %v1331 = vpop.f32.mrf.mxu0
    %1332 = vdwg.mxu0
    %v1334 = vsel %vm1031, %v1244, 0
    %v1337 = vsel %vm1259, %v1252, 0
    %1339 = vmatpush.bf16.msra.mxu0 0
    %1340 = vmatpush.bf16.msra.mxu0 0
    %1341 = vmatpush.bf16.msra.mxu0 0
    %1342 = vmatpush.bf16.msra.mxu0 0
    %1343 = vmatpush.bf16.msra.mxu0 0
    %1344 = vmatpush.bf16.msra.mxu0 0
    %1345 = vmatpush.bf16.msra.mxu0 0
    %1346 = vmatpush.bf16.msra.mxu0 %v1337
    %1347 = vmatmul.bf16.gmra.mxu0 %v1334
    %v1348 = vpop.f32.mrf.mxu0
    %v1349 = vadd.f32 0.0, %v1348
    %v1350 = vpop.f32.mrf.mxu0
    %1351 = vdwg.mxu0
    %v1353 = vsel %vm1031, %v1245, 0
    %v1356 = vsel %vm1259, %v1253, 0
    %1358 = vmatpush.bf16.msra.mxu0 0
    %1359 = vmatpush.bf16.msra.mxu0 0
    %1360 = vmatpush.bf16.msra.mxu0 0
    %1361 = vmatpush.bf16.msra.mxu0 0
    %1362 = vmatpush.bf16.msra.mxu0 0
    %1363 = vmatpush.bf16.msra.mxu0 0
    %1364 = vmatpush.bf16.msra.mxu0 0
    %1365 = vmatpush.bf16.msra.mxu0 %v1356
    %1366 = vmatmul.bf16.gmra.mxu0 %v1353
    %v1367 = vpop.f32.mrf.mxu0
    %v1368 = vadd.f32 0.0, %v1367
    %v1369 = vpop.f32.mrf.mxu0
    %1370 = vdwg.mxu0
    %v1372 = vsel %vm1031, %v1246, 0
    %v1375 = vsel %vm1259, %v1254, 0
    %1377 = vmatpush.bf16.msra.mxu0 0
    %1378 = vmatpush.bf16.msra.mxu0 0
    %1379 = vmatpush.bf16.msra.mxu0 0
    %1380 = vmatpush.bf16.msra.mxu0 0
    %1381 = vmatpush.bf16.msra.mxu0 0
    %1382 = vmatpush.bf16.msra.mxu0 0
    %1383 = vmatpush.bf16.msra.mxu0 0
    %1384 = vmatpush.bf16.msra.mxu0 %v1375
    %1385 = vmatmul.bf16.gmra.mxu0 %v1372
    %v1386 = vpop.f32.mrf.mxu0
    %v1387 = vadd.f32 0.0, %v1386
    %v1388 = vpop.f32.mrf.mxu0
    %1389 = vdwg.mxu0
    %v1391 = vsel %vm1031, %v1247, 0
    %v1394 = vsel %vm1259, %v1255, 0
    %1396 = vmatpush.bf16.msra.mxu0 0
    %1397 = vmatpush.bf16.msra.mxu0 0
    %1398 = vmatpush.bf16.msra.mxu0 0
    %1399 = vmatpush.bf16.msra.mxu0 0
    %1400 = vmatpush.bf16.msra.mxu0 0
    %1401 = vmatpush.bf16.msra.mxu0 0
    %1402 = vmatpush.bf16.msra.mxu0 0
    %1403 = vmatpush.bf16.msra.mxu0 %v1394
    %1404 = vmatmul.bf16.gmra.mxu0 %v1391
    %v1405 = vpop.f32.mrf.mxu0
    %v1406 = vadd.f32 0.0, %v1405
    %v1407 = vpop.f32.mrf.mxu0
    %1408 = vdwg.mxu0
    %v1409 = vpack.c.bf16 %v1273, %v1273
    %v1410 = vpack.c.bf16 %v1292, %v1292
    %v1411 = vpack.c.bf16 %v1311, %v1311
    %v1412 = vpack.c.bf16 %v1330, %v1330
    %v1413 = vpack.c.bf16 %v1349, %v1349
    %v1414 = vpack.c.bf16 %v1368, %v1368
    %v1415 = vpack.c.bf16 %v1387, %v1387
    %v1416 = vpack.c.bf16 %v1406, %v1406
    %v1417 = vld [vmem:[%s12] sm:$0xf]
    %v1418 = vld [vmem:[%s12 + $0x4] sm:$0xf]
    %v1419 = vld [vmem:[%s12 + $0x8] sm:$0xf]
    %v1420 = vld [vmem:[%s12 + $0xc] sm:$0xf]
    %v1421 = vld [vmem:[%s12 + $0x10] sm:$0xf]
    %v1422 = vld [vmem:[%s12 + $0x14] sm:$0xf]
    %v1423 = vld [vmem:[%s12 + $0x18] sm:$0xf]
    %v1424 = vld [vmem:[%s12 + $0x1c] sm:$0xf]
    %v1426 = vsel %vm1031, %v1409, 0
    %v1429 = vsel %vm1259, %v1417, 0
    %1431 = vmatpush.bf16.msra.mxu0 0
    %1432 = vmatpush.bf16.msra.mxu0 0
    %1433 = vmatpush.bf16.msra.mxu0 0
    %1434 = vmatpush.bf16.msra.mxu0 0
    %1435 = vmatpush.bf16.msra.mxu0 0
    %1436 = vmatpush.bf16.msra.mxu0 0
    %1437 = vmatpush.bf16.msra.mxu0 0
    %1438 = vmatpush.bf16.msra.mxu0 %v1429
    %1439 = vmatmul.bf16.gmra.mxu0 %v1426
    %v1440 = vpop.f32.mrf.mxu0
    %v1441 = vadd.f32 0.0, %v1440
    %v1442 = vpop.f32.mrf.mxu0
    %1443 = vdwg.mxu0
    %v1445 = vsel %vm1031, %v1410, 0
    %v1448 = vsel %vm1259, %v1418, 0
    %1450 = vmatpush.bf16.msra.mxu0 0
    %1451 = vmatpush.bf16.msra.mxu0 0
    %1452 = vmatpush.bf16.msra.mxu0 0
    %1453 = vmatpush.bf16.msra.mxu0 0
    %1454 = vmatpush.bf16.msra.mxu0 0
    %1455 = vmatpush.bf16.msra.mxu0 0
    %1456 = vmatpush.bf16.msra.mxu0 0
    %1457 = vmatpush.bf16.msra.mxu0 %v1448
    %1458 = vmatmul.bf16.gmra.mxu0 %v1445
    %v1459 = vpop.f32.mrf.mxu0
    %v1460 = vadd.f32 0.0, %v1459
    %v1461 = vpop.f32.mrf.mxu0
    %1462 = vdwg.mxu0
    %v1464 = vsel %vm1031, %v1411, 0
    %v1467 = vsel %vm1259, %v1419, 0
    %1469 = vmatpush.bf16.msra.mxu0 0
    %1470 = vmatpush.bf16.msra.mxu0 0
    %1471 = vmatpush.bf16.msra.mxu0 0
    %1472 = vmatpush.bf16.msra.mxu0 0
    %1473 = vmatpush.bf16.msra.mxu0 0
    %1474 = vmatpush.bf16.msra.mxu0 0
    %1475 = vmatpush.bf16.msra.mxu0 0
    %1476 = vmatpush.bf16.msra.mxu0 %v1467
    %1477 = vmatmul.bf16.gmra.mxu0 %v1464
    %v1478 = vpop.f32.mrf.mxu0
    %v1479 = vadd.f32 0.0, %v1478
    %v1480 = vpop.f32.mrf.mxu0
    %1481 = vdwg.mxu0
    %v1483 = vsel %vm1031, %v1412, 0
    %v1486 = vsel %vm1259, %v1420, 0
    %1488 = vmatpush.bf16.msra.mxu0 0
    %1489 = vmatpush.bf16.msra.mxu0 0
    %1490 = vmatpush.bf16.msra.mxu0 0
    %1491 = vmatpush.bf16.msra.mxu0 0
    %1492 = vmatpush.bf16.msra.mxu0 0
    %1493 = vmatpush.bf16.msra.mxu0 0
    %1494 = vmatpush.bf16.msra.mxu0 0
    %1495 = vmatpush.bf16.msra.mxu0 %v1486
    %1496 = vmatmul.bf16.gmra.mxu0 %v1483
    %v1497 = vpop.f32.mrf.mxu0
    %v1498 = vadd.f32 0.0, %v1497
    %v1499 = vpop.f32.mrf.mxu0
    %1500 = vdwg.mxu0
    %v1502 = vsel %vm1031, %v1413, 0
    %v1505 = vsel %vm1259, %v1421, 0
    %1507 = vmatpush.bf16.msra.mxu0 0
    %1508 = vmatpush.bf16.msra.mxu0 0
    %1509 = vmatpush.bf16.msra.mxu0 0
    %1510 = vmatpush.bf16.msra.mxu0 0
    %1511 = vmatpush.bf16.msra.mxu0 0
    %1512 = vmatpush.bf16.msra.mxu0 0
    %1513 = vmatpush.bf16.msra.mxu0 0
    %1514 = vmatpush.bf16.msra.mxu0 %v1505
    %1515 = vmatmul.bf16.gmra.mxu0 %v1502
    %v1516 = vpop.f32.mrf.mxu0
    %v1517 = vadd.f32 0.0, %v1516
    %v1518 = vpop.f32.mrf.mxu0
    %1519 = vdwg.mxu0
    %v1521 = vsel %vm1031, %v1414, 0
    %v1524 = vsel %vm1259, %v1422, 0
    %1526 = vmatpush.bf16.msra.mxu0 0
    %1527 = vmatpush.bf16.msra.mxu0 0
    %1528 = vmatpush.bf16.msra.mxu0 0
    %1529 = vmatpush.bf16.msra.mxu0 0
    %1530 = vmatpush.bf16.msra.mxu0 0
    %1531 = vmatpush.bf16.msra.mxu0 0
    %1532 = vmatpush.bf16.msra.mxu0 0
    %1533 = vmatpush.bf16.msra.mxu0 %v1524
    %1534 = vmatmul.bf16.gmra.mxu0 %v1521
    %v1535 = vpop.f32.mrf.mxu0
    %v1536 = vadd.f32 0.0, %v1535
    %v1537 = vpop.f32.mrf.mxu0
    %1538 = vdwg.mxu0
    %v1540 = vsel %vm1031, %v1415, 0
    %v1543 = vsel %vm1259, %v1423, 0
    %1545 = vmatpush.bf16.msra.mxu0 0
    %1546 = vmatpush.bf16.msra.mxu0 0
    %1547 = vmatpush.bf16.msra.mxu0 0
    %1548 = vmatpush.bf16.msra.mxu0 0
    %1549 = vmatpush.bf16.msra.mxu0 0
    %1550 = vmatpush.bf16.msra.mxu0 0
    %1551 = vmatpush.bf16.msra.mxu0 0
    %1552 = vmatpush.bf16.msra.mxu0 %v1543
    %1553 = vmatmul.bf16.gmra.mxu0 %v1540
    %v1554 = vpop.f32.mrf.mxu0
    %v1555 = vadd.f32 0.0, %v1554
    %v1556 = vpop.f32.mrf.mxu0
    %1557 = vdwg.mxu0
    %v1559 = vsel %vm1031, %v1416, 0
    %v1562 = vsel %vm1259, %v1424, 0
    %1564 = vmatpush.bf16.msra.mxu0 0
    %1565 = vmatpush.bf16.msra.mxu0 0
    %1566 = vmatpush.bf16.msra.mxu0 0
    %1567 = vmatpush.bf16.msra.mxu0 0
    %1568 = vmatpush.bf16.msra.mxu0 0
    %1569 = vmatpush.bf16.msra.mxu0 0
    %1570 = vmatpush.bf16.msra.mxu0 0
    %1571 = vmatpush.bf16.msra.mxu0 %v1562
    %1572 = vmatmul.bf16.gmra.mxu0 %v1559
    %v1573 = vpop.f32.mrf.mxu0
    %v1574 = vadd.f32 0.0, %v1573
    %v1575 = vpop.f32.mrf.mxu0
    %1576 = vdwg.mxu0
    %v1577 = vadd.f32 %v1441, %v1479
    %v1578 = vadd.f32 %v1460, %v1498
    %v1579 = vadd.f32 %v1577, %v1517
    %v1580 = vadd.f32 %v1578, %v1536
    %v1581 = vadd.f32 %v1579, %v1555
    %v1582 = vadd.f32 %v1580, %v1574
    %v1583 = vld [vmem:[%s13] sm:$0x1]
    %v1585 = vperm.slane %v1583, 0
    %v1587 = vadd.f32 %v1581, %v1585
    %v1588 = vadd.f32 %v1582, %v1585
    %v1589 = vadd.f32 %v201, %v1587
    %v1590 = vadd.f32 %v202, %v1588
    %v1591 = vld [vmem:[%s14] sm:$0x1]
    %v1592 = vld [vmem:[%s15] sm:$0x1]
    %v1593 = vsel %vm141, %v1589, 0.0
    %1594 = vadd.xlane.f32.xlu0 %v1593
    %v1595 = vpop.xlane.xlu0 %1594
    %v1596 = vsel %vm141, %v1590, 0.0
    %1597 = vadd.xlane.f32.xlu0 %v1596
    %v1598 = vpop.xlane.xlu0 %1597
    %v1599 = vmul.f32 %v1595, %v154
    %v1600 = vmul.f32 %v1598, %v154
    %v1601 = vsub.f32 %v1589, %v1599
    %v1602 = vsub.f32 %v1590, %v1600
    %v1603 = vmul.f32 %v1601, %v1601
    %v1604 = vmul.f32 %v1602, %v1602
    %v1605 = vsel %vm141, %v1603, 0.0
    %1606 = vadd.xlane.f32.xlu0 %v1605
    %v1607 = vpop.xlane.xlu0 %1606
    %v1608 = vsel %vm141, %v1604, 0.0
    %1609 = vadd.xlane.f32.xlu0 %v1608
    %v1610 = vpop.xlane.xlu0 %1609
    %v1611 = vmul.f32 %v1607, %v154
    %v1612 = vmul.f32 %v1610, %v154
    %v1613 = vadd.f32 %v1611, 1e-12
    %v1614 = vadd.f32 %v1612, 1e-12
    %v1615 = vrsqrt.pop %v1613
    %v1616 = vmul.f32 %v1615, %v1613
    %v1617 = vmul.f32 %v1616, %v1615
    %v1618 = vmul.f32 0.5, %v1617
    %v1619 = vsub.f32 1.5, %v1618
    %v1620 = vmul.f32 %v1615, %v1619
    %vm1621 = vweird.f32 %v1613
    %vm1622 = vweird.f32 %v1615
    %vm1623 = vmor %vm1621, %vm1622
    %v1624 = vsel %vm1623, %v1615, %v1620
    %v1625 = vrsqrt.pop %v1614
    %v1626 = vmul.f32 %v1625, %v1614
    %v1627 = vmul.f32 %v1626, %v1625
    %v1628 = vmul.f32 0.5, %v1627
    %v1629 = vsub.f32 1.5, %v1628
    %v1630 = vmul.f32 %v1625, %v1629
    %vm1631 = vweird.f32 %v1614
    %vm1632 = vweird.f32 %v1625
    %vm1633 = vmor %vm1631, %vm1632
    %v1634 = vsel %vm1633, %v1625, %v1630
    %v1635 = vmul.f32 %v1601, %v1624
    %v1636 = vmul.f32 %v1602, %v1634
    %v1638 = vperm.slane %v1591, 0
    %v1640 = vmul.f32 %v1635, %v1638
    %v1641 = vmul.f32 %v1636, %v1638
    %v1643 = vperm.slane %v1592, 0
    %v1645 = vadd.f32 %v1640, %v1643
    %v1646 = vadd.f32 %v1641, %v1643
    %v1647 = vpack.c.bf16 %v1646, %v1645
    %v1648 = vld [vmem:[%s16] sm:$0xf]
    %v1649 = vld [vmem:[%s16 + $0x4] sm:$0xf]
    %v1650 = vld [vmem:[%s16 + $0x8] sm:$0xf]
    %v1651 = vld [vmem:[%s16 + $0xc] sm:$0xf]
    %v1652 = vld [vmem:[%s17] sm:$0x1]
    %v1654 = vperm.slane %v1652, 0
    %v1660 = vunpack.c.l.b16 %v1648
    %v1661 = vunpack.c.l.b16 %v1649
    %v1662 = vunpack.c.l.b16 %v1650
    %v1663 = vunpack.c.l.b16 %v1651
    %v1664 = vpack.c.b16 %v1661, %v1660
    %v1665 = vpack.c.b16 %v1663, %v1662
    %v1669 = vsel %vm141, %v1647, 0
    %1671 = vmatpush.bf16.msra.mxu0 0
    %1672 = vmatpush.bf16.msra.mxu0 0
    %1673 = vmatpush.bf16.msra.mxu0 0
    %1674 = vmatpush.bf16.msra.mxu0 0
    %1675 = vmatpush.bf16.msra.mxu0 0
    %1676 = vmatpush.bf16.msra.mxu0 0
    %1677 = vmatpush.bf16.msra.mxu0 %v1665
    %1678 = vmatpush.bf16.msra.mxu0 %v1664
    %1679 = vmatmul.bf16.gmra.mxu0 %v1669
    %v1680 = vpop.f32.mrf.mxu0
    %v1681 = vadd.f32 %v1654, %v1680
    %v1682 = vpop.f32.mrf.mxu0
    %v1683 = vadd.f32 %v1654, %v1682
    %1684 = vdwg.mxu0
    %v1685 = vmul.f32 %v1681, %v1681
    %v1686 = vmul.f32 %v1683, %v1683
    %v1687 = vmul.f32 %v1681, %v1685
    %v1688 = vmul.f32 %v1683, %v1686
    %v1689 = vmul.f32 %v1687, 0.044715
    %v1690 = vmul.f32 %v1688, 0.044715
    %v1691 = vadd.f32 %v1681, %v1689
    %v1692 = vadd.f32 %v1683, %v1690
    %v1693 = vmul.f32 %v1691, 0.7978846
    %v1694 = vmul.f32 %v1692, 0.7978846
    %v1695 = vtanh.pop %v1693
    %v1696 = vtanh.pop %v1694
    %v1697 = vadd.f32 %v1695, 1.0
    %v1698 = vadd.f32 %v1696, 1.0
    %v1699 = vmul.f32 %v1697, 0.5
    %v1700 = vmul.f32 %v1698, 0.5
    %v1701 = vmul.f32 %v1681, %v1699
    %v1702 = vmul.f32 %v1683, %v1700
    %v1703 = vpack.c.bf16 %v1702, %v1701
    %v1704 = vld [vmem:[%s18] sm:$0xf]
    %v1705 = vld [vmem:[%s18 + $0x4] sm:$0xf]
    %v1706 = vld [vmem:[%s18 + $0x8] sm:$0xf]
    %v1707 = vld [vmem:[%s18 + $0xc] sm:$0xf]
    %v1708 = vld [vmem:[%s18 + $0x10] sm:$0xf]
    %v1709 = vld [vmem:[%s18 + $0x14] sm:$0xf]
    %v1710 = vld [vmem:[%s18 + $0x18] sm:$0xf]
    %v1711 = vld [vmem:[%s18 + $0x1c] sm:$0xf]
    %v1712 = vld [vmem:[%s19] sm:$0x1]
    %v1714 = vperm.slane %v1712, 0
    %v1724 = vunpack.c.l.b16 %v1704
    %v1725 = vunpack.c.l.b16 %v1705
    %v1726 = vunpack.c.l.b16 %v1706
    %v1727 = vunpack.c.l.b16 %v1707
    %v1728 = vunpack.c.l.b16 %v1708
    %v1729 = vunpack.c.l.b16 %v1709
    %v1730 = vunpack.c.l.b16 %v1710
    %v1731 = vunpack.c.l.b16 %v1711
    %v1732 = vpack.c.b16 %v1725, %v1724
    %v1733 = vpack.c.b16 %v1727, %v1726
    %v1734 = vpack.c.b16 %v1729, %v1728
    %v1735 = vpack.c.b16 %v1731, %v1730
    %vm1740 = vcmask 523264
    %v1742 = vsel %vm1740, %v1703, 0
    %1744 = vmatpush.bf16.msra.mxu0 0
    %1745 = vmatpush.bf16.msra.mxu0 0
    %1746 = vmatpush.bf16.msra.mxu0 0
    %1747 = vmatpush.bf16.msra.mxu0 0
    %1748 = vmatpush.bf16.msra.mxu0 %v1735
    %1749 = vmatpush.bf16.msra.mxu0 %v1734
    %1750 = vmatpush.bf16.msra.mxu0 %v1733
    %1751 = vmatpush.bf16.msra.mxu0 %v1732
    %1752 = vmatmul.bf16.gmra.mxu0 %v1742
    %v1753 = vpop.f32.mrf.mxu0
    %v1754 = vadd.f32 %v1714, %v1753
    %v1755 = vpop.f32.mrf.mxu0
    %v1756 = vadd.f32 %v1714, %v1755
    %1757 = vdwg.mxu0
    %v1758 = vadd.f32 %v1645, %v1754
    %v1759 = vadd.f32 %v1646, %v1756
    %v1760 = vld [vmem:[%s20] sm:$0x1]
    %v1761 = vld [vmem:[%s21] sm:$0x1]
    %v1762 = vsel %vm141, %v1758, 0.0
    %1763 = vadd.xlane.f32.xlu0 %v1762
    %v1764 = vpop.xlane.xlu0 %1763
    %v1765 = vsel %vm141, %v1759, 0.0
    %1766 = vadd.xlane.f32.xlu0 %v1765
    %v1767 = vpop.xlane.xlu0 %1766
    %v1768 = vmul.f32 %v1764, %v154
    %v1769 = vmul.f32 %v1767, %v154
    %v1770 = vsub.f32 %v1758, %v1768
    %v1771 = vsub.f32 %v1759, %v1769
    %v1772 = vmul.f32 %v1770, %v1770
    %v1773 = vmul.f32 %v1771, %v1771
    %v1774 = vsel %vm141, %v1772, 0.0
    %1775 = vadd.xlane.f32.xlu0 %v1774
    %v1776 = vpop.xlane.xlu0 %1775
    %v1777 = vsel %vm141, %v1773, 0.0
    %1778 = vadd.xlane.f32.xlu0 %v1777
    %v1779 = vpop.xlane.xlu0 %1778
    %v1780 = vmul.f32 %v1776, %v154
    %v1781 = vmul.f32 %v1779, %v154
    %v1782 = vadd.f32 %v1780, 1e-12
    %v1783 = vadd.f32 %v1781, 1e-12
    %v1784 = vrsqrt.pop %v1782
    %v1785 = vmul.f32 %v1784, %v1782
    %v1786 = vmul.f32 %v1785, %v1784
    %v1787 = vmul.f32 0.5, %v1786
    %v1788 = vsub.f32 1.5, %v1787
    %v1789 = vmul.f32 %v1784, %v1788
    %vm1790 = vweird.f32 %v1782
    %vm1791 = vweird.f32 %v1784
    %vm1792 = vmor %vm1790, %vm1791
    %v1793 = vsel %vm1792, %v1784, %v1789
    %v1794 = vrsqrt.pop %v1783
    %v1795 = vmul.f32 %v1794, %v1783
    %v1796 = vmul.f32 %v1795, %v1794
    %v1797 = vmul.f32 0.5, %v1796
    %v1798 = vsub.f32 1.5, %v1797
    %v1799 = vmul.f32 %v1794, %v1798
    %vm1800 = vweird.f32 %v1783
    %vm1801 = vweird.f32 %v1794
    %vm1802 = vmor %vm1800, %vm1801
    %v1803 = vsel %vm1802, %v1794, %v1799
    %v1804 = vmul.f32 %v1770, %v1793
    %v1805 = vmul.f32 %v1771, %v1803
    %v1807 = vperm.slane %v1760, 0
    %v1809 = vmul.f32 %v1804, %v1807
    %v1810 = vmul.f32 %v1805, %v1807
    %v1812 = vperm.slane %v1761, 0
    %v1814 = vadd.f32 %v1809, %v1812
    %v1815 = vadd.f32 %v1810, %v1812
    %v1816 = vpack.c.bf16 %v1814, %v1814
    %v1817 = vpack.c.bf16 %v1815, %v1815
    %s1818 = scalar_lea.vmem %s6, 128
    %v1819 = vld [vmem:[%s1818] sm:$0xf]
    %v1820 = vld [vmem:[%s1818 + $0x4] sm:$0xf]
    %v1821 = vld [vmem:[%s1818 + $0x8] sm:$0xf]
    %v1822 = vld [vmem:[%s1818 + $0xc] sm:$0xf]
    %v1823 = vld [vmem:[%s1818 + $0x10] sm:$0xf]
    %v1824 = vld [vmem:[%s1818 + $0x14] sm:$0xf]
    %v1825 = vld [vmem:[%s1818 + $0x18] sm:$0xf]
    %v1826 = vld [vmem:[%s1818 + $0x1c] sm:$0xf]
    %v1827 = vld [vmem:[%s1818 + $0x20] sm:$0xf]
    %v1828 = vld [vmem:[%s1818 + $0x24] sm:$0xf]
    %v1829 = vld [vmem:[%s1818 + $0x28] sm:$0xf]
    %v1830 = vld [vmem:[%s1818 + $0x2c] sm:$0xf]
    %v1831 = vld [vmem:[%s1818 + $0x30] sm:$0xf]
    %v1832 = vld [vmem:[%s1818 + $0x34] sm:$0xf]
    %v1833 = vld [vmem:[%s1818 + $0x38] sm:$0xf]
    %v1834 = vld [vmem:[%s1818 + $0x3c] sm:$0xf]
    %v1835 = vld [vmem:[%s1818 + $0x40] sm:$0xf]
    %v1836 = vld [vmem:[%s1818 + $0x44] sm:$0xf]
    %v1837 = vld [vmem:[%s1818 + $0x48] sm:$0xf]
    %v1838 = vld [vmem:[%s1818 + $0x4c] sm:$0xf]
    %v1839 = vld [vmem:[%s1818 + $0x50] sm:$0xf]
    %v1840 = vld [vmem:[%s1818 + $0x54] sm:$0xf]
    %v1841 = vld [vmem:[%s1818 + $0x58] sm:$0xf]
    %v1842 = vld [vmem:[%s1818 + $0x5c] sm:$0xf]
    %v1843 = vld [vmem:[%s1818 + $0x60] sm:$0xf]
    %v1844 = vld [vmem:[%s1818 + $0x64] sm:$0xf]
    %v1845 = vld [vmem:[%s1818 + $0x68] sm:$0xf]
    %v1846 = vld [vmem:[%s1818 + $0x6c] sm:$0xf]
    %v1847 = vld [vmem:[%s1818 + $0x70] sm:$0xf]
    %v1848 = vld [vmem:[%s1818 + $0x74] sm:$0xf]
    %v1849 = vld [vmem:[%s1818 + $0x78] sm:$0xf]
    %v1850 = vld [vmem:[%s1818 + $0x7c] sm:$0xf]
    %s1851 = scalar_lea.vmem %s7, 8
    %v1852 = vld [vmem:[%s1851] sm:$0x1]
    %v1853 = vld [vmem:[%s1851 + $0x1] sm:$0x1]
    %v1854 = vld [vmem:[%s1851 + $0x2] sm:$0x1]
    %v1855 = vld [vmem:[%s1851 + $0x3] sm:$0x1]
    %v1856 = vld [vmem:[%s1851 + $0x4] sm:$0x1]
    %v1857 = vld [vmem:[%s1851 + $0x5] sm:$0x1]
    %v1858 = vld [vmem:[%s1851 + $0x6] sm:$0x1]
    %v1859 = vld [vmem:[%s1851 + $0x7] sm:$0x1]
    %v1868 = vperm.slane %v1852, 0
    %v1869 = vperm.slane %v1853, 0
    %v1870 = vperm.slane %v1854, 0
    %v1871 = vperm.slane %v1855, 0
    %v1872 = vperm.slane %v1856, 0
    %v1873 = vperm.slane %v1857, 0
    %v1874 = vperm.slane %v1858, 0
    %v1875 = vperm.slane %v1859, 0
    %v1888 = vunpack.c.l.b16 %v1819
    %v1889 = vunpack.c.l.b16 %v1820
    %v1890 = vunpack.c.l.b16 %v1821
    %v1891 = vunpack.c.l.b16 %v1822
    %v1892 = vpack.c.b16 %v1889, %v1888
    %v1893 = vpack.c.b16 %v1891, %v1890
    %v1897 = vsel %vm141, %v1816, 0
    %1899 = vmatpush.bf16.msra.mxu0 0
    %1900 = vmatpush.bf16.msra.mxu0 0
    %1901 = vmatpush.bf16.msra.mxu0 0
    %1902 = vmatpush.bf16.msra.mxu0 0
    %1903 = vmatpush.bf16.msra.mxu0 0
    %1904 = vmatpush.bf16.msra.mxu0 0
    %1905 = vmatpush.bf16.msra.mxu0 %v1893
    %1906 = vmatpush.bf16.msra.mxu0 %v1892
    %1907 = vmatmul.bf16.gmra.mxu0 %v1897
    %v1908 = vpop.f32.mrf.mxu0
    %v1909 = vadd.f32 %v1868, %v1908
    %v1910 = vpop.f32.mrf.mxu0
    %1911 = vdwg.mxu0
    %v1916 = vunpack.c.l.b16 %v1823
    %v1917 = vunpack.c.l.b16 %v1824
    %v1918 = vunpack.c.l.b16 %v1825
    %v1919 = vunpack.c.l.b16 %v1826
    %v1920 = vpack.c.b16 %v1917, %v1916
    %v1921 = vpack.c.b16 %v1919, %v1918
    %v1925 = vsel %vm141, %v1817, 0
    %1927 = vmatpush.bf16.msra.mxu0 0
    %1928 = vmatpush.bf16.msra.mxu0 0
    %1929 = vmatpush.bf16.msra.mxu0 0
    %1930 = vmatpush.bf16.msra.mxu0 0
    %1931 = vmatpush.bf16.msra.mxu0 0
    %1932 = vmatpush.bf16.msra.mxu0 0
    %1933 = vmatpush.bf16.msra.mxu0 %v1921
    %1934 = vmatpush.bf16.msra.mxu0 %v1920
    %1935 = vmatmul.bf16.gmra.mxu0 %v1925
    %v1936 = vpop.f32.mrf.mxu0
    %v1937 = vadd.f32 %v1869, %v1936
    %v1938 = vpop.f32.mrf.mxu0
    %1939 = vdwg.mxu0
    %v1944 = vunpack.c.l.b16 %v1827
    %v1945 = vunpack.c.l.b16 %v1828
    %v1946 = vunpack.c.l.b16 %v1829
    %v1947 = vunpack.c.l.b16 %v1830
    %v1948 = vpack.c.b16 %v1945, %v1944
    %v1949 = vpack.c.b16 %v1947, %v1946
    %1952 = vmatpush.bf16.msra.mxu0 0
    %1953 = vmatpush.bf16.msra.mxu0 0
    %1954 = vmatpush.bf16.msra.mxu0 0
    %1955 = vmatpush.bf16.msra.mxu0 0
    %1956 = vmatpush.bf16.msra.mxu0 0
    %1957 = vmatpush.bf16.msra.mxu0 0
    %1958 = vmatpush.bf16.msra.mxu0 %v1949
    %1959 = vmatpush.bf16.msra.mxu0 %v1948
    %1960 = vmatmul.bf16.gmra.mxu0 %v1897
    %v1961 = vpop.f32.mrf.mxu0
    %v1962 = vadd.f32 %v1870, %v1961
    %v1963 = vpop.f32.mrf.mxu0
    %1964 = vdwg.mxu0
    %v1969 = vunpack.c.l.b16 %v1831
    %v1970 = vunpack.c.l.b16 %v1832
    %v1971 = vunpack.c.l.b16 %v1833
    %v1972 = vunpack.c.l.b16 %v1834
    %v1973 = vpack.c.b16 %v1970, %v1969
    %v1974 = vpack.c.b16 %v1972, %v1971
    %1977 = vmatpush.bf16.msra.mxu0 0
    %1978 = vmatpush.bf16.msra.mxu0 0
    %1979 = vmatpush.bf16.msra.mxu0 0
    %1980 = vmatpush.bf16.msra.mxu0 0
    %1981 = vmatpush.bf16.msra.mxu0 0
    %1982 = vmatpush.bf16.msra.mxu0 0
    %1983 = vmatpush.bf16.msra.mxu0 %v1974
    %1984 = vmatpush.bf16.msra.mxu0 %v1973
    %1985 = vmatmul.bf16.gmra.mxu0 %v1925
    %v1986 = vpop.f32.mrf.mxu0
    %v1987 = vadd.f32 %v1871, %v1986
    %v1988 = vpop.f32.mrf.mxu0
    %1989 = vdwg.mxu0
    %v1994 = vunpack.c.l.b16 %v1835
    %v1995 = vunpack.c.l.b16 %v1836
    %v1996 = vunpack.c.l.b16 %v1837
    %v1997 = vunpack.c.l.b16 %v1838
    %v1998 = vpack.c.b16 %v1995, %v1994
    %v1999 = vpack.c.b16 %v1997, %v1996
    %2002 = vmatpush.bf16.msra.mxu0 0
    %2003 = vmatpush.bf16.msra.mxu0 0
    %2004 = vmatpush.bf16.msra.mxu0 0
    %2005 = vmatpush.bf16.msra.mxu0 0
    %2006 = vmatpush.bf16.msra.mxu0 0
    %2007 = vmatpush.bf16.msra.mxu0 0
    %2008 = vmatpush.bf16.msra.mxu0 %v1999
    %2009 = vmatpush.bf16.msra.mxu0 %v1998
    %2010 = vmatmul.bf16.gmra.mxu0 %v1897
    %v2011 = vpop.f32.mrf.mxu0
    %v2012 = vadd.f32 %v1872, %v2011
    %v2013 = vpop.f32.mrf.mxu0
    %2014 = vdwg.mxu0
    %v2019 = vunpack.c.l.b16 %v1839
    %v2020 = vunpack.c.l.b16 %v1840
    %v2021 = vunpack.c.l.b16 %v1841
    %v2022 = vunpack.c.l.b16 %v1842
    %v2023 = vpack.c.b16 %v2020, %v2019
    %v2024 = vpack.c.b16 %v2022, %v2021
    %2027 = vmatpush.bf16.msra.mxu0 0
    %2028 = vmatpush.bf16.msra.mxu0 0
    %2029 = vmatpush.bf16.msra.mxu0 0
    %2030 = vmatpush.bf16.msra.mxu0 0
    %2031 = vmatpush.bf16.msra.mxu0 0
    %2032 = vmatpush.bf16.msra.mxu0 0
    %2033 = vmatpush.bf16.msra.mxu0 %v2024
    %2034 = vmatpush.bf16.msra.mxu0 %v2023
    %2035 = vmatmul.bf16.gmra.mxu0 %v1925
    %v2036 = vpop.f32.mrf.mxu0
    %v2037 = vadd.f32 %v1873, %v2036
    %v2038 = vpop.f32.mrf.mxu0
    %2039 = vdwg.mxu0
    %v2044 = vunpack.c.l.b16 %v1843
    %v2045 = vunpack.c.l.b16 %v1844
    %v2046 = vunpack.c.l.b16 %v1845
    %v2047 = vunpack.c.l.b16 %v1846
    %v2048 = vpack.c.b16 %v2045, %v2044
    %v2049 = vpack.c.b16 %v2047, %v2046
    %2052 = vmatpush.bf16.msra.mxu0 0
    %2053 = vmatpush.bf16.msra.mxu0 0
    %2054 = vmatpush.bf16.msra.mxu0 0
    %2055 = vmatpush.bf16.msra.mxu0 0
    %2056 = vmatpush.bf16.msra.mxu0 0
    %2057 = vmatpush.bf16.msra.mxu0 0
    %2058 = vmatpush.bf16.msra.mxu0 %v2049
    %2059 = vmatpush.bf16.msra.mxu0 %v2048
    %2060 = vmatmul.bf16.gmra.mxu0 %v1897
    %v2061 = vpop.f32.mrf.mxu0
    %v2062 = vadd.f32 %v1874, %v2061
    %v2063 = vpop.f32.mrf.mxu0
    %2064 = vdwg.mxu0
    %v2069 = vunpack.c.l.b16 %v1847
    %v2070 = vunpack.c.l.b16 %v1848
    %v2071 = vunpack.c.l.b16 %v1849
    %v2072 = vunpack.c.l.b16 %v1850
    %v2073 = vpack.c.b16 %v2070, %v2069
    %v2074 = vpack.c.b16 %v2072, %v2071
    %2077 = vmatpush.bf16.msra.mxu0 0
    %2078 = vmatpush.bf16.msra.mxu0 0
    %2079 = vmatpush.bf16.msra.mxu0 0
    %2080 = vmatpush.bf16.msra.mxu0 0
    %2081 = vmatpush.bf16.msra.mxu0 0
    %2082 = vmatpush.bf16.msra.mxu0 0
    %2083 = vmatpush.bf16.msra.mxu0 %v2074
    %2084 = vmatpush.bf16.msra.mxu0 %v2073
    %2085 = vmatmul.bf16.gmra.mxu0 %v1925
    %v2086 = vpop.f32.mrf.mxu0
    %v2087 = vadd.f32 %v1875, %v2086
    %v2088 = vpop.f32.mrf.mxu0
    %2089 = vdwg.mxu0
    %s2090 = scalar_lea.vmem %s8, 128
    %v2091 = vld [vmem:[%s2090] sm:$0xf]
    %v2092 = vld [vmem:[%s2090 + $0x4] sm:$0xf]
    %v2093 = vld [vmem:[%s2090 + $0x8] sm:$0xf]
    %v2094 = vld [vmem:[%s2090 + $0xc] sm:$0xf]
    %v2095 = vld [vmem:[%s2090 + $0x10] sm:$0xf]
    %v2096 = vld [vmem:[%s2090 + $0x14] sm:$0xf]
    %v2097 = vld [vmem:[%s2090 + $0x18] sm:$0xf]
    %v2098 = vld [vmem:[%s2090 + $0x1c] sm:$0xf]
    %v2099 = vld [vmem:[%s2090 + $0x20] sm:$0xf]
    %v2100 = vld [vmem:[%s2090 + $0x24] sm:$0xf]
    %v2101 = vld [vmem:[%s2090 + $0x28] sm:$0xf]
    %v2102 = vld [vmem:[%s2090 + $0x2c] sm:$0xf]
    %v2103 = vld [vmem:[%s2090 + $0x30] sm:$0xf]
    %v2104 = vld [vmem:[%s2090 + $0x34] sm:$0xf]
    %v2105 = vld [vmem:[%s2090 + $0x38] sm:$0xf]
    %v2106 = vld [vmem:[%s2090 + $0x3c] sm:$0xf]
    %v2107 = vld [vmem:[%s2090 + $0x40] sm:$0xf]
    %v2108 = vld [vmem:[%s2090 + $0x44] sm:$0xf]
    %v2109 = vld [vmem:[%s2090 + $0x48] sm:$0xf]
    %v2110 = vld [vmem:[%s2090 + $0x4c] sm:$0xf]
    %v2111 = vld [vmem:[%s2090 + $0x50] sm:$0xf]
    %v2112 = vld [vmem:[%s2090 + $0x54] sm:$0xf]
    %v2113 = vld [vmem:[%s2090 + $0x58] sm:$0xf]
    %v2114 = vld [vmem:[%s2090 + $0x5c] sm:$0xf]
    %v2115 = vld [vmem:[%s2090 + $0x60] sm:$0xf]
    %v2116 = vld [vmem:[%s2090 + $0x64] sm:$0xf]
    %v2117 = vld [vmem:[%s2090 + $0x68] sm:$0xf]
    %v2118 = vld [vmem:[%s2090 + $0x6c] sm:$0xf]
    %v2119 = vld [vmem:[%s2090 + $0x70] sm:$0xf]
    %v2120 = vld [vmem:[%s2090 + $0x74] sm:$0xf]
    %v2121 = vld [vmem:[%s2090 + $0x78] sm:$0xf]
    %v2122 = vld [vmem:[%s2090 + $0x7c] sm:$0xf]
    %s2123 = scalar_lea.vmem %s9, 8
    %v2124 = vld [vmem:[%s2123] sm:$0x1]
    %v2125 = vld [vmem:[%s2123 + $0x1] sm:$0x1]
    %v2126 = vld [vmem:[%s2123 + $0x2] sm:$0x1]
    %v2127 = vld [vmem:[%s2123 + $0x3] sm:$0x1]
    %v2128 = vld [vmem:[%s2123 + $0x4] sm:$0x1]
    %v2129 = vld [vmem:[%s2123 + $0x5] sm:$0x1]
    %v2130 = vld [vmem:[%s2123 + $0x6] sm:$0x1]
    %v2131 = vld [vmem:[%s2123 + $0x7] sm:$0x1]
    %v2140 = vperm.slane %v2124, 0
    %v2141 = vperm.slane %v2125, 0
    %v2142 = vperm.slane %v2126, 0
    %v2143 = vperm.slane %v2127, 0
    %v2144 = vperm.slane %v2128, 0
    %v2145 = vperm.slane %v2129, 0
    %v2146 = vperm.slane %v2130, 0
    %v2147 = vperm.slane %v2131, 0
    %v2160 = vunpack.c.l.b16 %v2091
    %v2161 = vunpack.c.l.b16 %v2092
    %v2162 = vunpack.c.l.b16 %v2093
    %v2163 = vunpack.c.l.b16 %v2094
    %v2164 = vpack.c.b16 %v2161, %v2160
    %v2165 = vpack.c.b16 %v2163, %v2162
    %2168 = vmatpush.bf16.msra.mxu0 0
    %2169 = vmatpush.bf16.msra.mxu0 0
    %2170 = vmatpush.bf16.msra.mxu0 0
    %2171 = vmatpush.bf16.msra.mxu0 0
    %2172 = vmatpush.bf16.msra.mxu0 0
    %2173 = vmatpush.bf16.msra.mxu0 0
    %2174 = vmatpush.bf16.msra.mxu0 %v2165
    %2175 = vmatpush.bf16.msra.mxu0 %v2164
    %2176 = vmatmul.bf16.gmra.mxu0 %v1897
    %v2177 = vpop.f32.mrf.mxu0
    %v2178 = vadd.f32 %v2140, %v2177
    %v2179 = vpop.f32.mrf.mxu0
    %2180 = vdwg.mxu0
    %v2185 = vunpack.c.l.b16 %v2095
    %v2186 = vunpack.c.l.b16 %v2096
    %v2187 = vunpack.c.l.b16 %v2097
    %v2188 = vunpack.c.l.b16 %v2098
    %v2189 = vpack.c.b16 %v2186, %v2185
    %v2190 = vpack.c.b16 %v2188, %v2187
    %2193 = vmatpush.bf16.msra.mxu0 0
    %2194 = vmatpush.bf16.msra.mxu0 0
    %2195 = vmatpush.bf16.msra.mxu0 0
    %2196 = vmatpush.bf16.msra.mxu0 0
    %2197 = vmatpush.bf16.msra.mxu0 0
    %2198 = vmatpush.bf16.msra.mxu0 0
    %2199 = vmatpush.bf16.msra.mxu0 %v2190
    %2200 = vmatpush.bf16.msra.mxu0 %v2189
    %2201 = vmatmul.bf16.gmra.mxu0 %v1925
    %v2202 = vpop.f32.mrf.mxu0
    %v2203 = vadd.f32 %v2141, %v2202
    %v2204 = vpop.f32.mrf.mxu0
    %2205 = vdwg.mxu0
    %v2210 = vunpack.c.l.b16 %v2099
    %v2211 = vunpack.c.l.b16 %v2100
    %v2212 = vunpack.c.l.b16 %v2101
    %v2213 = vunpack.c.l.b16 %v2102
    %v2214 = vpack.c.b16 %v2211, %v2210
    %v2215 = vpack.c.b16 %v2213, %v2212
    %2218 = vmatpush.bf16.msra.mxu0 0
    %2219 = vmatpush.bf16.msra.mxu0 0
    %2220 = vmatpush.bf16.msra.mxu0 0
    %2221 = vmatpush.bf16.msra.mxu0 0
    %2222 = vmatpush.bf16.msra.mxu0 0
    %2223 = vmatpush.bf16.msra.mxu0 0
    %2224 = vmatpush.bf16.msra.mxu0 %v2215
    %2225 = vmatpush.bf16.msra.mxu0 %v2214
    %2226 = vmatmul.bf16.gmra.mxu0 %v1897
    %v2227 = vpop.f32.mrf.mxu0
    %v2228 = vadd.f32 %v2142, %v2227
    %v2229 = vpop.f32.mrf.mxu0
    %2230 = vdwg.mxu0
    %v2235 = vunpack.c.l.b16 %v2103
    %v2236 = vunpack.c.l.b16 %v2104
    %v2237 = vunpack.c.l.b16 %v2105
    %v2238 = vunpack.c.l.b16 %v2106
    %v2239 = vpack.c.b16 %v2236, %v2235
    %v2240 = vpack.c.b16 %v2238, %v2237
    %2243 = vmatpush.bf16.msra.mxu0 0
    %2244 = vmatpush.bf16.msra.mxu0 0
    %2245 = vmatpush.bf16.msra.mxu0 0
    %2246 = vmatpush.bf16.msra.mxu0 0
    %2247 = vmatpush.bf16.msra.mxu0 0
    %2248 = vmatpush.bf16.msra.mxu0 0
    %2249 = vmatpush.bf16.msra.mxu0 %v2240
    %2250 = vmatpush.bf16.msra.mxu0 %v2239
    %2251 = vmatmul.bf16.gmra.mxu0 %v1925
    %v2252 = vpop.f32.mrf.mxu0
    %v2253 = vadd.f32 %v2143, %v2252
    %v2254 = vpop.f32.mrf.mxu0
    %2255 = vdwg.mxu0
    %v2260 = vunpack.c.l.b16 %v2107
    %v2261 = vunpack.c.l.b16 %v2108
    %v2262 = vunpack.c.l.b16 %v2109
    %v2263 = vunpack.c.l.b16 %v2110
    %v2264 = vpack.c.b16 %v2261, %v2260
    %v2265 = vpack.c.b16 %v2263, %v2262
    %2268 = vmatpush.bf16.msra.mxu0 0
    %2269 = vmatpush.bf16.msra.mxu0 0
    %2270 = vmatpush.bf16.msra.mxu0 0
    %2271 = vmatpush.bf16.msra.mxu0 0
    %2272 = vmatpush.bf16.msra.mxu0 0
    %2273 = vmatpush.bf16.msra.mxu0 0
    %2274 = vmatpush.bf16.msra.mxu0 %v2265
    %2275 = vmatpush.bf16.msra.mxu0 %v2264
    %2276 = vmatmul.bf16.gmra.mxu0 %v1897
    %v2277 = vpop.f32.mrf.mxu0
    %v2278 = vadd.f32 %v2144, %v2277
    %v2279 = vpop.f32.mrf.mxu0
    %2280 = vdwg.mxu0
    %v2285 = vunpack.c.l.b16 %v2111
    %v2286 = vunpack.c.l.b16 %v2112
    %v2287 = vunpack.c.l.b16 %v2113
    %v2288 = vunpack.c.l.b16 %v2114
    %v2289 = vpack.c.b16 %v2286, %v2285
    %v2290 = vpack.c.b16 %v2288, %v2287
    %2293 = vmatpush.bf16.msra.mxu0 0
    %2294 = vmatpush.bf16.msra.mxu0 0
    %2295 = vmatpush.bf16.msra.mxu0 0
    %2296 = vmatpush.bf16.msra.mxu0 0
    %2297 = vmatpush.bf16.msra.mxu0 0
    %2298 = vmatpush.bf16.msra.mxu0 0
    %2299 = vmatpush.bf16.msra.mxu0 %v2290
    %2300 = vmatpush.bf16.msra.mxu0 %v2289
    %2301 = vmatmul.bf16.gmra.mxu0 %v1925
    %v2302 = vpop.f32.mrf.mxu0
    %v2303 = vadd.f32 %v2145, %v2302
    %v2304 = vpop.f32.mrf.mxu0
    %2305 = vdwg.mxu0
    %v2310 = vunpack.c.l.b16 %v2115
    %v2311 = vunpack.c.l.b16 %v2116
    %v2312 = vunpack.c.l.b16 %v2117
    %v2313 = vunpack.c.l.b16 %v2118
    %v2314 = vpack.c.b16 %v2311, %v2310
    %v2315 = vpack.c.b16 %v2313, %v2312
    %2318 = vmatpush.bf16.msra.mxu0 0
    %2319 = vmatpush.bf16.msra.mxu0 0
    %2320 = vmatpush.bf16.msra.mxu0 0
    %2321 = vmatpush.bf16.msra.mxu0 0
    %2322 = vmatpush.bf16.msra.mxu0 0
    %2323 = vmatpush.bf16.msra.mxu0 0
    %2324 = vmatpush.bf16.msra.mxu0 %v2315
    %2325 = vmatpush.bf16.msra.mxu0 %v2314
    %2326 = vmatmul.bf16.gmra.mxu0 %v1897
    %v2327 = vpop.f32.mrf.mxu0
    %v2328 = vadd.f32 %v2146, %v2327
    %v2329 = vpop.f32.mrf.mxu0
    %2330 = vdwg.mxu0
    %v2335 = vunpack.c.l.b16 %v2119
    %v2336 = vunpack.c.l.b16 %v2120
    %v2337 = vunpack.c.l.b16 %v2121
    %v2338 = vunpack.c.l.b16 %v2122
    %v2339 = vpack.c.b16 %v2336, %v2335
    %v2340 = vpack.c.b16 %v2338, %v2337
    %2343 = vmatpush.bf16.msra.mxu0 0
    %2344 = vmatpush.bf16.msra.mxu0 0
    %2345 = vmatpush.bf16.msra.mxu0 0
    %2346 = vmatpush.bf16.msra.mxu0 0
    %2347 = vmatpush.bf16.msra.mxu0 0
    %2348 = vmatpush.bf16.msra.mxu0 0
    %2349 = vmatpush.bf16.msra.mxu0 %v2340
    %2350 = vmatpush.bf16.msra.mxu0 %v2339
    %2351 = vmatmul.bf16.gmra.mxu0 %v1925
    %v2352 = vpop.f32.mrf.mxu0
    %v2353 = vadd.f32 %v2147, %v2352
    %v2354 = vpop.f32.mrf.mxu0
    %2355 = vdwg.mxu0
    %s2356 = scalar_lea.vmem %s10, 128
    %v2357 = vld [vmem:[%s2356] sm:$0xf]
    %v2358 = vld [vmem:[%s2356 + $0x4] sm:$0xf]
    %v2359 = vld [vmem:[%s2356 + $0x8] sm:$0xf]
    %v2360 = vld [vmem:[%s2356 + $0xc] sm:$0xf]
    %v2361 = vld [vmem:[%s2356 + $0x10] sm:$0xf]
    %v2362 = vld [vmem:[%s2356 + $0x14] sm:$0xf]
    %v2363 = vld [vmem:[%s2356 + $0x18] sm:$0xf]
    %v2364 = vld [vmem:[%s2356 + $0x1c] sm:$0xf]
    %v2365 = vld [vmem:[%s2356 + $0x20] sm:$0xf]
    %v2366 = vld [vmem:[%s2356 + $0x24] sm:$0xf]
    %v2367 = vld [vmem:[%s2356 + $0x28] sm:$0xf]
    %v2368 = vld [vmem:[%s2356 + $0x2c] sm:$0xf]
    %v2369 = vld [vmem:[%s2356 + $0x30] sm:$0xf]
    %v2370 = vld [vmem:[%s2356 + $0x34] sm:$0xf]
    %v2371 = vld [vmem:[%s2356 + $0x38] sm:$0xf]
    %v2372 = vld [vmem:[%s2356 + $0x3c] sm:$0xf]
    %v2373 = vld [vmem:[%s2356 + $0x40] sm:$0xf]
    %v2374 = vld [vmem:[%s2356 + $0x44] sm:$0xf]
    %v2375 = vld [vmem:[%s2356 + $0x48] sm:$0xf]
    %v2376 = vld [vmem:[%s2356 + $0x4c] sm:$0xf]
    %v2377 = vld [vmem:[%s2356 + $0x50] sm:$0xf]
    %v2378 = vld [vmem:[%s2356 + $0x54] sm:$0xf]
    %v2379 = vld [vmem:[%s2356 + $0x58] sm:$0xf]
    %v2380 = vld [vmem:[%s2356 + $0x5c] sm:$0xf]
    %v2381 = vld [vmem:[%s2356 + $0x60] sm:$0xf]
    %v2382 = vld [vmem:[%s2356 + $0x64] sm:$0xf]
    %v2383 = vld [vmem:[%s2356 + $0x68] sm:$0xf]
    %v2384 = vld [vmem:[%s2356 + $0x6c] sm:$0xf]
    %v2385 = vld [vmem:[%s2356 + $0x70] sm:$0xf]
    %v2386 = vld [vmem:[%s2356 + $0x74] sm:$0xf]
    %v2387 = vld [vmem:[%s2356 + $0x78] sm:$0xf]
    %v2388 = vld [vmem:[%s2356 + $0x7c] sm:$0xf]
    %s2389 = scalar_lea.vmem %s11, 8
    %v2390 = vld [vmem:[%s2389] sm:$0x1]
    %v2391 = vld [vmem:[%s2389 + $0x1] sm:$0x1]
    %v2392 = vld [vmem:[%s2389 + $0x2] sm:$0x1]
    %v2393 = vld [vmem:[%s2389 + $0x3] sm:$0x1]
    %v2394 = vld [vmem:[%s2389 + $0x4] sm:$0x1]
    %v2395 = vld [vmem:[%s2389 + $0x5] sm:$0x1]
    %v2396 = vld [vmem:[%s2389 + $0x6] sm:$0x1]
    %v2397 = vld [vmem:[%s2389 + $0x7] sm:$0x1]
    %v2406 = vperm.slane %v2390, 0
    %v2407 = vperm.slane %v2391, 0
    %v2408 = vperm.slane %v2392, 0
    %v2409 = vperm.slane %v2393, 0
    %v2410 = vperm.slane %v2394, 0
    %v2411 = vperm.slane %v2395, 0
    %v2412 = vperm.slane %v2396, 0
    %v2413 = vperm.slane %v2397, 0
    %v2426 = vunpack.c.l.b16 %v2357
    %v2427 = vunpack.c.l.b16 %v2358
    %v2428 = vunpack.c.l.b16 %v2359
    %v2429 = vunpack.c.l.b16 %v2360
    %v2430 = vpack.c.b16 %v2427, %v2426
    %v2431 = vpack.c.b16 %v2429, %v2428
    %2434 = vmatpush.bf16.msra.mxu0 0
    %2435 = vmatpush.bf16.msra.mxu0 0
    %2436 = vmatpush.bf16.msra.mxu0 0
    %2437 = vmatpush.bf16.msra.mxu0 0
    %2438 = vmatpush.bf16.msra.mxu0 0
    %2439 = vmatpush.bf16.msra.mxu0 0
    %2440 = vmatpush.bf16.msra.mxu0 %v2431
    %2441 = vmatpush.bf16.msra.mxu0 %v2430
    %2442 = vmatmul.bf16.gmra.mxu0 %v1897
    %v2443 = vpop.f32.mrf.mxu0
    %v2444 = vadd.f32 %v2406, %v2443
    %v2445 = vpop.f32.mrf.mxu0
    %2446 = vdwg.mxu0
    %v2451 = vunpack.c.l.b16 %v2361
    %v2452 = vunpack.c.l.b16 %v2362
    %v2453 = vunpack.c.l.b16 %v2363
    %v2454 = vunpack.c.l.b16 %v2364
    %v2455 = vpack.c.b16 %v2452, %v2451
    %v2456 = vpack.c.b16 %v2454, %v2453
    %2459 = vmatpush.bf16.msra.mxu0 0
    %2460 = vmatpush.bf16.msra.mxu0 0
    %2461 = vmatpush.bf16.msra.mxu0 0
    %2462 = vmatpush.bf16.msra.mxu0 0
    %2463 = vmatpush.bf16.msra.mxu0 0
    %2464 = vmatpush.bf16.msra.mxu0 0
    %2465 = vmatpush.bf16.msra.mxu0 %v2456
    %2466 = vmatpush.bf16.msra.mxu0 %v2455
    %2467 = vmatmul.bf16.gmra.mxu0 %v1925
    %v2468 = vpop.f32.mrf.mxu0
    %v2469 = vadd.f32 %v2407, %v2468
    %v2470 = vpop.f32.mrf.mxu0
    %2471 = vdwg.mxu0
    %v2476 = vunpack.c.l.b16 %v2365
    %v2477 = vunpack.c.l.b16 %v2366
    %v2478 = vunpack.c.l.b16 %v2367
    %v2479 = vunpack.c.l.b16 %v2368
    %v2480 = vpack.c.b16 %v2477, %v2476
    %v2481 = vpack.c.b16 %v2479, %v2478
    %2484 = vmatpush.bf16.msra.mxu0 0
    %2485 = vmatpush.bf16.msra.mxu0 0
    %2486 = vmatpush.bf16.msra.mxu0 0
    %2487 = vmatpush.bf16.msra.mxu0 0
    %2488 = vmatpush.bf16.msra.mxu0 0
    %2489 = vmatpush.bf16.msra.mxu0 0
    %2490 = vmatpush.bf16.msra.mxu0 %v2481
    %2491 = vmatpush.bf16.msra.mxu0 %v2480
    %2492 = vmatmul.bf16.gmra.mxu0 %v1897
    %v2493 = vpop.f32.mrf.mxu0
    %v2494 = vadd.f32 %v2408, %v2493
    %v2495 = vpop.f32.mrf.mxu0
    %2496 = vdwg.mxu0
    %v2501 = vunpack.c.l.b16 %v2369
    %v2502 = vunpack.c.l.b16 %v2370
    %v2503 = vunpack.c.l.b16 %v2371
    %v2504 = vunpack.c.l.b16 %v2372
    %v2505 = vpack.c.b16 %v2502, %v2501
    %v2506 = vpack.c.b16 %v2504, %v2503
    %2509 = vmatpush.bf16.msra.mxu0 0
    %2510 = vmatpush.bf16.msra.mxu0 0
    %2511 = vmatpush.bf16.msra.mxu0 0
    %2512 = vmatpush.bf16.msra.mxu0 0
    %2513 = vmatpush.bf16.msra.mxu0 0
    %2514 = vmatpush.bf16.msra.mxu0 0
    %2515 = vmatpush.bf16.msra.mxu0 %v2506
    %2516 = vmatpush.bf16.msra.mxu0 %v2505
    %2517 = vmatmul.bf16.gmra.mxu0 %v1925
    %v2518 = vpop.f32.mrf.mxu0
    %v2519 = vadd.f32 %v2409, %v2518
    %v2520 = vpop.f32.mrf.mxu0
    %2521 = vdwg.mxu0
    %v2526 = vunpack.c.l.b16 %v2373
    %v2527 = vunpack.c.l.b16 %v2374
    %v2528 = vunpack.c.l.b16 %v2375
    %v2529 = vunpack.c.l.b16 %v2376
    %v2530 = vpack.c.b16 %v2527, %v2526
    %v2531 = vpack.c.b16 %v2529, %v2528
    %2534 = vmatpush.bf16.msra.mxu0 0
    %2535 = vmatpush.bf16.msra.mxu0 0
    %2536 = vmatpush.bf16.msra.mxu0 0
    %2537 = vmatpush.bf16.msra.mxu0 0
    %2538 = vmatpush.bf16.msra.mxu0 0
    %2539 = vmatpush.bf16.msra.mxu0 0
    %2540 = vmatpush.bf16.msra.mxu0 %v2531
    %2541 = vmatpush.bf16.msra.mxu0 %v2530
    %2542 = vmatmul.bf16.gmra.mxu0 %v1897
    %v2543 = vpop.f32.mrf.mxu0
    %v2544 = vadd.f32 %v2410, %v2543
    %v2545 = vpop.f32.mrf.mxu0
    %2546 = vdwg.mxu0
    %v2551 = vunpack.c.l.b16 %v2377
    %v2552 = vunpack.c.l.b16 %v2378
    %v2553 = vunpack.c.l.b16 %v2379
    %v2554 = vunpack.c.l.b16 %v2380
    %v2555 = vpack.c.b16 %v2552, %v2551
    %v2556 = vpack.c.b16 %v2554, %v2553
    %2559 = vmatpush.bf16.msra.mxu0 0
    %2560 = vmatpush.bf16.msra.mxu0 0
    %2561 = vmatpush.bf16.msra.mxu0 0
    %2562 = vmatpush.bf16.msra.mxu0 0
    %2563 = vmatpush.bf16.msra.mxu0 0
    %2564 = vmatpush.bf16.msra.mxu0 0
    %2565 = vmatpush.bf16.msra.mxu0 %v2556
    %2566 = vmatpush.bf16.msra.mxu0 %v2555
    %2567 = vmatmul.bf16.gmra.mxu0 %v1925
    %v2568 = vpop.f32.mrf.mxu0
    %v2569 = vadd.f32 %v2411, %v2568
    %v2570 = vpop.f32.mrf.mxu0
    %2571 = vdwg.mxu0
    %v2576 = vunpack.c.l.b16 %v2381
    %v2577 = vunpack.c.l.b16 %v2382
    %v2578 = vunpack.c.l.b16 %v2383
    %v2579 = vunpack.c.l.b16 %v2384
    %v2580 = vpack.c.b16 %v2577, %v2576
    %v2581 = vpack.c.b16 %v2579, %v2578
    %2584 = vmatpush.bf16.msra.mxu0 0
    %2585 = vmatpush.bf16.msra.mxu0 0
    %2586 = vmatpush.bf16.msra.mxu0 0
    %2587 = vmatpush.bf16.msra.mxu0 0
    %2588 = vmatpush.bf16.msra.mxu0 0
    %2589 = vmatpush.bf16.msra.mxu0 0
    %2590 = vmatpush.bf16.msra.mxu0 %v2581
    %2591 = vmatpush.bf16.msra.mxu0 %v2580
    %2592 = vmatmul.bf16.gmra.mxu0 %v1897
    %v2593 = vpop.f32.mrf.mxu0
    %v2594 = vadd.f32 %v2412, %v2593
    %v2595 = vpop.f32.mrf.mxu0
    %2596 = vdwg.mxu0
    %v2601 = vunpack.c.l.b16 %v2385
    %v2602 = vunpack.c.l.b16 %v2386
    %v2603 = vunpack.c.l.b16 %v2387
    %v2604 = vunpack.c.l.b16 %v2388
    %v2605 = vpack.c.b16 %v2602, %v2601
    %v2606 = vpack.c.b16 %v2604, %v2603
    %2609 = vmatpush.bf16.msra.mxu0 0
    %2610 = vmatpush.bf16.msra.mxu0 0
    %2611 = vmatpush.bf16.msra.mxu0 0
    %2612 = vmatpush.bf16.msra.mxu0 0
    %2613 = vmatpush.bf16.msra.mxu0 0
    %2614 = vmatpush.bf16.msra.mxu0 0
    %2615 = vmatpush.bf16.msra.mxu0 %v2606
    %2616 = vmatpush.bf16.msra.mxu0 %v2605
    %2617 = vmatmul.bf16.gmra.mxu0 %v1925
    %v2618 = vpop.f32.mrf.mxu0
    %v2619 = vadd.f32 %v2413, %v2618
    %v2620 = vpop.f32.mrf.mxu0
    %2621 = vdwg.mxu0
    %v2622 = vpack.c.bf16 %v1909, %v1909
    %v2623 = vpack.c.bf16 %v1937, %v1937
    %v2624 = vpack.c.bf16 %v1962, %v1962
    %v2625 = vpack.c.bf16 %v1987, %v1987
    %v2626 = vpack.c.bf16 %v2012, %v2012
    %v2627 = vpack.c.bf16 %v2037, %v2037
    %v2628 = vpack.c.bf16 %v2062, %v2062
    %v2629 = vpack.c.bf16 %v2087, %v2087
    %v2630 = vpack.c.bf16 %v2178, %v2178
    %v2631 = vpack.c.bf16 %v2203, %v2203
    %v2632 = vpack.c.bf16 %v2228, %v2228
    %v2633 = vpack.c.bf16 %v2253, %v2253
    %v2634 = vpack.c.bf16 %v2278, %v2278
    %v2635 = vpack.c.bf16 %v2303, %v2303
    %v2636 = vpack.c.bf16 %v2328, %v2328
    %v2637 = vpack.c.bf16 %v2353, %v2353
    %v2639 = vsel %vm1031, %v2622, 0
    %v2642 = vsel %vm1031, %v2630, 0
    %2644 = vmatpush.bf16.xpose.msra.mxu0 0
    %2645 = vmatpush.bf16.xpose.msra.mxu0 0
    %2646 = vmatpush.bf16.xpose.msra.mxu0 0
    %2647 = vmatpush.bf16.xpose.msra.mxu0 0
    %2648 = vmatpush.bf16.xpose.msra.mxu0 0
    %2649 = vmatpush.bf16.xpose.msra.mxu0 0
    %2650 = vmatpush.bf16.xpose.msra.mxu0 0
    %2651 = vmatpush.bf16.xpose.msra.mxu0 %v2642
    %2652 = vmatmul.bf16.gmra.mxu0 %v2639
    %v2653 = vpop.f32.mrf.mxu0
    %v2654 = vadd.f32 %v1027, %v2653
    %v2655 = vpop.f32.mrf.mxu0
    %2656 = vdwg.mxu0
    %v2658 = vsel %vm1031, %v2623, 0
    %v2661 = vsel %vm1031, %v2631, 0
    %2663 = vmatpush.bf16.xpose.msra.mxu0 0
    %2664 = vmatpush.bf16.xpose.msra.mxu0 0
    %2665 = vmatpush.bf16.xpose.msra.mxu0 0
    %2666 = vmatpush.bf16.xpose.msra.mxu0 0
    %2667 = vmatpush.bf16.xpose.msra.mxu0 0
    %2668 = vmatpush.bf16.xpose.msra.mxu0 0
    %2669 = vmatpush.bf16.xpose.msra.mxu0 0
    %2670 = vmatpush.bf16.xpose.msra.mxu0 %v2661
    %2671 = vmatmul.bf16.gmra.mxu0 %v2658
    %v2672 = vpop.f32.mrf.mxu0
    %v2673 = vadd.f32 %v1028, %v2672
    %v2674 = vpop.f32.mrf.mxu0
    %2675 = vdwg.mxu0
    %v2677 = vsel %vm1031, %v2624, 0
    %v2680 = vsel %vm1031, %v2632, 0
    %2682 = vmatpush.bf16.xpose.msra.mxu0 0
    %2683 = vmatpush.bf16.xpose.msra.mxu0 0
    %2684 = vmatpush.bf16.xpose.msra.mxu0 0
    %2685 = vmatpush.bf16.xpose.msra.mxu0 0
    %2686 = vmatpush.bf16.xpose.msra.mxu0 0
    %2687 = vmatpush.bf16.xpose.msra.mxu0 0
    %2688 = vmatpush.bf16.xpose.msra.mxu0 0
    %2689 = vmatpush.bf16.xpose.msra.mxu0 %v2680
    %2690 = vmatmul.bf16.gmra.mxu0 %v2677
    %v2691 = vpop.f32.mrf.mxu0
    %v2692 = vadd.f32 %v1027, %v2691
    %v2693 = vpop.f32.mrf.mxu0
    %2694 = vdwg.mxu0
    %v2696 = vsel %vm1031, %v2625, 0
    %v2699 = vsel %vm1031, %v2633, 0
    %2701 = vmatpush.bf16.xpose.msra.mxu0 0
    %2702 = vmatpush.bf16.xpose.msra.mxu0 0
    %2703 = vmatpush.bf16.xpose.msra.mxu0 0
    %2704 = vmatpush.bf16.xpose.msra.mxu0 0
    %2705 = vmatpush.bf16.xpose.msra.mxu0 0
    %2706 = vmatpush.bf16.xpose.msra.mxu0 0
    %2707 = vmatpush.bf16.xpose.msra.mxu0 0
    %2708 = vmatpush.bf16.xpose.msra.mxu0 %v2699
    %2709 = vmatmul.bf16.gmra.mxu0 %v2696
    %v2710 = vpop.f32.mrf.mxu0
    %v2711 = vadd.f32 %v1028, %v2710
    %v2712 = vpop.f32.mrf.mxu0
    %2713 = vdwg.mxu0
    %v2715 = vsel %vm1031, %v2626, 0
    %v2718 = vsel %vm1031, %v2634, 0
    %2720 = vmatpush.bf16.xpose.msra.mxu0 0
    %2721 = vmatpush.bf16.xpose.msra.mxu0 0
    %2722 = vmatpush.bf16.xpose.msra.mxu0 0
    %2723 = vmatpush.bf16.xpose.msra.mxu0 0
    %2724 = vmatpush.bf16.xpose.msra.mxu0 0
    %2725 = vmatpush.bf16.xpose.msra.mxu0 0
    %2726 = vmatpush.bf16.xpose.msra.mxu0 0
    %2727 = vmatpush.bf16.xpose.msra.mxu0 %v2718
    %2728 = vmatmul.bf16.gmra.mxu0 %v2715
    %v2729 = vpop.f32.mrf.mxu0
    %v2730 = vadd.f32 %v1027, %v2729
    %v2731 = vpop.f32.mrf.mxu0
    %2732 = vdwg.mxu0
    %v2734 = vsel %vm1031, %v2627, 0
    %v2737 = vsel %vm1031, %v2635, 0
    %2739 = vmatpush.bf16.xpose.msra.mxu0 0
    %2740 = vmatpush.bf16.xpose.msra.mxu0 0
    %2741 = vmatpush.bf16.xpose.msra.mxu0 0
    %2742 = vmatpush.bf16.xpose.msra.mxu0 0
    %2743 = vmatpush.bf16.xpose.msra.mxu0 0
    %2744 = vmatpush.bf16.xpose.msra.mxu0 0
    %2745 = vmatpush.bf16.xpose.msra.mxu0 0
    %2746 = vmatpush.bf16.xpose.msra.mxu0 %v2737
    %2747 = vmatmul.bf16.gmra.mxu0 %v2734
    %v2748 = vpop.f32.mrf.mxu0
    %v2749 = vadd.f32 %v1028, %v2748
    %v2750 = vpop.f32.mrf.mxu0
    %2751 = vdwg.mxu0
    %v2753 = vsel %vm1031, %v2628, 0
    %v2756 = vsel %vm1031, %v2636, 0
    %2758 = vmatpush.bf16.xpose.msra.mxu0 0
    %2759 = vmatpush.bf16.xpose.msra.mxu0 0
    %2760 = vmatpush.bf16.xpose.msra.mxu0 0
    %2761 = vmatpush.bf16.xpose.msra.mxu0 0
    %2762 = vmatpush.bf16.xpose.msra.mxu0 0
    %2763 = vmatpush.bf16.xpose.msra.mxu0 0
    %2764 = vmatpush.bf16.xpose.msra.mxu0 0
    %2765 = vmatpush.bf16.xpose.msra.mxu0 %v2756
    %2766 = vmatmul.bf16.gmra.mxu0 %v2753
    %v2767 = vpop.f32.mrf.mxu0
    %v2768 = vadd.f32 %v1027, %v2767
    %v2769 = vpop.f32.mrf.mxu0
    %2770 = vdwg.mxu0
    %v2772 = vsel %vm1031, %v2629, 0
    %v2775 = vsel %vm1031, %v2637, 0
    %2777 = vmatpush.bf16.xpose.msra.mxu0 0
    %2778 = vmatpush.bf16.xpose.msra.mxu0 0
    %2779 = vmatpush.bf16.xpose.msra.mxu0 0
    %2780 = vmatpush.bf16.xpose.msra.mxu0 0
    %2781 = vmatpush.bf16.xpose.msra.mxu0 0
    %2782 = vmatpush.bf16.xpose.msra.mxu0 0
    %2783 = vmatpush.bf16.xpose.msra.mxu0 0
    %2784 = vmatpush.bf16.xpose.msra.mxu0 %v2775
    %2785 = vmatmul.bf16.gmra.mxu0 %v2772
    %v2786 = vpop.f32.mrf.mxu0
    %v2787 = vadd.f32 %v1028, %v2786
    %v2788 = vpop.f32.mrf.mxu0
    %2789 = vdwg.mxu0
    %v2790 = vmul.f32 %v2654, 1.442695
    %v2791 = vpow.pop %v2790
    %v2792 = vmul.f32 %v2673, 1.442695
    %v2793 = vpow.pop %v2792
    %v2794 = vmul.f32 %v2692, 1.442695
    %v2795 = vpow.pop %v2794
    %v2796 = vmul.f32 %v2711, 1.442695
    %v2797 = vpow.pop %v2796
    %v2798 = vmul.f32 %v2730, 1.442695
    %v2799 = vpow.pop %v2798
    %v2800 = vmul.f32 %v2749, 1.442695
    %v2801 = vpow.pop %v2800
    %v2802 = vmul.f32 %v2768, 1.442695
    %v2803 = vpow.pop %v2802
    %v2804 = vmul.f32 %v2787, 1.442695
    %v2805 = vpow.pop %v2804
    %v2806 = vsel %vm1031, %v2791, 0.0
    %2807 = vadd.xlane.f32.xlu0 %v2806
    %v2808 = vpop.xlane.xlu0 %2807
    %v2809 = vsel %vm1031, %v2793, 0.0
    %2810 = vadd.xlane.f32.xlu0 %v2809
    %v2811 = vpop.xlane.xlu0 %2810
    %v2812 = vsel %vm1031, %v2795, 0.0
    %2813 = vadd.xlane.f32.xlu0 %v2812
    %v2814 = vpop.xlane.xlu0 %2813
    %v2815 = vsel %vm1031, %v2797, 0.0
    %2816 = vadd.xlane.f32.xlu0 %v2815
    %v2817 = vpop.xlane.xlu0 %2816
    %v2818 = vsel %vm1031, %v2799, 0.0
    %2819 = vadd.xlane.f32.xlu0 %v2818
    %v2820 = vpop.xlane.xlu0 %2819
    %v2821 = vsel %vm1031, %v2801, 0.0
    %2822 = vadd.xlane.f32.xlu0 %v2821
    %v2823 = vpop.xlane.xlu0 %2822
    %v2824 = vsel %vm1031, %v2803, 0.0
    %2825 = vadd.xlane.f32.xlu0 %v2824
    %v2826 = vpop.xlane.xlu0 %2825
    %v2827 = vsel %vm1031, %v2805, 0.0
    %2828 = vadd.xlane.f32.xlu0 %v2827
    %v2829 = vpop.xlane.xlu0 %2828
    %v2830 = vrcp.pop %v2808
    %v2831 = vrcp.pop %v2811
    %v2832 = vrcp.pop %v2814
    %v2833 = vrcp.pop %v2817
    %v2834 = vrcp.pop %v2820
    %v2835 = vrcp.pop %v2823
    %v2836 = vrcp.pop %v2826
    %v2837 = vrcp.pop %v2829
    %v2838 = vmul.f32 %v2791, %v2830
    %v2839 = vmul.f32 %v2793, %v2831
    %v2840 = vmul.f32 %v2795, %v2832
    %v2841 = vmul.f32 %v2797, %v2833
    %v2842 = vmul.f32 %v2799, %v2834
    %v2843 = vmul.f32 %v2801, %v2835
    %v2844 = vmul.f32 %v2803, %v2836
    %v2845 = vmul.f32 %v2805, %v2837
    %v2846 = vpack.c.bf16 %v2838, %v2838
    %v2847 = vpack.c.bf16 %v2839, %v2839
    %v2848 = vpack.c.bf16 %v2840, %v2840
    %v2849 = vpack.c.bf16 %v2841, %v2841
    %v2850 = vpack.c.bf16 %v2842, %v2842
    %v2851 = vpack.c.bf16 %v2843, %v2843
    %v2852 = vpack.c.bf16 %v2844, %v2844
    %v2853 = vpack.c.bf16 %v2845, %v2845
    %v2854 = vpack.c.bf16 %v2444, %v2444
    %v2855 = vpack.c.bf16 %v2469, %v2469
    %v2856 = vpack.c.bf16 %v2494, %v2494
    %v2857 = vpack.c.bf16 %v2519, %v2519
    %v2858 = vpack.c.bf16 %v2544, %v2544
    %v2859 = vpack.c.bf16 %v2569, %v2569
    %v2860 = vpack.c.bf16 %v2594, %v2594
    %v2861 = vpack.c.bf16 %v2619, %v2619
    %v2863 = vsel %vm1031, %v2846, 0
    %v2866 = vsel %vm1259, %v2854, 0
    %2868 = vmatpush.bf16.msra.mxu0 0
    %2869 = vmatpush.bf16.msra.mxu0 0
    %2870 = vmatpush.bf16.msra.mxu0 0
    %2871 = vmatpush.bf16.msra.mxu0 0
    %2872 = vmatpush.bf16.msra.mxu0 0
    %2873 = vmatpush.bf16.msra.mxu0 0
    %2874 = vmatpush.bf16.msra.mxu0 0
    %2875 = vmatpush.bf16.msra.mxu0 %v2866
    %2876 = vmatmul.bf16.gmra.mxu0 %v2863
    %v2877 = vpop.f32.mrf.mxu0
    %v2878 = vadd.f32 0.0, %v2877
    %v2879 = vpop.f32.mrf.mxu0
    %2880 = vdwg.mxu0
    %v2882 = vsel %vm1031, %v2847, 0
    %v2885 = vsel %vm1259, %v2855, 0
    %2887 = vmatpush.bf16.msra.mxu0 0
    %2888 = vmatpush.bf16.msra.mxu0 0
    %2889 = vmatpush.bf16.msra.mxu0 0
    %2890 = vmatpush.bf16.msra.mxu0 0
    %2891 = vmatpush.bf16.msra.mxu0 0
    %2892 = vmatpush.bf16.msra.mxu0 0
    %2893 = vmatpush.bf16.msra.mxu0 0
    %2894 = vmatpush.bf16.msra.mxu0 %v2885
    %2895 = vmatmul.bf16.gmra.mxu0 %v2882
    %v2896 = vpop.f32.mrf.mxu0
    %v2897 = vadd.f32 0.0, %v2896
    %v2898 = vpop.f32.mrf.mxu0
    %2899 = vdwg.mxu0
    %v2901 = vsel %vm1031, %v2848, 0
    %v2904 = vsel %vm1259, %v2856, 0
    %2906 = vmatpush.bf16.msra.mxu0 0
    %2907 = vmatpush.bf16.msra.mxu0 0
    %2908 = vmatpush.bf16.msra.mxu0 0
    %2909 = vmatpush.bf16.msra.mxu0 0
    %2910 = vmatpush.bf16.msra.mxu0 0
    %2911 = vmatpush.bf16.msra.mxu0 0
    %2912 = vmatpush.bf16.msra.mxu0 0
    %2913 = vmatpush.bf16.msra.mxu0 %v2904
    %2914 = vmatmul.bf16.gmra.mxu0 %v2901
    %v2915 = vpop.f32.mrf.mxu0
    %v2916 = vadd.f32 0.0, %v2915
    %v2917 = vpop.f32.mrf.mxu0
    %2918 = vdwg.mxu0
    %v2920 = vsel %vm1031, %v2849, 0
    %v2923 = vsel %vm1259, %v2857, 0
    %2925 = vmatpush.bf16.msra.mxu0 0
    %2926 = vmatpush.bf16.msra.mxu0 0
    %2927 = vmatpush.bf16.msra.mxu0 0
    %2928 = vmatpush.bf16.msra.mxu0 0
    %2929 = vmatpush.bf16.msra.mxu0 0
    %2930 = vmatpush.bf16.msra.mxu0 0
    %2931 = vmatpush.bf16.msra.mxu0 0
    %2932 = vmatpush.bf16.msra.mxu0 %v2923
    %2933 = vmatmul.bf16.gmra.mxu0 %v2920
    %v2934 = vpop.f32.mrf.mxu0
    %v2935 = vadd.f32 0.0, %v2934
    %v2936 = vpop.f32.mrf.mxu0
    %2937 = vdwg.mxu0
    %v2939 = vsel %vm1031, %v2850, 0
    %v2942 = vsel %vm1259, %v2858, 0
    %2944 = vmatpush.bf16.msra.mxu0 0
    %2945 = vmatpush.bf16.msra.mxu0 0
    %2946 = vmatpush.bf16.msra.mxu0 0
    %2947 = vmatpush.bf16.msra.mxu0 0
    %2948 = vmatpush.bf16.msra.mxu0 0
    %2949 = vmatpush.bf16.msra.mxu0 0
    %2950 = vmatpush.bf16.msra.mxu0 0
    %2951 = vmatpush.bf16.msra.mxu0 %v2942
    %2952 = vmatmul.bf16.gmra.mxu0 %v2939
    %v2953 = vpop.f32.mrf.mxu0
    %v2954 = vadd.f32 0.0, %v2953
    %v2955 = vpop.f32.mrf.mxu0
    %2956 = vdwg.mxu0
    %v2958 = vsel %vm1031, %v2851, 0
    %v2961 = vsel %vm1259, %v2859, 0
    %2963 = vmatpush.bf16.msra.mxu0 0
    %2964 = vmatpush.bf16.msra.mxu0 0
    %2965 = vmatpush.bf16.msra.mxu0 0
    %2966 = vmatpush.bf16.msra.mxu0 0
    %2967 = vmatpush.bf16.msra.mxu0 0
    %2968 = vmatpush.bf16.msra.mxu0 0
    %2969 = vmatpush.bf16.msra.mxu0 0
    %2970 = vmatpush.bf16.msra.mxu0 %v2961
    %2971 = vmatmul.bf16.gmra.mxu0 %v2958
    %v2972 = vpop.f32.mrf.mxu0
    %v2973 = vadd.f32 0.0, %v2972
    %v2974 = vpop.f32.mrf.mxu0
    %2975 = vdwg.mxu0
    %v2977 = vsel %vm1031, %v2852, 0
    %v2980 = vsel %vm1259, %v2860, 0
    %2982 = vmatpush.bf16.msra.mxu0 0
    %2983 = vmatpush.bf16.msra.mxu0 0
    %2984 = vmatpush.bf16.msra.mxu0 0
    %2985 = vmatpush.bf16.msra.mxu0 0
    %2986 = vmatpush.bf16.msra.mxu0 0
    %2987 = vmatpush.bf16.msra.mxu0 0
    %2988 = vmatpush.bf16.msra.mxu0 0
    %2989 = vmatpush.bf16.msra.mxu0 %v2980
    %2990 = vmatmul.bf16.gmra.mxu0 %v2977
    %v2991 = vpop.f32.mrf.mxu0
    %v2992 = vadd.f32 0.0, %v2991
    %v2993 = vpop.f32.mrf.mxu0
    %2994 = vdwg.mxu0
    %v2996 = vsel %vm1031, %v2853, 0
    %v2999 = vsel %vm1259, %v2861, 0
    %3001 = vmatpush.bf16.msra.mxu0 0
    %3002 = vmatpush.bf16.msra.mxu0 0
    %3003 = vmatpush.bf16.msra.mxu0 0
    %3004 = vmatpush.bf16.msra.mxu0 0
    %3005 = vmatpush.bf16.msra.mxu0 0
    %3006 = vmatpush.bf16.msra.mxu0 0
    %3007 = vmatpush.bf16.msra.mxu0 0
    %3008 = vmatpush.bf16.msra.mxu0 %v2999
    %3009 = vmatmul.bf16.gmra.mxu0 %v2996
    %v3010 = vpop.f32.mrf.mxu0
    %v3011 = vadd.f32 0.0, %v3010
    %v3012 = vpop.f32.mrf.mxu0
    %3013 = vdwg.mxu0
    %v3014 = vpack.c.bf16 %v2878, %v2878
    %v3015 = vpack.c.bf16 %v2897, %v2897
    %v3016 = vpack.c.bf16 %v2916, %v2916
    %v3017 = vpack.c.bf16 %v2935, %v2935
    %v3018 = vpack.c.bf16 %v2954, %v2954
    %v3019 = vpack.c.bf16 %v2973, %v2973
    %v3020 = vpack.c.bf16 %v2992, %v2992
    %v3021 = vpack.c.bf16 %v3011, %v3011
    %s3022 = scalar_lea.vmem %s12, 32
    %v3023 = vld [vmem:[%s3022] sm:$0xf]
    %v3024 = vld [vmem:[%s3022 + $0x4] sm:$0xf]
    %v3025 = vld [vmem:[%s3022 + $0x8] sm:$0xf]
    %v3026 = vld [vmem:[%s3022 + $0xc] sm:$0xf]
    %v3027 = vld [vmem:[%s3022 + $0x10] sm:$0xf]
    %v3028 = vld [vmem:[%s3022 + $0x14] sm:$0xf]
    %v3029 = vld [vmem:[%s3022 + $0x18] sm:$0xf]
    %v3030 = vld [vmem:[%s3022 + $0x1c] sm:$0xf]
    %v3032 = vsel %vm1031, %v3014, 0
    %v3035 = vsel %vm1259, %v3023, 0
    %3037 = vmatpush.bf16.msra.mxu0 0
    %3038 = vmatpush.bf16.msra.mxu0 0
    %3039 = vmatpush.bf16.msra.mxu0 0
    %3040 = vmatpush.bf16.msra.mxu0 0
    %3041 = vmatpush.bf16.msra.mxu0 0
    %3042 = vmatpush.bf16.msra.mxu0 0
    %3043 = vmatpush.bf16.msra.mxu0 0
    %3044 = vmatpush.bf16.msra.mxu0 %v3035
    %3045 = vmatmul.bf16.gmra.mxu0 %v3032
    %v3046 = vpop.f32.mrf.mxu0
    %v3047 = vadd.f32 0.0, %v3046
    %v3048 = vpop.f32.mrf.mxu0
    %3049 = vdwg.mxu0
    %v3051 = vsel %vm1031, %v3015, 0
    %v3054 = vsel %vm1259, %v3024, 0
    %3056 = vmatpush.bf16.msra.mxu0 0
    %3057 = vmatpush.bf16.msra.mxu0 0
    %3058 = vmatpush.bf16.msra.mxu0 0
    %3059 = vmatpush.bf16.msra.mxu0 0
    %3060 = vmatpush.bf16.msra.mxu0 0
    %3061 = vmatpush.bf16.msra.mxu0 0
    %3062 = vmatpush.bf16.msra.mxu0 0
    %3063 = vmatpush.bf16.msra.mxu0 %v3054
    %3064 = vmatmul.bf16.gmra.mxu0 %v3051
    %v3065 = vpop.f32.mrf.mxu0
    %v3066 = vadd.f32 0.0, %v3065
    %v3067 = vpop.f32.mrf.mxu0
    %3068 = vdwg.mxu0
    %v3070 = vsel %vm1031, %v3016, 0
    %v3073 = vsel %vm1259, %v3025, 0
    %3075 = vmatpush.bf16.msra.mxu0 0
    %3076 = vmatpush.bf16.msra.mxu0 0
    %3077 = vmatpush.bf16.msra.mxu0 0
    %3078 = vmatpush.bf16.msra.mxu0 0
    %3079 = vmatpush.bf16.msra.mxu0 0
    %3080 = vmatpush.bf16.msra.mxu0 0
    %3081 = vmatpush.bf16.msra.mxu0 0
    %3082 = vmatpush.bf16.msra.mxu0 %v3073
    %3083 = vmatmul.bf16.gmra.mxu0 %v3070
    %v3084 = vpop.f32.mrf.mxu0
    %v3085 = vadd.f32 0.0, %v3084
    %v3086 = vpop.f32.mrf.mxu0
    %3087 = vdwg.mxu0
    %v3089 = vsel %vm1031, %v3017, 0
    %v3092 = vsel %vm1259, %v3026, 0
    %3094 = vmatpush.bf16.msra.mxu0 0
    %3095 = vmatpush.bf16.msra.mxu0 0
    %3096 = vmatpush.bf16.msra.mxu0 0
    %3097 = vmatpush.bf16.msra.mxu0 0
    %3098 = vmatpush.bf16.msra.mxu0 0
    %3099 = vmatpush.bf16.msra.mxu0 0
    %3100 = vmatpush.bf16.msra.mxu0 0
    %3101 = vmatpush.bf16.msra.mxu0 %v3092
    %3102 = vmatmul.bf16.gmra.mxu0 %v3089
    %v3103 = vpop.f32.mrf.mxu0
    %v3104 = vadd.f32 0.0, %v3103
    %v3105 = vpop.f32.mrf.mxu0
    %3106 = vdwg.mxu0
    %v3108 = vsel %vm1031, %v3018, 0
    %v3111 = vsel %vm1259, %v3027, 0
    %3113 = vmatpush.bf16.msra.mxu0 0
    %3114 = vmatpush.bf16.msra.mxu0 0
    %3115 = vmatpush.bf16.msra.mxu0 0
    %3116 = vmatpush.bf16.msra.mxu0 0
    %3117 = vmatpush.bf16.msra.mxu0 0
    %3118 = vmatpush.bf16.msra.mxu0 0
    %3119 = vmatpush.bf16.msra.mxu0 0
    %3120 = vmatpush.bf16.msra.mxu0 %v3111
    %3121 = vmatmul.bf16.gmra.mxu0 %v3108
    %v3122 = vpop.f32.mrf.mxu0
    %v3123 = vadd.f32 0.0, %v3122
    %v3124 = vpop.f32.mrf.mxu0
    %3125 = vdwg.mxu0
    %v3127 = vsel %vm1031, %v3019, 0
    %v3130 = vsel %vm1259, %v3028, 0
    %3132 = vmatpush.bf16.msra.mxu0 0
    %3133 = vmatpush.bf16.msra.mxu0 0
    %3134 = vmatpush.bf16.msra.mxu0 0
    %3135 = vmatpush.bf16.msra.mxu0 0
    %3136 = vmatpush.bf16.msra.mxu0 0
    %3137 = vmatpush.bf16.msra.mxu0 0
    %3138 = vmatpush.bf16.msra.mxu0 0
    %3139 = vmatpush.bf16.msra.mxu0 %v3130
    %3140 = vmatmul.bf16.gmra.mxu0 %v3127
    %v3141 = vpop.f32.mrf.mxu0
    %v3142 = vadd.f32 0.0, %v3141
    %v3143 = vpop.f32.mrf.mxu0
    %3144 = vdwg.mxu0
    %v3146 = vsel %vm1031, %v3020, 0
    %v3149 = vsel %vm1259, %v3029, 0
    %3151 = vmatpush.bf16.msra.mxu0 0
    %3152 = vmatpush.bf16.msra.mxu0 0
    %3153 = vmatpush.bf16.msra.mxu0 0
    %3154 = vmatpush.bf16.msra.mxu0 0
    %3155 = vmatpush.bf16.msra.mxu0 0
    %3156 = vmatpush.bf16.msra.mxu0 0
    %3157 = vmatpush.bf16.msra.mxu0 0
    %3158 = vmatpush.bf16.msra.mxu0 %v3149
    %3159 = vmatmul.bf16.gmra.mxu0 %v3146
    %v3160 = vpop.f32.mrf.mxu0
    %v3161 = vadd.f32 0.0, %v3160
    %v3162 = vpop.f32.mrf.mxu0
    %3163 = vdwg.mxu0
    %v3165 = vsel %vm1031, %v3021, 0
    %v3168 = vsel %vm1259, %v3030, 0
    %3170 = vmatpush.bf16.msra.mxu0 0
    %3171 = vmatpush.bf16.msra.mxu0 0
    %3172 = vmatpush.bf16.msra.mxu0 0
    %3173 = vmatpush.bf16.msra.mxu0 0
    %3174 = vmatpush.bf16.msra.mxu0 0
    %3175 = vmatpush.bf16.msra.mxu0 0
    %3176 = vmatpush.bf16.msra.mxu0 0
    %3177 = vmatpush.bf16.msra.mxu0 %v3168
    %3178 = vmatmul.bf16.gmra.mxu0 %v3165
    %v3179 = vpop.f32.mrf.mxu0
    %v3180 = vadd.f32 0.0, %v3179
    %v3181 = vpop.f32.mrf.mxu0
    %3182 = vdwg.mxu0
    %v3183 = vadd.f32 %v3047, %v3085
    %v3184 = vadd.f32 %v3066, %v3104
    %v3185 = vadd.f32 %v3183, %v3123
    %v3186 = vadd.f32 %v3184, %v3142
    %v3187 = vadd.f32 %v3185, %v3161
    %v3188 = vadd.f32 %v3186, %v3180
    %s3189 = scalar_lea.vmem %s13, 1
    %v3190 = vld [vmem:[%s3189] sm:$0x1]
    %v3192 = vperm.slane %v3190, 0
    %v3194 = vadd.f32 %v3187, %v3192
    %v3195 = vadd.f32 %v3188, %v3192
    %v3196 = vadd.f32 %v1814, %v3194
    %v3197 = vadd.f32 %v1815, %v3195
    %s3198 = scalar_lea.vmem %s14, 1
    %v3199 = vld [vmem:[%s3198] sm:$0x1]
    %s3200 = scalar_lea.vmem %s15, 1
    %v3201 = vld [vmem:[%s3200] sm:$0x1]
    %v3202 = vsel %vm141, %v3196, 0.0
    %3203 = vadd.xlane.f32.xlu0 %v3202
    %v3204 = vpop.xlane.xlu0 %3203
    %v3205 = vsel %vm141, %v3197, 0.0
    %3206 = vadd.xlane.f32.xlu0 %v3205
    %v3207 = vpop.xlane.xlu0 %3206
    %v3208 = vmul.f32 %v3204, %v154
    %v3209 = vmul.f32 %v3207, %v154
    %v3210 = vsub.f32 %v3196, %v3208
    %v3211 = vsub.f32 %v3197, %v3209
    %v3212 = vmul.f32 %v3210, %v3210
    %v3213 = vmul.f32 %v3211, %v3211
    %v3214 = vsel %vm141, %v3212, 0.0
    %3215 = vadd.xlane.f32.xlu0 %v3214
    %v3216 = vpop.xlane.xlu0 %3215
    %v3217 = vsel %vm141, %v3213, 0.0
    %3218 = vadd.xlane.f32.xlu0 %v3217
    %v3219 = vpop.xlane.xlu0 %3218
    %v3220 = vmul.f32 %v3216, %v154
    %v3221 = vmul.f32 %v3219, %v154
    %v3222 = vadd.f32 %v3220, 1e-12
    %v3223 = vadd.f32 %v3221, 1e-12
    %v3224 = vrsqrt.pop %v3222
    %v3225 = vmul.f32 %v3224, %v3222
    %v3226 = vmul.f32 %v3225, %v3224
    %v3227 = vmul.f32 0.5, %v3226
    %v3228 = vsub.f32 1.5, %v3227
    %v3229 = vmul.f32 %v3224, %v3228
    %vm3230 = vweird.f32 %v3222
    %vm3231 = vweird.f32 %v3224
    %vm3232 = vmor %vm3230, %vm3231
    %v3233 = vsel %vm3232, %v3224, %v3229
    %v3234 = vrsqrt.pop %v3223
    %v3235 = vmul.f32 %v3234, %v3223
    %v3236 = vmul.f32 %v3235, %v3234
    %v3237 = vmul.f32 0.5, %v3236
    %v3238 = vsub.f32 1.5, %v3237
    %v3239 = vmul.f32 %v3234, %v3238
    %vm3240 = vweird.f32 %v3223
    %vm3241 = vweird.f32 %v3234
    %vm3242 = vmor %vm3240, %vm3241
    %v3243 = vsel %vm3242, %v3234, %v3239
    %v3244 = vmul.f32 %v3210, %v3233
    %v3245 = vmul.f32 %v3211, %v3243
    %v3247 = vperm.slane %v3199, 0
    %v3249 = vmul.f32 %v3244, %v3247
    %v3250 = vmul.f32 %v3245, %v3247
    %v3252 = vperm.slane %v3201, 0
    %v3254 = vadd.f32 %v3249, %v3252
    %v3255 = vadd.f32 %v3250, %v3252
    %v3256 = vpack.c.bf16 %v3255, %v3254
    %s3257 = scalar_lea.vmem %s16, 16
    %v3258 = vld [vmem:[%s3257] sm:$0xf]
    %v3259 = vld [vmem:[%s3257 + $0x4] sm:$0xf]
    %v3260 = vld [vmem:[%s3257 + $0x8] sm:$0xf]
    %v3261 = vld [vmem:[%s3257 + $0xc] sm:$0xf]
    %s3262 = scalar_lea.vmem %s17, 1
    %v3263 = vld [vmem:[%s3262] sm:$0x1]
    %v3265 = vperm.slane %v3263, 0
    %v3271 = vunpack.c.l.b16 %v3258
    %v3272 = vunpack.c.l.b16 %v3259
    %v3273 = vunpack.c.l.b16 %v3260
    %v3274 = vunpack.c.l.b16 %v3261
    %v3275 = vpack.c.b16 %v3272, %v3271
    %v3276 = vpack.c.b16 %v3274, %v3273
    %v3280 = vsel %vm141, %v3256, 0
    %3282 = vmatpush.bf16.msra.mxu0 0
    %3283 = vmatpush.bf16.msra.mxu0 0
    %3284 = vmatpush.bf16.msra.mxu0 0
    %3285 = vmatpush.bf16.msra.mxu0 0
    %3286 = vmatpush.bf16.msra.mxu0 0
    %3287 = vmatpush.bf16.msra.mxu0 0
    %3288 = vmatpush.bf16.msra.mxu0 %v3276
    %3289 = vmatpush.bf16.msra.mxu0 %v3275
    %3290 = vmatmul.bf16.gmra.mxu0 %v3280
    %v3291 = vpop.f32.mrf.mxu0
    %v3292 = vadd.f32 %v3265, %v3291
    %v3293 = vpop.f32.mrf.mxu0
    %v3294 = vadd.f32 %v3265, %v3293
    %3295 = vdwg.mxu0
    %v3296 = vmul.f32 %v3292, %v3292
    %v3297 = vmul.f32 %v3294, %v3294
    %v3298 = vmul.f32 %v3292, %v3296
    %v3299 = vmul.f32 %v3294, %v3297
    %v3300 = vmul.f32 %v3298, 0.044715
    %v3301 = vmul.f32 %v3299, 0.044715
    %v3302 = vadd.f32 %v3292, %v3300
    %v3303 = vadd.f32 %v3294, %v3301
    %v3304 = vmul.f32 %v3302, 0.7978846
    %v3305 = vmul.f32 %v3303, 0.7978846
    %v3306 = vtanh.pop %v3304
    %v3307 = vtanh.pop %v3305
    %v3308 = vadd.f32 %v3306, 1.0
    %v3309 = vadd.f32 %v3307, 1.0
    %v3310 = vmul.f32 %v3308, 0.5
    %v3311 = vmul.f32 %v3309, 0.5
    %v3312 = vmul.f32 %v3292, %v3310
    %v3313 = vmul.f32 %v3294, %v3311
    %v3314 = vpack.c.bf16 %v3313, %v3312
    %s3315 = scalar_lea.vmem %s18, 32
    %v3316 = vld [vmem:[%s3315] sm:$0xf]
    %v3317 = vld [vmem:[%s3315 + $0x4] sm:$0xf]
    %v3318 = vld [vmem:[%s3315 + $0x8] sm:$0xf]
    %v3319 = vld [vmem:[%s3315 + $0xc] sm:$0xf]
    %v3320 = vld [vmem:[%s3315 + $0x10] sm:$0xf]
    %v3321 = vld [vmem:[%s3315 + $0x14] sm:$0xf]
    %v3322 = vld [vmem:[%s3315 + $0x18] sm:$0xf]
    %v3323 = vld [vmem:[%s3315 + $0x1c] sm:$0xf]
    %s3324 = scalar_lea.vmem %s19, 1
    %v3325 = vld [vmem:[%s3324] sm:$0x1]
    %v3327 = vperm.slane %v3325, 0
    %v3337 = vunpack.c.l.b16 %v3316
    %v3338 = vunpack.c.l.b16 %v3317
    %v3339 = vunpack.c.l.b16 %v3318
    %v3340 = vunpack.c.l.b16 %v3319
    %v3341 = vunpack.c.l.b16 %v3320
    %v3342 = vunpack.c.l.b16 %v3321
    %v3343 = vunpack.c.l.b16 %v3322
    %v3344 = vunpack.c.l.b16 %v3323
    %v3345 = vpack.c.b16 %v3338, %v3337
    %v3346 = vpack.c.b16 %v3340, %v3339
    %v3347 = vpack.c.b16 %v3342, %v3341
    %v3348 = vpack.c.b16 %v3344, %v3343
    %v3354 = vsel %vm1740, %v3314, 0
    %3356 = vmatpush.bf16.msra.mxu0 0
    %3357 = vmatpush.bf16.msra.mxu0 0
    %3358 = vmatpush.bf16.msra.mxu0 0
    %3359 = vmatpush.bf16.msra.mxu0 0
    %3360 = vmatpush.bf16.msra.mxu0 %v3348
    %3361 = vmatpush.bf16.msra.mxu0 %v3347
    %3362 = vmatpush.bf16.msra.mxu0 %v3346
    %3363 = vmatpush.bf16.msra.mxu0 %v3345
    %3364 = vmatmul.bf16.gmra.mxu0 %v3354
    %v3365 = vpop.f32.mrf.mxu0
    %v3366 = vadd.f32 %v3327, %v3365
    %v3367 = vpop.f32.mrf.mxu0
    %v3368 = vadd.f32 %v3327, %v3367
    %3369 = vdwg.mxu0
    %v3370 = vadd.f32 %v3254, %v3366
    %v3371 = vadd.f32 %v3255, %v3368
    %s3372 = scalar_lea.vmem %s20, 1
    %v3373 = vld [vmem:[%s3372] sm:$0x1]
    %s3374 = scalar_lea.vmem %s21, 1
    %v3375 = vld [vmem:[%s3374] sm:$0x1]
    %v3376 = vsel %vm141, %v3370, 0.0
    %3377 = vadd.xlane.f32.xlu0 %v3376
    %v3378 = vpop.xlane.xlu0 %3377
    %v3379 = vsel %vm141, %v3371, 0.0
    %3380 = vadd.xlane.f32.xlu0 %v3379
    %v3381 = vpop.xlane.xlu0 %3380
    %v3382 = vmul.f32 %v3378, %v154
    %v3383 = vmul.f32 %v3381, %v154
    %v3384 = vsub.f32 %v3370, %v3382
    %v3385 = vsub.f32 %v3371, %v3383
    %v3386 = vmul.f32 %v3384, %v3384
    %v3387 = vmul.f32 %v3385, %v3385
    %v3388 = vsel %vm141, %v3386, 0.0
    %3389 = vadd.xlane.f32.xlu0 %v3388
    %v3390 = vpop.xlane.xlu0 %3389
    %v3391 = vsel %vm141, %v3387, 0.0
    %3392 = vadd.xlane.f32.xlu0 %v3391
    %v3393 = vpop.xlane.xlu0 %3392
    %v3394 = vmul.f32 %v3390, %v154
    %v3395 = vmul.f32 %v3393, %v154
    %v3396 = vadd.f32 %v3394, 1e-12
    %v3397 = vadd.f32 %v3395, 1e-12
    %v3398 = vrsqrt.pop %v3396
    %v3399 = vmul.f32 %v3398, %v3396
    %v3400 = vmul.f32 %v3399, %v3398
    %v3401 = vmul.f32 0.5, %v3400
    %v3402 = vsub.f32 1.5, %v3401
    %v3403 = vmul.f32 %v3398, %v3402
    %vm3404 = vweird.f32 %v3396
    %vm3405 = vweird.f32 %v3398
    %vm3406 = vmor %vm3404, %vm3405
    %v3407 = vsel %vm3406, %v3398, %v3403
    %v3408 = vrsqrt.pop %v3397
    %v3409 = vmul.f32 %v3408, %v3397
    %v3410 = vmul.f32 %v3409, %v3408
    %v3411 = vmul.f32 0.5, %v3410
    %v3412 = vsub.f32 1.5, %v3411
    %v3413 = vmul.f32 %v3408, %v3412
    %vm3414 = vweird.f32 %v3397
    %vm3415 = vweird.f32 %v3408
    %vm3416 = vmor %vm3414, %vm3415
    %v3417 = vsel %vm3416, %v3408, %v3413
    %v3418 = vmul.f32 %v3384, %v3407
    %v3419 = vmul.f32 %v3385, %v3417
    %v3421 = vperm.slane %v3373, 0
    %v3423 = vmul.f32 %v3418, %v3421
    %v3424 = vmul.f32 %v3419, %v3421
    %v3426 = vperm.slane %v3375, 0
    %v3428 = vadd.f32 %v3423, %v3426
    %v3429 = vadd.f32 %v3424, %v3426
    %v3432 = vrot.slane %v3429, 7
    %vm3433 = vcmask 1041409
    %v3434 = vsel %vm3433, %v3432, %v3428
    %vm3436 = vcmask 254976
    %3437 = vst.msk [vmem:[#allocation2] sm:$0x3] %vm3436, %v3434
    // Predicated region
    $region90: #{text_encoder_forward.1} parent=1 // pred_check
      _
    $region91: #{text_encoder_forward.1} parent=1 // pred_check_branch
      %3439 = sbr.rel (0) target = $region93
    $region92: #{text_encoder_forward.1} parent=1 // pred_region
      %3441 = vsyncadd [#allocation3], 0
      %s3443 = sshll.u32 [#allocation2], 4
      %s3444 = int_to_ptr.vmem [resolvable:$true] %s3443
      %s3445 = sshll.u32 %s22, 4
      %s3446 = int_to_ptr.hbm [resolvable:$true] %s3445
      %3448 = dma.vmem_to_hbm [thread:$0]  %s3444, 32, %s3446, [#allocation3]
    $region93: #{text_encoder_forward.1} parent=1 // pred_fallthru
      _
    // Predicated region
    $region94: #{text_encoder_forward.1} parent=1 // pred_check
      _
    $region95: #{text_encoder_forward.1} parent=1 // pred_check_branch
      %3450 = sbr.rel (0) target = $region97
    $region96: #{text_encoder_forward.1} parent=1 // pred_region
      %3452 = dma.done [#allocation3], 32
    $region97: #{text_encoder_forward.1} parent=1 // pred_fallthru
      _
    %3453 = vsyncpa [#allocation3], 1

</llo_original>
